<compile_context>
chip_gen: v7x
topology: tpu7x:2x2x1
jax: 0.10.0
libtpu: 0.0.40
codegen_flags: <defaults>
</compile_context>

<pallas_src>
import jax
import jax.numpy as jnp
from jax import lax
from jax.experimental import pallas as pl
from jax.experimental.pallas import tpu as pltpu

EPS = 1e-5
_VMEM_LIMIT = 32 * 1024 * 1024          # known-safe on v5e/v6e/v7x for these tile sizes


def _round_up(x, m):
    return (x + m - 1) // m * m


def _lane_align(c):
    # v6e/v7x MXUs are 256 wide -> 256 alignment for large dims; 128 for small ones
    # (v5e's 128-wide MXU is native at 128).
    return 256 if c > 128 else 128


def _cparams():
    return pltpu.CompilerParams(dimension_semantics=("parallel",),
                                vmem_limit_bytes=_VMEM_LIMIT)


def _fold_bn(s, ss, gamma, beta, count):
    """Per-channel (sum, sum of squares) -> folded BN scale/shift (training-mode stats)."""
    mean = s / count
    # TODO(synk): single-pass variance can lose precision when |mean| >> std; use a
    #             compensated reduction if tighter PyTorch parity is required.
    var = jnp.maximum(ss / count - mean * mean, 0.0)
    scale = gamma * lax.rsqrt(var + EPS)
    shift = beta - mean * scale
    return scale.reshape(1, -1), shift.reshape(1, -1)


# ----------------------------------------------------------------------------- stage 1
# conv1 (3x3, stride s, pad 1) as an im2col GEMM + training-mode BN + ReLU, two passes.
def _gemm_stats_kernel(a_ref, w_ref, y_ref, st_ref):
    """Pass 1: MXU GEMM; bf16 result + per-tile per-channel (sum, sum^2) from the f32 acc."""
    y = jnp.dot(a_ref[...], w_ref[...], preferred_element_type=jnp.float32)
    y_ref[...] = y.astype(y_ref.dtype)
    st_ref[0:1, :] = jnp.sum(y, axis=0, keepdims=True)
    st_ref[1:2, :] = jnp.sum(y * y, axis=0, keepdims=True)
    st_ref[2:8, :] = jnp.zeros((6, y.shape[1]), jnp.float32)


def _affine_relu_kernel(y_ref, sc_ref, sh_ref, o_ref):
    """Pass 2: folded BN affine + ReLU."""
    out = y_ref[...].astype(jnp.float32) * sc_ref[...] + sh_ref[...]
    o_ref[...] = jnp.maximum(out, 0.0).astype(o_ref.dtype)


def gemm_bn_relu(a, w, gamma, beta, *, cp):
    """relu(BN(a @ w)) with batch statistics.  a:(M,K), w:(K,Cout).
    Returns (M, cp) bf16 with output channels zero-padded to cp."""
    M, K = a.shape
    Cout = w.shape[1]
    Kp = _round_up(K, _lane_align(K))
    # Row tile: multiple of 8, <= 512, and at least 2 tiles so both v7x TCs get work.
    TM = min(512, _round_up(pl.cdiv(M, 2), 8), _round_up(M, 8))
    Mp = _round_up(M, TM)
    nt = Mp // TM

    a_p = jnp.pad(a.astype(jnp.bfloat16), ((0, Mp - M), (0, Kp - K)))
    w_p = jnp.pad(w.astype(jnp.bfloat16), ((0, Kp - K), (0, cp - Cout)))
    g_p = jnp.pad(gamma.astype(jnp.float32), (0, cp - Cout))
    b_p = jnp.pad(beta.astype(jnp.float32), (0, cp - Cout))

    y, stats = pl.pallas_call(
        _gemm_stats_kernel,
        grid=(nt,),
        in_specs=[pl.BlockSpec((TM, Kp), lambda i: (i, 0)),
                  pl.BlockSpec((Kp, cp), lambda i: (0, 0))],   # constant weight block
        out_specs=(pl.BlockSpec((TM, cp), lambda i: (i, 0)),
                   pl.BlockSpec((8, cp), lambda i: (i, 0))),
        out_shape=(jax.ShapeDtypeStruct((Mp, cp), jnp.bfloat16),
                   jax.ShapeDtypeStruct((nt * 8, cp), jnp.float32)),
        compiler_params=_cparams(),
        cost_estimate=pl.CostEstimate(
            flops=2 * Mp * Kp * cp, transcendentals=0,
            bytes_accessed=(Mp * Kp + Kp * cp + Mp * cp) * 2 + nt * 8 * cp * 4),
    )(a_p, w_p)

    st = jnp.sum(stats.reshape(nt, 8, cp), axis=0)
    scale, shift = _fold_bn(st[0], st[1], g_p, b_p, jnp.float32(M))

    out = pl.pallas_call(
        _affine_relu_kernel,
        grid=(nt,),
        in_specs=[pl.BlockSpec((TM, cp), lambda i: (i, 0)),
                  pl.BlockSpec((1, cp), lambda i: (0, 0)),
                  pl.BlockSpec((1, cp), lambda i: (0, 0))],
        out_specs=pl.BlockSpec((TM, cp), lambda i: (i, 0)),
        out_shape=jax.ShapeDtypeStruct((Mp, cp), jnp.bfloat16),
        compiler_params=_cparams(),
        cost_estimate=pl.CostEstimate(
            flops=3 * Mp * cp, transcendentals=0,
            bytes_accessed=Mp * cp * 2 + 2 * cp * 4 + Mp * cp * 2),
    )(y, scale, shift)
    return out[:M]


# ----------------------------------------------------------------------------- stage 2
# conv2 (3x3, stride 1, pad 1) with in-kernel patch construction, fused with the 1x1-s
# projection conv, both BNs, the residual add and the final ReLU.
def conv3x3_proj_bn_relu(h1, xproj, w2, wproj, g2, b2, gp, bp, *, cp):
    """h1:(N,OH,OW,cp) bf16 (post BN1+ReLU, pad channels exactly zero);
    xproj:(N,OH,OW,Cin) stride-subsampled input for the 1x1 projection.
    Returns (N,OH,OW,cp) f32 = relu(BN2(conv3x3(h1)) + BNp(conv1x1(xproj)))."""
    N, OH, OW, hc = h1.shape
    assert hc == cp
    Cin = xproj.shape[-1]
    Cout = w2.shape[0]
    OHp, OWp = OH + 2, OW + 2
    P = OHp * OWp                      # padded output grid (border rows are discarded)
    E = OWp + 1                        # zero-extension rows so every tap slice is in range
    Kq = _round_up(Cin, _lane_align(Cin))

    # padded-grid, flattened, zero-extended activations: tap (dy,dx) of the 3x3 conv is
    # the contiguous row slice [dy*OWp+dx : dy*OWp+dx+P) of this buffer -> no 9x im2col.
    # Kept f32 so the 9 sublane-unaligned slices are cheap; cast to bf16 per tap for the MXU.
    h1p = jnp.pad(h1, ((0, 0), (1, 1), (1, 1), (0, 0))).reshape(N, P, cp)
    x_ext = jnp.pad(h1p.astype(jnp.float32), ((0, 0), (E, E), (0, 0)))   # (N, P+2E, cp)

    # conv2 weights as 9 stacked (cp, cp) tap matrices, tap order t = dy*3 + dx.
    w2t = jnp.transpose(w2, (2, 3, 1, 0))                                # (3,3,Cin2,Cout)
    w2t = jnp.pad(w2t, ((0, 0), (0, 0), (0, cp - w2t.shape[2]), (0, cp - Cout)))
    w2m = w2t.reshape(9 * cp, cp).astype(jnp.bfloat16)

    wpm = jnp.transpose(wproj, (2, 3, 1, 0)).reshape(Cin, Cout)
    wpm = jnp.pad(wpm, ((0, Kq - Cin), (0, cp - Cout))).astype(jnp.bfloat16)

    # projection operand laid out on the same padded output grid (border rows are zero).
    ap = jnp.pad(xproj.astype(jnp.bfloat16),
                 ((0, 0), (1, 1), (1, 1), (0, Kq - Cin))).reshape(N, P, Kq)

    # validity mask: 1 on the OHxOW interior, 0 on the padded border (excluded from stats).
    mask = jnp.pad(jnp.ones((OH, OW), jnp.float32), ((1, 1), (1, 1))).reshape(P, 1)

    g2p = jnp.pad(g2.astype(jnp.float32), (0, cp - Cout))
    b2p = jnp.pad(b2.astype(jnp.float32), (0, cp - Cout))
    gpp = jnp.pad(gp.astype(jnp.float32), (0, cp - Cout))
    bpp = jnp.pad(bp.astype(jnp.float32), (0, cp - Cout))

    tap_starts = tuple(dy * OWp + dx for dy in range(3) for dx in range(3))

    def pass1_kernel(x_ref, w_ref, a_ref, wp_ref, m_ref, y_ref, st_ref):
        acc = jnp.zeros((P, cp), jnp.float32)
        for t, s in enumerate(tap_starts):                     # 9 shifted GEMM taps
            xs = x_ref[0, s:s + P, :].astype(jnp.bfloat16)
            acc = acc + jnp.dot(xs, w_ref[t * cp:(t + 1) * cp, :],
                                preferred_element_type=jnp.float32)
        # projection GEMM only for its BN statistics (recomputed in pass 2, never stored).
        yp = jnp.dot(a_ref[0], wp_ref[...], preferred_element_type=jnp.float32)
        m = m_ref[...]
        y_ref[0] = acc.astype(y_ref.dtype)
        st_ref[0:1, :] = jnp.sum(acc * m, axis=0, keepdims=True)
        st_ref[1:2, :] = jnp.sum(acc * acc * m, axis=0, keepdims=True)
        st_ref[2:3, :] = jnp.sum(yp * m, axis=0, keepdims=True)
        st_ref[3:4, :] = jnp.sum(yp * yp * m, axis=0, keepdims=True)
        st_ref[4:8, :] = jnp.zeros((4, cp), jnp.float32)

    flops1 = N * (2 * P * 9 * cp * cp + 2 * P * Kq * cp)
    bytes1 = (N * ((P + 2 * E) * cp * 4 + P * Kq * 2 + P * cp * 2)
              + (9 * cp * cp + Kq * cp) * 2 + P * 4 + N * 8 * cp * 4)
    y2, stats = pl.pallas_call(
        pass1_kernel,
        grid=(N,),
        in_specs=[pl.BlockSpec((1, P + 2 * E, cp), lambda n: (n, 0, 0)),
                  pl.BlockSpec((9 * cp, cp), lambda n: (0, 0)),
                  pl.BlockSpec((1, P, Kq), lambda n: (n, 0, 0)),
                  pl.BlockSpec((Kq, cp), lambda n: (0, 0)),
                  pl.BlockSpec((P, 1), lambda n: (0, 0))],
        out_specs=(pl.BlockSpec((1, P, cp), lambda n: (n, 0, 0)),
                   pl.BlockSpec((8, cp), lambda n: (n, 0))),
        out_shape=(jax.ShapeDtypeStruct((N, P, cp), jnp.bfloat16),
                   jax.ShapeDtypeStruct((N * 8, cp), jnp.float32)),
        compiler_params=_cparams(),
        cost_estimate=pl.CostEstimate(flops=flops1, transcendentals=0,
                                      bytes_accessed=bytes1),
    )(x_ext, w2m, ap, wpm, mask)

    st = jnp.sum(stats.reshape(N, 8, cp), axis=0)
    cnt = jnp.float32(N * OH * OW)
    sc2, sh2 = _fold_bn(st[0], st[1], g2p, b2p, cnt)
    scp, shp = _fold_bn(st[2], st[3], gpp, bpp, cnt)
    sh_tot = sh2 + shp                     # pre-combined shift: one fewer operand in pass 2

    def pass2_kernel(y_ref, a_ref, wp_ref, sc2_ref, scp_ref, sh_ref, o_ref):
        yp = jnp.dot(a_ref[0], wp_ref[...], preferred_element_type=jnp.float32)
        out = (y_ref[0].astype(jnp.float32) * sc2_ref[...]
               + yp * scp_ref[...] + sh_ref[...])
        o_ref[0] = jnp.maximum(out, 0.0).astype(o_ref.dtype)

    flops2 = N * (2 * P * Kq * cp + 5 * P * cp)
    bytes2 = N * (P * cp * 2 + P * Kq * 2 + P * cp * 4) + Kq * cp * 2 + 3 * cp * 4
    out = pl.pallas_call(
        pass2_kernel,
        grid=(N,),
        in_specs=[pl.BlockSpec((1, P, cp), lambda n: (n, 0, 0)),
                  pl.BlockSpec((1, P, Kq), lambda n: (n, 0, 0)),
                  pl.BlockSpec((Kq, cp), lambda n: (0, 0)),
                  pl.BlockSpec((1, cp), lambda n: (0, 0)),
                  pl.BlockSpec((1, cp), lambda n: (0, 0)),
                  pl.BlockSpec((1, cp), lambda n: (0, 0))],
        out_specs=pl.BlockSpec((1, P, cp), lambda n: (n, 0, 0)),
        out_shape=jax.ShapeDtypeStruct((N, P, cp), jnp.float32),
        compiler_params=_cparams(),
        cost_estimate=pl.CostEstimate(flops=flops2, transcendentals=0,
                                      bytes_accessed=bytes2),
    )(y2, ap, wpm, sc2, scp, sh_tot)

    # drop the padded border rows of the flat output grid (garbage from flat-index wrap).
    return out.reshape(N, OHp, OWp, cp)[:, 1:OHp - 1, 1:OWp - 1, :]


# --------------------------------------------------------------------------- JAX glue
def im2col(x, ksize, stride, pad):
    """x: (N,H,W,C) -> (N*OH*OW, ksize*ksize*C) patch matrix (keeps x's dtype)."""
    N, H, W, C = x.shape
    xp = jnp.pad(x, ((0, 0), (pad, pad), (pad, pad), (0, 0)))
    OH = (H + 2 * pad - ksize) // stride + 1
    OW = (W + 2 * pad - ksize) // stride + 1
    cols = []
    for dy in range(ksize):
        for dx in range(ksize):
            cols.append(xp[:, dy:dy + stride * OH:stride, dx:dx + stride * OW:stride, :])
    patches = jnp.concatenate(cols, axis=-1)
    return patches.reshape(N * OH * OW, ksize * ksize * C), (N, OH, OW)


def _w_to_mat(w_oihw):
    """PyTorch (Cout,Cin,KH,KW) -> (KH*KW*Cin, Cout) matching im2col column order."""
    cout = w_oihw.shape[0]
    return jnp.transpose(w_oihw, (2, 3, 1, 0)).reshape(-1, cout)


def residual_block(x_nchw, params, downsample=True):
    # NOTE: the projection path (1x1 conv + BN) is always used, matching the PyTorch
    # constructor whenever downsample or in_channels != out_channels (the tested config).
    stride = 2 if downsample else 1
    x = jnp.transpose(x_nchw, (0, 2, 3, 1))                       # NCHW -> NHWC
    N = x.shape[0]
    Cout = params["conv1_w"].shape[0]
    cp = _round_up(Cout, _lane_align(Cout))
    # TODO(synk): for Cout << 128 (the toy test) the 128-lane padding inflates DMA bytes
    #             and MXU work; real use should pick Cout >= 128 or repack the lane layout.

    # ---- main branch: conv1 3x3 stride s + BN1 + ReLU (h1 kept in bf16) ---------------
    a1, (_, OH, OW) = im2col(x.astype(jnp.bfloat16), 3, stride, 1)
    h1 = gemm_bn_relu(a1, _w_to_mat(params["conv1_w"]),
                      params["bn1_gamma"], params["bn1_beta"], cp=cp)
    h1 = h1.reshape(N, OH, OW, cp)

    # ---- conv2 3x3 s1 + BN2, fused with projection 1x1-s conv + BN, add, ReLU ---------
    xproj = x[:, ::stride, ::stride, :]
    out = conv3x3_proj_bn_relu(h1, xproj,
                               params["conv2_w"], params["proj_w"],
                               params["bn2_gamma"], params["bn2_beta"],
                               params["proj_gamma"], params["proj_beta"], cp=cp)
    out = out[..., :Cout]
    return jnp.transpose(out, (0, 3, 1, 2))                       # NHWC -> NCHW


def init_params(key, in_channels, out_channels):
    ks = jax.random.split(key, 8)

    def conv_w(k, co, ci, kh, kw):
        fan_in = ci * kh * kw
        return jax.random.normal(k, (co, ci, kh, kw), jnp.float32) / jnp.sqrt(fan_in)

    # Conv biases are kept for parity with nn.Conv2d(bias=True) but not applied in the
    # kernels: a pre-BN per-channel bias is exactly cancelled by training-mode BatchNorm.
    return {
        "conv1_w": conv_w(ks[0], out_channels, in_channels, 3, 3),
        "conv1_b": 0.1 * jax.random.normal(ks[1], (out_channels,), jnp.float32),
        "bn1_gamma": 1.0 + 0.1 * jax.random.normal(ks[2], (out_channels,), jnp.float32),
        "bn1_beta": 0.1 * jax.random.normal(ks[3], (out_channels,), jnp.float32),
        "conv2_w": conv_w(ks[4], out_channels, out_channels, 3, 3),
        "conv2_b": 0.1 * jax.random.normal(ks[5], (out_channels,), jnp.float32),
        "bn2_gamma": jnp.ones((out_channels,), jnp.float32),
        "bn2_beta": jnp.zeros((out_channels,), jnp.float32),
        "proj_w": conv_w(ks[6], out_channels, in_channels, 1, 1),
        "proj_b": 0.1 * jax.random.normal(ks[7], (out_channels,), jnp.float32),
        "proj_gamma": jnp.ones((out_channels,), jnp.float32),
        "proj_beta": jnp.zeros((out_channels,), jnp.float32),
    }


if __name__ == "__main__":
    key = jax.random.PRNGKey(0)
    k_x, k_p = jax.random.split(key)

    in_channels, out_channels = 4, 8
    x = jax.random.normal(k_x, (2, in_channels, 16, 16), jnp.float32)   # NCHW, like PyTorch
    params = init_params(k_p, in_channels, out_channels)

    fwd = jax.jit(residual_block, static_argnames=("downsample",))
    out = fwd(x, params, downsample=True)                  # -> (2, 8, 8, 8) NCHW
    jax.block_until_ready(out)
    assert out.shape == (2, out_channels, 8, 8)
    print("KERNEL_OK")
</pallas_src>

<mosaic_0001>
module attributes {stable_mosaic.version = 11 : i64} {
  func.func @_gemm_stats_kernel(%arg0: i32, %arg1: memref<64x128xbf16, #tpu.memory_space<vmem>>, %arg2: memref<128x128xbf16, #tpu.memory_space<vmem>>, %arg3: memref<64x128xbf16, #tpu.memory_space<vmem>>, %arg4: memref<8x128xf32, #tpu.memory_space<vmem>>) attributes {dimension_semantics = [#tpu.dimension_semantics<parallel>], iteration_bounds = array<i64: 2>, scalar_prefetch = 0 : i64, scratch_operands = 0 : i64, tpu.core_type = #tpu.core_type<tc>, window_params = [{transform_indices = @transform_0, window_bounds = array<i64: 64, 128>}, {pipeline_mode = #tpu.pipeline_mode<synchronous>, transform_indices = @transform_1, window_bounds = array<i64: 128, 128>}, {transform_indices = @transform_2, window_bounds = array<i64: 64, 128>}, {transform_indices = @transform_3, window_bounds = array<i64: 8, 128>}]} {
    %c0 = arith.constant 0 : index
    %c0_0 = arith.constant 0 : index
    %0 = vector.load %arg1[%c0, %c0_0] : memref<64x128xbf16, #tpu.memory_space<vmem>>, vector<64x128xbf16>
    %c0_1 = arith.constant 0 : index
    %c0_2 = arith.constant 0 : index
    %1 = vector.load %arg2[%c0_1, %c0_2] : memref<128x128xbf16, #tpu.memory_space<vmem>>, vector<128x128xbf16>
    %cst = arith.constant dense<0.000000e+00> : vector<64x128xf32>
    %2 = tpu.matmul %0, %1, %cst {dimension_numbers = #tpu.dot_dimension_numbers<[1], [0], [0], [1], [0, 0, 1, 1], [], []>} : vector<64x128xbf16>, vector<128x128xbf16>, vector<64x128xf32> -> vector<64x128xf32>
    %3 = arith.truncf %2 : vector<64x128xf32> to vector<64x128xbf16>
    %c0_3 = arith.constant 0 : index
    %c0_4 = arith.constant 0 : index
    %4 = vector.load %arg3[%c0_3, %c0_4] : memref<64x128xbf16, #tpu.memory_space<vmem>>, vector<64x128xbf16>
    tpu.vector_store %arg3[%c0_3, %c0_4], %3 {strides = array<i32>} : memref<64x128xbf16, #tpu.memory_space<vmem>>, vector<64x128xbf16>,
    %cst_5 = arith.constant dense<0.000000e+00> : vector<128xf32>
    %5 = vector.multi_reduction <add>, %2, %cst_5 [0] : vector<64x128xf32> to vector<128xf32>
    %6 = vector.shape_cast %5 : vector<128xf32> to vector<1x128xf32>
    %c0_6 = arith.constant 0 : index
    %c0_7 = arith.constant 0 : index
    %7 = vector.load %arg4[%c0_6, %c0_7] : memref<8x128xf32, #tpu.memory_space<vmem>>, vector<1x128xf32>
    tpu.vector_store %arg4[%c0_6, %c0_7], %6 {strides = array<i32>} : memref<8x128xf32, #tpu.memory_space<vmem>>, vector<1x128xf32>,
    %8 = arith.mulf %2, %2 : vector<64x128xf32>
    %cst_8 = arith.constant dense<0.000000e+00> : vector<128xf32>
    %9 = vector.multi_reduction <add>, %8, %cst_8 [0] : vector<64x128xf32> to vector<128xf32>
    %10 = vector.shape_cast %9 : vector<128xf32> to vector<1x128xf32>
    %c1 = arith.constant 1 : index
    %c0_9 = arith.constant 0 : index
    %11 = vector.load %arg4[%c1, %c0_9] : memref<8x128xf32, #tpu.memory_space<vmem>>, vector<1x128xf32>
    tpu.vector_store %arg4[%c1, %c0_9], %10 {strides = array<i32>} : memref<8x128xf32, #tpu.memory_space<vmem>>, vector<1x128xf32>,
    %cst_10 = arith.constant 0.000000e+00 : f32
    %12 = vector.broadcast %cst_10 : f32 to vector<6x128xf32>
    %c2 = arith.constant 2 : index
    %c0_11 = arith.constant 0 : index
    %13 = vector.load %arg4[%c2, %c0_11] : memref<8x128xf32, #tpu.memory_space<vmem>>, vector<6x128xf32>
    tpu.vector_store %arg4[%c2, %c0_11], %12 {strides = array<i32>} : memref<8x128xf32, #tpu.memory_space<vmem>>, vector<6x128xf32>,
    return
  }
  func.func @transform_0(%arg0: i32) -> (i32, i32) {
    %c0_i32 = arith.constant 0 : i32
    %c0_i32_0 = arith.constant 0 : i32
    return %arg0, %c0_i32 : i32, i32
  }
  func.func @transform_1(%arg0: i32) -> (i32, i32) {
    %c0_i32 = arith.constant 0 : i32
    %c0_i32_0 = arith.constant 0 : i32
    %c0_i32_1 = arith.constant 0 : i32
    return %c0_i32, %c0_i32_0 : i32, i32
  }
  func.func @transform_2(%arg0: i32) -> (i32, i32) {
    %c0_i32 = arith.constant 0 : i32
    %c0_i32_0 = arith.constant 0 : i32
    return %arg0, %c0_i32 : i32, i32
  }
  func.func @transform_3(%arg0: i32) -> (i32, i32) {
    %c0_i32 = arith.constant 0 : i32
    %c0_i32_0 = arith.constant 0 : i32
    return %arg0, %c0_i32 : i32, i32
  }
}

module attributes {stable_mosaic.version = 11 : i64} {
  func.func @_affine_relu_kernel(%arg0: i32, %arg1: memref<64x128xbf16, #tpu.memory_space<vmem>>, %arg2: memref<1x128xf32, #tpu.memory_space<vmem>>, %arg3: memref<1x128xf32, #tpu.memory_space<vmem>>, %arg4: memref<64x128xbf16, #tpu.memory_space<vmem>>) attributes {dimension_semantics = [#tpu.dimension_semantics<parallel>], iteration_bounds = array<i64: 2>, scalar_prefetch = 0 : i64, scratch_operands = 0 : i64, tpu.core_type = #tpu.core_type<tc>, window_params = [{transform_indices = @transform_0, window_bounds = array<i64: 64, 128>}, {pipeline_mode = #tpu.pipeline_mode<synchronous>, transform_indices = @transform_1, window_bounds = array<i64: 1, 128>}, {pipeline_mode = #tpu.pipeline_mode<synchronous>, transform_indices = @transform_2, window_bounds = array<i64: 1, 128>}, {transform_indices = @transform_3, window_bounds = array<i64: 64, 128>}]} {
    %c0 = arith.constant 0 : index
    %c0_0 = arith.constant 0 : index
    %0 = vector.load %arg1[%c0, %c0_0] : memref<64x128xbf16, #tpu.memory_space<vmem>>, vector<64x128xbf16>
    %1 = arith.extf %0 : vector<64x128xbf16> to vector<64x128xf32>
    %c0_1 = arith.constant 0 : index
    %c0_2 = arith.constant 0 : index
    %2 = vector.load %arg2[%c0_1, %c0_2] : memref<1x128xf32, #tpu.memory_space<vmem>>, vector<1x128xf32>
    %3 = vector.broadcast %2 : vector<1x128xf32> to vector<64x128xf32>
    %4 = arith.mulf %1, %3 : vector<64x128xf32>
    %c0_3 = arith.constant 0 : index
    %c0_4 = arith.constant 0 : index
    %5 = vector.load %arg3[%c0_3, %c0_4] : memref<1x128xf32, #tpu.memory_space<vmem>>, vector<1x128xf32>
    %6 = vector.broadcast %5 : vector<1x128xf32> to vector<64x128xf32>
    %7 = arith.addf %4, %6 : vector<64x128xf32>
    %cst = arith.constant 0.000000e+00 : f32
    %8 = vector.broadcast %cst : f32 to vector<64x128xf32>
    %9 = arith.maximumf %7, %8 : vector<64x128xf32>
    %10 = arith.truncf %9 : vector<64x128xf32> to vector<64x128xbf16>
    %c0_5 = arith.constant 0 : index
    %c0_6 = arith.constant 0 : index
    %11 = vector.load %arg4[%c0_5, %c0_6] : memref<64x128xbf16, #tpu.memory_space<vmem>>, vector<64x128xbf16>
    tpu.vector_store %arg4[%c0_5, %c0_6], %10 {strides = array<i32>} : memref<64x128xbf16, #tpu.memory_space<vmem>>, vector<64x128xbf16>,
    return
  }
  func.func @transform_0(%arg0: i32) -> (i32, i32) {
    %c0_i32 = arith.constant 0 : i32
    %c0_i32_0 = arith.constant 0 : i32
    return %arg0, %c0_i32 : i32, i32
  }
  func.func @transform_1(%arg0: i32) -> (i32, i32) {
    %c0_i32 = arith.constant 0 : i32
    %c0_i32_0 = arith.constant 0 : i32
    %c0_i32_1 = arith.constant 0 : i32
    return %c0_i32, %c0_i32_0 : i32, i32
  }
  func.func @transform_2(%arg0: i32) -> (i32, i32) {
    %c0_i32 = arith.constant 0 : i32
    %c0_i32_0 = arith.constant 0 : i32
    %c0_i32_1 = arith.constant 0 : i32
    return %c0_i32, %c0_i32_0 : i32, i32
  }
  func.func @transform_3(%arg0: i32) -> (i32, i32) {
    %c0_i32 = arith.constant 0 : i32
    %c0_i32_0 = arith.constant 0 : i32
    return %arg0, %c0_i32 : i32, i32
  }
}

module attributes {stable_mosaic.version = 11 : i64} {
  func.func @pass1_kernel(%arg0: i32, %arg1: memref<1x122x128xf32, #tpu.memory_space<vmem>>, %arg2: memref<1152x128xbf16, #tpu.memory_space<vmem>>, %arg3: memref<1x100x128xbf16, #tpu.memory_space<vmem>>, %arg4: memref<128x128xbf16, #tpu.memory_space<vmem>>, %arg5: memref<100x1xf32, #tpu.memory_space<vmem>>, %arg6: memref<1x100x128xbf16, #tpu.memory_space<vmem>>, %arg7: memref<8x128xf32, #tpu.memory_space<vmem>>) attributes {dimension_semantics = [#tpu.dimension_semantics<parallel>], iteration_bounds = array<i64: 2>, scalar_prefetch = 0 : i64, scratch_operands = 0 : i64, tpu.core_type = #tpu.core_type<tc>, window_params = [{transform_indices = @transform_0, window_bounds = array<i64: 1, 122, 128>}, {pipeline_mode = #tpu.pipeline_mode<synchronous>, transform_indices = @transform_1, window_bounds = array<i64: 1152, 128>}, {transform_indices = @transform_2, window_bounds = array<i64: 1, 100, 128>}, {pipeline_mode = #tpu.pipeline_mode<synchronous>, transform_indices = @transform_3, window_bounds = array<i64: 128, 128>}, {pipeline_mode = #tpu.pipeline_mode<synchronous>, transform_indices = @transform_4, window_bounds = array<i64: 100, 1>}, {transform_indices = @transform_5, window_bounds = array<i64: 1, 100, 128>}, {transform_indices = @transform_6, window_bounds = array<i64: 8, 128>}]} {
    %cst = arith.constant 0.000000e+00 : f32
    %0 = vector.broadcast %cst : f32 to vector<100x128xf32>
    %c0 = arith.constant 0 : index
    %c0_0 = arith.constant 0 : index
    %c0_1 = arith.constant 0 : index
    %1 = vector.load %arg1[%c0, %c0_0, %c0_1] : memref<1x122x128xf32, #tpu.memory_space<vmem>>, vector<1x100x128xf32>
    %2 = vector.shape_cast %1 : vector<1x100x128xf32> to vector<100x128xf32>
    %3 = arith.truncf %2 : vector<100x128xf32> to vector<100x128xbf16>
    %c0_2 = arith.constant 0 : index
    %c0_3 = arith.constant 0 : index
    %4 = vector.load %arg2[%c0_2, %c0_3] : memref<1152x128xbf16, #tpu.memory_space<vmem>>, vector<128x128xbf16>
    %cst_4 = arith.constant dense<0.000000e+00> : vector<100x128xf32>
    %5 = tpu.matmul %3, %4, %cst_4 {dimension_numbers = #tpu.dot_dimension_numbers<[1], [0], [0], [1], [0, 0, 1, 1], [], []>} : vector<100x128xbf16>, vector<128x128xbf16>, vector<100x128xf32> -> vector<100x128xf32>
    %6 = arith.addf %0, %5 : vector<100x128xf32>
    %c0_5 = arith.constant 0 : index
    %c1 = arith.constant 1 : index
    %c0_6 = arith.constant 0 : index
    %7 = vector.load %arg1[%c0_5, %c1, %c0_6] : memref<1x122x128xf32, #tpu.memory_space<vmem>>, vector<1x100x128xf32>
    %8 = vector.shape_cast %7 : vector<1x100x128xf32> to vector<100x128xf32>
    %9 = arith.truncf %8 : vector<100x128xf32> to vector<100x128xbf16>
    %c128 = arith.constant 128 : index
    %c0_7 = arith.constant 0 : index
    %10 = vector.load %arg2[%c128, %c0_7] : memref<1152x128xbf16, #tpu.memory_space<vmem>>, vector<128x128xbf16>
    %cst_8 = arith.constant dense<0.000000e+00> : vector<100x128xf32>
    %11 = tpu.matmul %9, %10, %cst_8 {dimension_numbers = #tpu.dot_dimension_numbers<[1], [0], [0], [1], [0, 0, 1, 1], [], []>} : vector<100x128xbf16>, vector<128x128xbf16>, vector<100x128xf32> -> vector<100x128xf32>
    %12 = arith.addf %6, %11 : vector<100x128xf32>
    %c0_9 = arith.constant 0 : index
    %c2 = arith.constant 2 : index
    %c0_10 = arith.constant 0 : index
    %13 = vector.load %arg1[%c0_9, %c2, %c0_10] : memref<1x122x128xf32, #tpu.memory_space<vmem>>, vector<1x100x128xf32>
    %14 = vector.shape_cast %13 : vector<1x100x128xf32> to vector<100x128xf32>
    %15 = arith.truncf %14 : vector<100x128xf32> to vector<100x128xbf16>
    %c256 = arith.constant 256 : index
    %c0_11 = arith.constant 0 : index
    %16 = vector.load %arg2[%c256, %c0_11] : memref<1152x128xbf16, #tpu.memory_space<vmem>>, vector<128x128xbf16>
    %cst_12 = arith.constant dense<0.000000e+00> : vector<100x128xf32>
    %17 = tpu.matmul %15, %16, %cst_12 {dimension_numbers = #tpu.dot_dimension_numbers<[1], [0], [0], [1], [0, 0, 1, 1], [], []>} : vector<100x128xbf16>, vector<128x128xbf16>, vector<100x128xf32> -> vector<100x128xf32>
    %18 = arith.addf %12, %17 : vector<100x128xf32>
    %c0_13 = arith.constant 0 : index
    %c10 = arith.constant 10 : index
    %c0_14 = arith.constant 0 : index
    %19 = vector.load %arg1[%c0_13, %c10, %c0_14] : memref<1x122x128xf32, #tpu.memory_space<vmem>>, vector<1x100x128xf32>
    %20 = vector.shape_cast %19 : vector<1x100x128xf32> to vector<100x128xf32>
    %21 = arith.truncf %20 : vector<100x128xf32> to vector<100x128xbf16>
    %c384 = arith.constant 384 : index
    %c0_15 = arith.constant 0 : index
    %22 = vector.load %arg2[%c384, %c0_15] : memref<1152x128xbf16, #tpu.memory_space<vmem>>, vector<128x128xbf16>
    %cst_16 = arith.constant dense<0.000000e+00> : vector<100x128xf32>
    %23 = tpu.matmul %21, %22, %cst_16 {dimension_numbers = #tpu.dot_dimension_numbers<[1], [0], [0], [1], [0, 0, 1, 1], [], []>} : vector<100x128xbf16>, vector<128x128xbf16>, vector<100x128xf32> -> vector<100x128xf32>
    %24 = arith.addf %18, %23 : vector<100x128xf32>
    %c0_17 = arith.constant 0 : index
    %c11 = arith.constant 11 : index
    %c0_18 = arith.constant 0 : index
    %25 = vector.load %arg1[%c0_17, %c11, %c0_18] : memref<1x122x128xf32, #tpu.memory_space<vmem>>, vector<1x100x128xf32>
    %26 = vector.shape_cast %25 : vector<1x100x128xf32> to vector<100x128xf32>
    %27 = arith.truncf %26 : vector<100x128xf32> to vector<100x128xbf16>
    %c512 = arith.constant 512 : index
    %c0_19 = arith.constant 0 : index
    %28 = vector.load %arg2[%c512, %c0_19] : memref<1152x128xbf16, #tpu.memory_space<vmem>>, vector<128x128xbf16>
    %cst_20 = arith.constant dense<0.000000e+00> : vector<100x128xf32>
    %29 = tpu.matmul %27, %28, %cst_20 {dimension_numbers = #tpu.dot_dimension_numbers<[1], [0], [0], [1], [0, 0, 1, 1], [], []>} : vector<100x128xbf16>, vector<128x128xbf16>, vector<100x128xf32> -> vector<100x128xf32>
    %30 = arith.addf %24, %29 : vector<100x128xf32>
    %c0_21 = arith.constant 0 : index
    %c12 = arith.constant 12 : index
    %c0_22 = arith.constant 0 : index
    %31 = vector.load %arg1[%c0_21, %c12, %c0_22] : memref<1x122x128xf32, #tpu.memory_space<vmem>>, vector<1x100x128xf32>
    %32 = vector.shape_cast %31 : vector<1x100x128xf32> to vector<100x128xf32>
    %33 = arith.truncf %32 : vector<100x128xf32> to vector<100x128xbf16>
    %c640 = arith.constant 640 : index
    %c0_23 = arith.constant 0 : index
    %34 = vector.load %arg2[%c640, %c0_23] : memref<1152x128xbf16, #tpu.memory_space<vmem>>, vector<128x128xbf16>
    %cst_24 = arith.constant dense<0.000000e+00> : vector<100x128xf32>
    %35 = tpu.matmul %33, %34, %cst_24 {dimension_numbers = #tpu.dot_dimension_numbers<[1], [0], [0], [1], [0, 0, 1, 1], [], []>} : vector<100x128xbf16>, vector<128x128xbf16>, vector<100x128xf32> -> vector<100x128xf32>
    %36 = arith.addf %30, %35 : vector<100x128xf32>
    %c0_25 = arith.constant 0 : index
    %c20 = arith.constant 20 : index
    %c0_26 = arith.constant 0 : index
    %37 = vector.load %arg1[%c0_25, %c20, %c0_26] : memref<1x122x128xf32, #tpu.memory_space<vmem>>, vector<1x100x128xf32>
    %38 = vector.shape_cast %37 : vector<1x100x128xf32> to vector<100x128xf32>
    %39 = arith.truncf %38 : vector<100x128xf32> to vector<100x128xbf16>
    %c768 = arith.constant 768 : index
    %c0_27 = arith.constant 0 : index
    %40 = vector.load %arg2[%c768, %c0_27] : memref<1152x128xbf16, #tpu.memory_space<vmem>>, vector<128x128xbf16>
    %cst_28 = arith.constant dense<0.000000e+00> : vector<100x128xf32>
    %41 = tpu.matmul %39, %40, %cst_28 {dimension_numbers = #tpu.dot_dimension_numbers<[1], [0], [0], [1], [0, 0, 1, 1], [], []>} : vector<100x128xbf16>, vector<128x128xbf16>, vector<100x128xf32> -> vector<100x128xf32>
    %42 = arith.addf %36, %41 : vector<100x128xf32>
    %c0_29 = arith.constant 0 : index
    %c21 = arith.constant 21 : index
    %c0_30 = arith.constant 0 : index
    %43 = vector.load %arg1[%c0_29, %c21, %c0_30] : memref<1x122x128xf32, #tpu.memory_space<vmem>>, vector<1x100x128xf32>
    %44 = vector.shape_cast %43 : vector<1x100x128xf32> to vector<100x128xf32>
    %45 = arith.truncf %44 : vector<100x128xf32> to vector<100x128xbf16>
    %c896 = arith.constant 896 : index
    %c0_31 = arith.constant 0 : index
    %46 = vector.load %arg2[%c896, %c0_31] : memref<1152x128xbf16, #tpu.memory_space<vmem>>, vector<128x128xbf16>
    %cst_32 = arith.constant dense<0.000000e+00> : vector<100x128xf32>
    %47 = tpu.matmul %45, %46, %cst_32 {dimension_numbers = #tpu.dot_dimension_numbers<[1], [0], [0], [1], [0, 0, 1, 1], [], []>} : vector<100x128xbf16>, vector<128x128xbf16>, vector<100x128xf32> -> vector<100x128xf32>
    %48 = arith.addf %42, %47 : vector<100x128xf32>
    %c0_33 = arith.constant 0 : index
    %c22 = arith.constant 22 : index
    %c0_34 = arith.constant 0 : index
    %49 = vector.load %arg1[%c0_33, %c22, %c0_34] : memref<1x122x128xf32, #tpu.memory_space<vmem>>, vector<1x100x128xf32>
    %50 = vector.shape_cast %49 : vector<1x100x128xf32> to vector<100x128xf32>
    %51 = arith.truncf %50 : vector<100x128xf32> to vector<100x128xbf16>
    %c1024 = arith.constant 1024 : index
    %c0_35 = arith.constant 0 : index
    %52 = vector.load %arg2[%c1024, %c0_35] : memref<1152x128xbf16, #tpu.memory_space<vmem>>, vector<128x128xbf16>
    %cst_36 = arith.constant dense<0.000000e+00> : vector<100x128xf32>
    %53 = tpu.matmul %51, %52, %cst_36 {dimension_numbers = #tpu.dot_dimension_numbers<[1], [0], [0], [1], [0, 0, 1, 1], [], []>} : vector<100x128xbf16>, vector<128x128xbf16>, vector<100x128xf32> -> vector<100x128xf32>
    %54 = arith.addf %48, %53 : vector<100x128xf32>
    %c0_37 = arith.constant 0 : index
    %c0_38 = arith.constant 0 : index
    %c0_39 = arith.constant 0 : index
    %55 = vector.load %arg3[%c0_37, %c0_38, %c0_39] : memref<1x100x128xbf16, #tpu.memory_space<vmem>>, vector<1x100x128xbf16>
    %56 = vector.shape_cast %55 : vector<1x100x128xbf16> to vector<100x128xbf16>
    %c0_40 = arith.constant 0 : index
    %c0_41 = arith.constant 0 : index
    %57 = vector.load %arg4[%c0_40, %c0_41] : memref<128x128xbf16, #tpu.memory_space<vmem>>, vector<128x128xbf16>
    %cst_42 = arith.constant dense<0.000000e+00> : vector<100x128xf32>
    %58 = tpu.matmul %56, %57, %cst_42 {dimension_numbers = #tpu.dot_dimension_numbers<[1], [0], [0], [1], [0, 0, 1, 1], [], []>} : vector<100x128xbf16>, vector<128x128xbf16>, vector<100x128xf32> -> vector<100x128xf32>
    %c0_43 = arith.constant 0 : index
    %c0_44 = arith.constant 0 : index
    %59 = vector.load %arg5[%c0_43, %c0_44] : memref<100x1xf32, #tpu.memory_space<vmem>>, vector<100x1xf32>
    %60 = arith.truncf %54 : vector<100x128xf32> to vector<100x128xbf16>
    %c0_45 = arith.constant 0 : index
    %c0_46 = arith.constant 0 : index
    %c0_47 = arith.constant 0 : index
    %61 = vector.load %arg6[%c0_45, %c0_46, %c0_47] : memref<1x100x128xbf16, #tpu.memory_space<vmem>>, vector<1x100x128xbf16>
    %62 = vector.shape_cast %61 : vector<1x100x128xbf16> to vector<100x128xbf16>
    %63 = vector.shape_cast %60 : vector<100x128xbf16> to vector<1x100x128xbf16>
    tpu.vector_store %arg6[%c0_45, %c0_46, %c0_47], %63 {strides = array<i32>} : memref<1x100x128xbf16, #tpu.memory_space<vmem>>, vector<1x100x128xbf16>,
    %64 = vector.broadcast %59 : vector<100x1xf32> to vector<100x128xf32>
    %65 = arith.mulf %54, %64 : vector<100x128xf32>
    %cst_48 = arith.constant dense<0.000000e+00> : vector<128xf32>
    %66 = vector.multi_reduction <add>, %65, %cst_48 [0] : vector<100x128xf32> to vector<128xf32>
    %67 = vector.shape_cast %66 : vector<128xf32> to vector<1x128xf32>
    %c0_49 = arith.constant 0 : index
    %c0_50 = arith.constant 0 : index
    %68 = vector.load %arg7[%c0_49, %c0_50] : memref<8x128xf32, #tpu.memory_space<vmem>>, vector<1x128xf32>
    tpu.vector_store %arg7[%c0_49, %c0_50], %67 {strides = array<i32>} : memref<8x128xf32, #tpu.memory_space<vmem>>, vector<1x128xf32>,
    %69 = arith.mulf %54, %54 : vector<100x128xf32>
    %70 = vector.broadcast %59 : vector<100x1xf32> to vector<100x128xf32>
    %71 = arith.mulf %69, %70 : vector<100x128xf32>
    %cst_51 = arith.constant dense<0.000000e+00> : vector<128xf32>
    %72 = vector.multi_reduction <add>, %71, %cst_51 [0] : vector<100x128xf32> to vector<128xf32>
    %73 = vector.shape_cast %72 : vector<128xf32> to vector<1x128xf32>
    %c1_52 = arith.constant 1 : index
    %c0_53 = arith.constant 0 : index
    %74 = vector.load %arg7[%c1_52, %c0_53] : memref<8x128xf32, #tpu.memory_space<vmem>>, vector<1x128xf32>
    tpu.vector_store %arg7[%c1_52, %c0_53], %73 {strides = array<i32>} : memref<8x128xf32, #tpu.memory_space<vmem>>, vector<1x128xf32>,
    %75 = vector.broadcast %59 : vector<100x1xf32> to vector<100x128xf32>
    %76 = arith.mulf %58, %75 : vector<100x128xf32>
    %cst_54 = arith.constant dense<0.000000e+00> : vector<128xf32>
    %77 = vector.multi_reduction <add>, %76, %cst_54 [0] : vector<100x128xf32> to vector<128xf32>
    %78 = vector.shape_cast %77 : vector<128xf32> to vector<1x128xf32>
    %c2_55 = arith.constant 2 : index
    %c0_56 = arith.constant 0 : index
    %79 = vector.load %arg7[%c2_55, %c0_56] : memref<8x128xf32, #tpu.memory_space<vmem>>, vector<1x128xf32>
    tpu.vector_store %arg7[%c2_55, %c0_56], %78 {strides = array<i32>} : memref<8x128xf32, #tpu.memory_space<vmem>>, vector<1x128xf32>,
    %80 = arith.mulf %58, %58 : vector<100x128xf32>
    %81 = vector.broadcast %59 : vector<100x1xf32> to vector<100x128xf32>
    %82 = arith.mulf %80, %81 : vector<100x128xf32>
    %cst_57 = arith.constant dense<0.000000e+00> : vector<128xf32>
    %83 = vector.multi_reduction <add>, %82, %cst_57 [0] : vector<100x128xf32> to vector<128xf32>
    %84 = vector.shape_cast %83 : vector<128xf32> to vector<1x128xf32>
    %c3 = arith.constant 3 : index
    %c0_58 = arith.constant 0 : index
    %85 = vector.load %arg7[%c3, %c0_58] : memref<8x128xf32, #tpu.memory_space<vmem>>, vector<1x128xf32>
    tpu.vector_store %arg7[%c3, %c0_58], %84 {strides = array<i32>} : memref<8x128xf32, #tpu.memory_space<vmem>>, vector<1x128xf32>,
    %cst_59 = arith.constant 0.000000e+00 : f32
    %86 = vector.broadcast %cst_59 : f32 to vector<4x128xf32>
    %c4 = arith.constant 4 : index
    %c0_60 = arith.constant 0 : index
    %87 = vector.load %arg7[%c4, %c0_60] : memref<8x128xf32, #tpu.memory_space<vmem>>, vector<4x128xf32>
    tpu.vector_store %arg7[%c4, %c0_60], %86 {strides = array<i32>} : memref<8x128xf32, #tpu.memory_space<vmem>>, vector<4x128xf32>,
    return
  }
  func.func @transform_0(%arg0: i32) -> (i32, i32, i32) {
    %c0_i32 = arith.constant 0 : i32
    %c0_i32_0 = arith.constant 0 : i32
    %c0_i32_1 = arith.constant 0 : i32
    return %arg0, %c0_i32, %c0_i32_0 : i32, i32, i32
  }
  func.func @transform_1(%arg0: i32) -> (i32, i32) {
    %c0_i32 = arith.constant 0 : i32
    %c0_i32_0 = arith.constant 0 : i32
    %c0_i32_1 = arith.constant 0 : i32
    return %c0_i32, %c0_i32_0 : i32, i32
  }
  func.func @transform_2(%arg0: i32) -> (i32, i32, i32) {
    %c0_i32 = arith.constant 0 : i32
    %c0_i32_0 = arith.constant 0 : i32
    %c0_i32_1 = arith.constant 0 : i32
    return %arg0, %c0_i32, %c0_i32_0 : i32, i32, i32
  }
  func.func @transform_3(%arg0: i32) -> (i32, i32) {
    %c0_i32 = arith.constant 0 : i32
    %c0_i32_0 = arith.constant 0 : i32
    %c0_i32_1 = arith.constant 0 : i32
    return %c0_i32, %c0_i32_0 : i32, i32
  }
  func.func @transform_4(%arg0: i32) -> (i32, i32) {
    %c0_i32 = arith.constant 0 : i32
    %c0_i32_0 = arith.constant 0 : i32
    %c0_i32_1 = arith.constant 0 : i32
    return %c0_i32, %c0_i32_0 : i32, i32
  }
  func.func @transform_5(%arg0: i32) -> (i32, i32, i32) {
    %c0_i32 = arith.constant 0 : i32
    %c0_i32_0 = arith.constant 0 : i32
    %c0_i32_1 = arith.constant 0 : i32
    return %arg0, %c0_i32, %c0_i32_0 : i32, i32, i32
  }
  func.func @transform_6(%arg0: i32) -> (i32, i32) {
    %c0_i32 = arith.constant 0 : i32
    %c0_i32_0 = arith.constant 0 : i32
    return %arg0, %c0_i32 : i32, i32
  }
}

module attributes {stable_mosaic.version = 11 : i64} {
  func.func @pass2_kernel(%arg0: i32, %arg1: memref<1x100x128xbf16, #tpu.memory_space<vmem>>, %arg2: memref<1x100x128xbf16, #tpu.memory_space<vmem>>, %arg3: memref<128x128xbf16, #tpu.memory_space<vmem>>, %arg4: memref<1x128xf32, #tpu.memory_space<vmem>>, %arg5: memref<1x128xf32, #tpu.memory_space<vmem>>, %arg6: memref<1x128xf32, #tpu.memory_space<vmem>>, %arg7: memref<1x100x128xf32, #tpu.memory_space<vmem>>) attributes {dimension_semantics = [#tpu.dimension_semantics<parallel>], iteration_bounds = array<i64: 2>, scalar_prefetch = 0 : i64, scratch_operands = 0 : i64, tpu.core_type = #tpu.core_type<tc>, window_params = [{transform_indices = @transform_0, window_bounds = array<i64: 1, 100, 128>}, {transform_indices = @transform_1, window_bounds = array<i64: 1, 100, 128>}, {pipeline_mode = #tpu.pipeline_mode<synchronous>, transform_indices = @transform_2, window_bounds = array<i64: 128, 128>}, {pipeline_mode = #tpu.pipeline_mode<synchronous>, transform_indices = @transform_3, window_bounds = array<i64: 1, 128>}, {pipeline_mode = #tpu.pipeline_mode<synchronous>, transform_indices = @transform_4, window_bounds = array<i64: 1, 128>}, {pipeline_mode = #tpu.pipeline_mode<synchronous>, transform_indices = @transform_5, window_bounds = array<i64: 1, 128>}, {transform_indices = @transform_6, window_bounds = array<i64: 1, 100, 128>}]} {
    %c0 = arith.constant 0 : index
    %c0_0 = arith.constant 0 : index
    %c0_1 = arith.constant 0 : index
    %0 = vector.load %arg2[%c0, %c0_0, %c0_1] : memref<1x100x128xbf16, #tpu.memory_space<vmem>>, vector<1x100x128xbf16>
    %1 = vector.shape_cast %0 : vector<1x100x128xbf16> to vector<100x128xbf16>
    %c0_2 = arith.constant 0 : index
    %c0_3 = arith.constant 0 : index
    %2 = vector.load %arg3[%c0_2, %c0_3] : memref<128x128xbf16, #tpu.memory_space<vmem>>, vector<128x128xbf16>
    %cst = arith.constant dense<0.000000e+00> : vector<100x128xf32>
    %3 = tpu.matmul %1, %2, %cst {dimension_numbers = #tpu.dot_dimension_numbers<[1], [0], [0], [1], [0, 0, 1, 1], [], []>} : vector<100x128xbf16>, vector<128x128xbf16>, vector<100x128xf32> -> vector<100x128xf32>
    %c0_4 = arith.constant 0 : index
    %c0_5 = arith.constant 0 : index
    %c0_6 = arith.constant 0 : index
    %4 = vector.load %arg1[%c0_4, %c0_5, %c0_6] : memref<1x100x128xbf16, #tpu.memory_space<vmem>>, vector<1x100x128xbf16>
    %5 = vector.shape_cast %4 : vector<1x100x128xbf16> to vector<100x128xbf16>
    %6 = arith.extf %5 : vector<100x128xbf16> to vector<100x128xf32>
    %c0_7 = arith.constant 0 : index
    %c0_8 = arith.constant 0 : index
    %7 = vector.load %arg4[%c0_7, %c0_8] : memref<1x128xf32, #tpu.memory_space<vmem>>, vector<1x128xf32>
    %8 = vector.broadcast %7 : vector<1x128xf32> to vector<100x128xf32>
    %9 = arith.mulf %6, %8 : vector<100x128xf32>
    %c0_9 = arith.constant 0 : index
    %c0_10 = arith.constant 0 : index
    %10 = vector.load %arg5[%c0_9, %c0_10] : memref<1x128xf32, #tpu.memory_space<vmem>>, vector<1x128xf32>
    %11 = vector.broadcast %10 : vector<1x128xf32> to vector<100x128xf32>
    %12 = arith.mulf %3, %11 : vector<100x128xf32>
    %13 = arith.addf %9, %12 : vector<100x128xf32>
    %c0_11 = arith.constant 0 : index
    %c0_12 = arith.constant 0 : index
    %14 = vector.load %arg6[%c0_11, %c0_12] : memref<1x128xf32, #tpu.memory_space<vmem>>, vector<1x128xf32>
    %15 = vector.broadcast %14 : vector<1x128xf32> to vector<100x128xf32>
    %16 = arith.addf %13, %15 : vector<100x128xf32>
    %cst_13 = arith.constant 0.000000e+00 : f32
    %17 = vector.broadcast %cst_13 : f32 to vector<100x128xf32>
    %18 = arith.maximumf %16, %17 : vector<100x128xf32>
    %c0_14 = arith.constant 0 : index
    %c0_15 = arith.constant 0 : index
    %c0_16 = arith.constant 0 : index
    %19 = vector.load %arg7[%c0_14, %c0_15, %c0_16] : memref<1x100x128xf32, #tpu.memory_space<vmem>>, vector<1x100x128xf32>
    %20 = vector.shape_cast %19 : vector<1x100x128xf32> to vector<100x128xf32>
    %21 = vector.shape_cast %18 : vector<100x128xf32> to vector<1x100x128xf32>
    tpu.vector_store %arg7[%c0_14, %c0_15, %c0_16], %21 {strides = array<i32>} : memref<1x100x128xf32, #tpu.memory_space<vmem>>, vector<1x100x128xf32>,
    return
  }
  func.func @transform_0(%arg0: i32) -> (i32, i32, i32) {
    %c0_i32 = arith.constant 0 : i32
    %c0_i32_0 = arith.constant 0 : i32
    %c0_i32_1 = arith.constant 0 : i32
    return %arg0, %c0_i32, %c0_i32_0 : i32, i32, i32
  }
  func.func @transform_1(%arg0: i32) -> (i32, i32, i32) {
    %c0_i32 = arith.constant 0 : i32
    %c0_i32_0 = arith.constant 0 : i32
    %c0_i32_1 = arith.constant 0 : i32
    return %arg0, %c0_i32, %c0_i32_0 : i32, i32, i32
  }
  func.func @transform_2(%arg0: i32) -> (i32, i32) {
    %c0_i32 = arith.constant 0 : i32
    %c0_i32_0 = arith.constant 0 : i32
    %c0_i32_1 = arith.constant 0 : i32
    return %c0_i32, %c0_i32_0 : i32, i32
  }
  func.func @transform_3(%arg0: i32) -> (i32, i32) {
    %c0_i32 = arith.constant 0 : i32
    %c0_i32_0 = arith.constant 0 : i32
    %c0_i32_1 = arith.constant 0 : i32
    return %c0_i32, %c0_i32_0 : i32, i32
  }
  func.func @transform_4(%arg0: i32) -> (i32, i32) {
    %c0_i32 = arith.constant 0 : i32
    %c0_i32_0 = arith.constant 0 : i32
    %c0_i32_1 = arith.constant 0 : i32
    return %c0_i32, %c0_i32_0 : i32, i32
  }
  func.func @transform_5(%arg0: i32) -> (i32, i32) {
    %c0_i32 = arith.constant 0 : i32
    %c0_i32_0 = arith.constant 0 : i32
    %c0_i32_1 = arith.constant 0 : i32
    return %c0_i32, %c0_i32_0 : i32, i32
  }
  func.func @transform_6(%arg0: i32) -> (i32, i32, i32) {
    %c0_i32 = arith.constant 0 : i32
    %c0_i32_0 = arith.constant 0 : i32
    %c0_i32_1 = arith.constant 0 : i32
    return %arg0, %c0_i32, %c0_i32_0 : i32, i32, i32
  }
}

</mosaic_0001>

<llo_original>
// kernel: residual_block.4
$region0: #{residual_block.4}
  #allocation0 [shape = 'u32[]', space=smem, size = 0x4, offset = 0x4, fixed_abs, tag = 'smem constant byte address 0x4 - core index']
  #allocation1 [shape = 'u32[144,128]{1,0:T(1,128)}', space=vmem, size = 0x12000, scoped, tag = 'internal scratch']
  %s0 = inlined_call_operand.vmem [shape: bf16[128,128], index: 0, kind: input, shape index: {}]
  %s1 = inlined_call_operand.vmem [shape: bf16[128,128], index: 1, kind: input, shape index: {}]
  %s2 = inlined_call_operand.vmem [shape: bf16[128,128], index: 2, kind: output, shape index: {0}]
  %s3 = inlined_call_operand.vmem [shape: f32[16,128], index: 3, kind: output, shape index: {1}]
  %4 = xla_tuple %s2, %s3
  %s5 = sld [smem:[#allocation0]]
  $region49: #{residual_block.4} parent=0
    _
  %s7 = ssub.s32 1, %s5
  %s8 = scalar_select 0, %s7, %s5
  loop: start=0, step=1, limit=4
  $region2: #{residual_block.4} parent=0 // loop_pre_header
    _
  $region3: #{residual_block.4} parent=0 // loop_header
    %s10 = sphi 0, %s14
    %p11 = scmp.ge.s32.totalorder %s10, 4
    %s20 = sphi 0, %s22
    %s23 = sphi 0, %s20
    %s24 = sphi 0, %s23
    %s40 = sphi 0, %s24
    %s44 = sphi 0, %s44
    %s46 = sphi 0, %s44
    %s47 = sphi 0, %s46
    %s61 = sphi 0, %s47
    %s67 = sphi 0, %s69
    %s70 = sphi 0, %s67
    %s71 = sphi 0, %s70
    %s87 = sphi 0, %s71
    %s93 = sphi 0, %s95
    %s96 = sphi 0, %s93
    %s97 = sphi 0, %s96
    %s113 = sphi 0, %s97
  $region4: #{residual_block.4} parent=0 // loop_header_branch
    %13 = sbr.rel (%p11) target = $region8
  $region5: #{residual_block.4} parent=0 // loop_body
    %s15 = ssub.s32 %s10, 1
    %s16 = ssub.s32 %s10, 2
    %s17 = sadd.s32 %s10, 1
    %s18 = ssub.s32 %s10, %s17
    %p19 = scmp.eq.s32.totalorder %s18, 0
    %s21 = sadd.s32 %s20, 1
    %s22 = scalar_select %p19, %s20, %s21
    %p25 = pneg %p19
    %p26 = scmp.eq.s32.totalorder %s10, 1
    %p27 = por %p25, %p26
    %p28 = scmp.ne.s32.totalorder %s20, %s23
    %p29 = scmp.eq.s32.totalorder %s10, 0
    %p30 = por %p28, %p29
    %p31 = scmp.ne.s32.totalorder %s20, %s23
    %p32 = scmp.eq.s32.totalorder %s15, 1
    %p33 = por %p31, %p32
    %p34 = scmp.ne.s32.totalorder %s23, %s24
    %p35 = scmp.eq.s32.totalorder %s15, 0
    %p36 = por %p34, %p35
    %p37 = scmp.ne.s32.totalorder %s23, %s24
    %p38 = scmp.eq.s32.totalorder %s16, 1
    %p39 = por %p37, %p38
    %p41 = scmp.ne.s32.totalorder %s24, %s40
    %p42 = scmp.eq.s32.totalorder %s16, 0
    %p43 = por %p41, %p42
    %s45 = sadd.s32 %s44, 1
    %p48 = scmp.eq.s32.totalorder %s10, 1
    %p49 = scmp.ne.s32.totalorder %s44, %s46
    %p50 = scmp.eq.s32.totalorder %s10, 0
    %p51 = por %p49, %p50
    %p52 = scmp.ne.s32.totalorder %s44, %s46
    %p53 = scmp.eq.s32.totalorder %s15, 1
    %p54 = por %p52, %p53
    %p55 = scmp.ne.s32.totalorder %s46, %s47
    %p56 = scmp.eq.s32.totalorder %s15, 0
    %p57 = por %p55, %p56
    %p58 = scmp.ne.s32.totalorder %s46, %s47
    %p59 = scmp.eq.s32.totalorder %s16, 1
    %p60 = por %p58, %p59
    %p62 = scmp.ne.s32.totalorder %s47, %s61
    %p63 = scmp.eq.s32.totalorder %s16, 0
    %p64 = por %p62, %p63
    %s65 = ssub.s32 %s10, %s17
    %p66 = scmp.eq.s32.totalorder %s65, 0
    %s68 = sadd.s32 %s67, 1
    %s69 = scalar_select %p66, %s67, %s68
    %p72 = pneg %p66
    %p73 = scmp.eq.s32.totalorder %s10, 1
    %p74 = por %p72, %p73
    %p75 = scmp.ne.s32.totalorder %s67, %s70
    %p76 = scmp.eq.s32.totalorder %s10, 0
    %p77 = por %p75, %p76
    %p78 = scmp.ne.s32.totalorder %s67, %s70
    %p79 = scmp.eq.s32.totalorder %s15, 1
    %p80 = por %p78, %p79
    %p81 = scmp.ne.s32.totalorder %s70, %s71
    %p82 = scmp.eq.s32.totalorder %s15, 0
    %p83 = por %p81, %p82
    %p84 = scmp.ne.s32.totalorder %s70, %s71
    %p85 = scmp.eq.s32.totalorder %s16, 1
    %p86 = por %p84, %p85
    %p88 = scmp.ne.s32.totalorder %s71, %s87
    %p89 = scmp.eq.s32.totalorder %s16, 0
    %p90 = por %p88, %p89
    %s91 = ssub.s32 %s10, %s17
    %p92 = scmp.eq.s32.totalorder %s91, 0
    %s94 = sadd.s32 %s93, 1
    %s95 = scalar_select %p92, %s93, %s94
    %p98 = pneg %p92
    %p99 = scmp.eq.s32.totalorder %s10, 1
    %p100 = por %p98, %p99
    %p101 = scmp.ne.s32.totalorder %s93, %s96
    %p102 = scmp.eq.s32.totalorder %s10, 0
    %p103 = por %p101, %p102
    %p104 = scmp.ne.s32.totalorder %s93, %s96
    %p105 = scmp.eq.s32.totalorder %s15, 1
    %p106 = por %p104, %p105
    %p107 = scmp.ne.s32.totalorder %s96, %s97
    %p108 = scmp.eq.s32.totalorder %s15, 0
    %p109 = por %p107, %p108
    %p110 = scmp.ne.s32.totalorder %s96, %s97
    %p111 = scmp.eq.s32.totalorder %s16, 1
    %p112 = por %p110, %p111
    %p114 = scmp.ne.s32.totalorder %s97, %s113
    %p115 = scmp.eq.s32.totalorder %s16, 0
    %p116 = por %p114, %p115
    %p117 = scmp.le.s32.totalorder 1, %s10
    %p118 = scmp.lt.s32.totalorder %s10, 3
    %p119 = pnand %p117, %p118
    %p120 = pneg %p119
    // Predicated region
    $region9: #{residual_block.4} parent=5 // pred_check
      _
    $region10: #{residual_block.4} parent=5 // pred_check_branch
      %122 = sbr.rel (%p119) target = $region12
    $region11: #{residual_block.4} parent=5 // pred_region
      %s123 = ssub.s32 %s10, 1
      // Predicated region
      $region13: #{residual_block.4} parent=11 // pred_check
        %p124 = pneg %p57
      $region14: #{residual_block.4} parent=11 // pred_check_branch
        %126 = sbr.rel (%p124) target = $region16
      $region15: #{residual_block.4} parent=11 // pred_region
        _
      $region16: #{residual_block.4} parent=11 // pred_fallthru
        _
    $region12: #{residual_block.4} parent=5 // pred_fallthru
      _
    %p127 = scmp.lt.s32.totalorder %s10, 2
    // Predicated region
    $region17: #{residual_block.4} parent=5 // pred_check
      %p128 = pneg %p127
    $region18: #{residual_block.4} parent=5 // pred_check_branch
      %130 = sbr.rel (%p128) target = $region20
    $region19: #{residual_block.4} parent=5 // pred_region
      // Predicated region
      $region21: #{residual_block.4} parent=19 // pred_check
        %p131 = pneg %p30
      $region22: #{residual_block.4} parent=19 // pred_check_branch
        %133 = sbr.rel (%p131) target = $region24
      $region23: #{residual_block.4} parent=19 // pred_region
        %s134 = smul.u32 8, %s10
        %p135 = scmp.lt.s32.totalorder %s134, 15
        %s136 = scalar_select %p135, %s134, 15
        %s137 = smul.addr %s136, 4
        %s138 = scalar_lea.vmem %s0, %s137
        %s139 = smul.u32 8, %s10
      $region24: #{residual_block.4} parent=19 // pred_fallthru
        _
    $region20: #{residual_block.4} parent=5 // pred_fallthru
      _
    %p140 = scmp.le.s32.totalorder 1, %s10
    %p141 = scmp.lt.s32.totalorder %s10, 3
    %p142 = pnand %p140, %p141
    %p143 = pneg %p142
    // Predicated region
    $region25: #{residual_block.4} parent=5 // pred_check
      _
    $region26: #{residual_block.4} parent=5 // pred_check_branch
      %145 = sbr.rel (%p142) target = $region28
    $region27: #{residual_block.4} parent=5 // pred_region
      %s146 = ssub.s32 %s10, 1
      %s147 = smul.u32 8, %s15
      %p148 = scmp.lt.s32.totalorder %s147, 15
      %s149 = scalar_select %p148, %s147, 15
      %s150 = smul.addr %s149, 4
      %s151 = scalar_lea.vmem %s0, %s150
      %p152 = pneg %p36
      %p153 = pneg %p33
      %p154 = pneg %p57
      %p155 = pneg %p54
      %p156 = pneg %p83
      %p157 = pneg %p80
      %s158 = smul.u32 8, %s15
      %p159 = scmp.lt.s32.totalorder %s158, 15
      %s160 = scalar_select %p159, %s158, 15
      %s161 = smul.addr %s160, 4
      %s162 = scalar_lea.vmem %s2, %s161
      %p163 = pneg %p109
      %p164 = pneg %p106
      %p165 = scmp.lt.s32.totalorder %s15, 1
      %s166 = scalar_select %p165, %s15, 1
      %s167 = smul.addr %s166, 8
      %s168 = scalar_lea.vmem %s3, %s167
      %s169 = smul.u32 8, %s15
      %p170 = scmp.lt.s32.totalorder %s169, 15
      %s171 = scalar_select %p170, %s169, 15
      %s172 = smul.addr %s171, 4
      %s173 = scalar_lea.vmem %s0, %s172
      %s174 = smul.u32 8, %s15
      %s175 = smul.u32 8, %s15
      %p176 = scmp.lt.s32.totalorder %s175, 15
      %s177 = scalar_select %p176, %s175, 15
      %s178 = smul.addr %s177, 4
      %s179 = scalar_lea.vmem %s2, %s178
      %s180 = smul.u32 8, %s15
      %p181 = scmp.lt.s32.totalorder %s15, 1
      %s182 = scalar_select %p181, %s15, 1
      %s183 = smul.addr %s182, 8
      %s184 = scalar_lea.vmem %s3, %s183
      %v186 = vld [vmem:[%s173] sm:$0xf]
      %v187 = vld [vmem:[%s173 + $0x4] sm:$0xf]
      %v188 = vld [vmem:[%s173 + $0x8] sm:$0xf]
      %v189 = vld [vmem:[%s173 + $0xc] sm:$0xf]
      %v190 = vld [vmem:[%s173 + $0x10] sm:$0xf]
      %v191 = vld [vmem:[%s173 + $0x14] sm:$0xf]
      %v192 = vld [vmem:[%s173 + $0x18] sm:$0xf]
      %v193 = vld [vmem:[%s173 + $0x1c] sm:$0xf]
      %v194 = vld [vmem:[%s1] sm:$0xf]
      %v195 = vld [vmem:[%s1 + $0x4] sm:$0xf]
      %v196 = vld [vmem:[%s1 + $0x8] sm:$0xf]
      %v197 = vld [vmem:[%s1 + $0xc] sm:$0xf]
      %v198 = vld [vmem:[%s1 + $0x10] sm:$0xf]
      %v199 = vld [vmem:[%s1 + $0x14] sm:$0xf]
      %v200 = vld [vmem:[%s1 + $0x18] sm:$0xf]
      %v201 = vld [vmem:[%s1 + $0x1c] sm:$0xf]
      %v202 = vld [vmem:[%s1 + $0x20] sm:$0xf]
      %v203 = vld [vmem:[%s1 + $0x24] sm:$0xf]
      %v204 = vld [vmem:[%s1 + $0x28] sm:$0xf]
      %v205 = vld [vmem:[%s1 + $0x2c] sm:$0xf]
      %v206 = vld [vmem:[%s1 + $0x30] sm:$0xf]
      %v207 = vld [vmem:[%s1 + $0x34] sm:$0xf]
      %v208 = vld [vmem:[%s1 + $0x38] sm:$0xf]
      %v209 = vld [vmem:[%s1 + $0x3c] sm:$0xf]
      %v218 = vunpack.c.l.b16 %v186
      %v219 = vunpack.c.l.b16 %v187
      %v220 = vunpack.c.l.b16 %v188
      %v221 = vunpack.c.l.b16 %v189
      %v222 = vunpack.c.l.b16 %v190
      %v223 = vunpack.c.l.b16 %v191
      %v224 = vunpack.c.l.b16 %v192
      %v225 = vunpack.c.l.b16 %v193
      %v226 = vpack.c.b16 %v219, %v218
      %v227 = vpack.c.b16 %v221, %v220
      %v228 = vpack.c.b16 %v223, %v222
      %v229 = vpack.c.b16 %v225, %v224
      %v250 = vunpack.c.l.b16 %v194
      %v251 = vunpack.c.l.b16 %v195
      %v252 = vunpack.c.l.b16 %v196
      %v253 = vunpack.c.l.b16 %v197
      %v254 = vunpack.c.l.b16 %v198
      %v255 = vunpack.c.l.b16 %v199
      %v256 = vunpack.c.l.b16 %v200
      %v257 = vunpack.c.l.b16 %v201
      %v258 = vunpack.c.l.b16 %v202
      %v259 = vunpack.c.l.b16 %v203
      %v260 = vunpack.c.l.b16 %v204
      %v261 = vunpack.c.l.b16 %v205
      %v262 = vunpack.c.l.b16 %v206
      %v263 = vunpack.c.l.b16 %v207
      %v264 = vunpack.c.l.b16 %v208
      %v265 = vunpack.c.l.b16 %v209
      %v266 = vpack.c.b16 %v251, %v250
      %v267 = vpack.c.b16 %v253, %v252
      %v268 = vpack.c.b16 %v255, %v254
      %v269 = vpack.c.b16 %v257, %v256
      %v270 = vpack.c.b16 %v259, %v258
      %v271 = vpack.c.b16 %v261, %v260
      %v272 = vpack.c.b16 %v263, %v262
      %v273 = vpack.c.b16 %v265, %v264
      %282 = vmatprep.subr.bf16.mxu0 0
      %283 = vmatpush1.bf16.msra.mxu0 %v266
      %284 = vmatprep.subr.bf16.mxu0 0
      %285 = vmatpush1.bf16.msra.mxu0 %v267
      %286 = vmatprep.subr.bf16.mxu0 0
      %287 = vmatpush1.bf16.msra.mxu0 %v268
      %288 = vmatprep.subr.bf16.mxu0 0
      %289 = vmatpush1.bf16.msra.mxu0 %v269
      %290 = vmatprep.subr.bf16.mxu0 0
      %291 = vmatpush1.bf16.msra.mxu0 %v270
      %292 = vmatprep.subr.bf16.mxu0 0
      %293 = vmatpush1.bf16.msra.mxu0 %v271
      %294 = vmatprep.subr.bf16.mxu0 0
      %295 = vmatpush1.bf16.msra.mxu0 %v272
      %296 = vmatprep.subr.bf16.mxu0 0
      %297 = vmatpush1.bf16.msra.mxu0 %v273
      %298 = vmatprep.subr.bf16.mxu0 0
      %299 = vmatpush1.bf16.msra.mxu0 0
      %300 = vmatprep.subr.bf16.mxu0 0
      %301 = vmatpush1.bf16.msra.mxu0 0
      %302 = vmatprep.subr.bf16.mxu0 0
      %303 = vmatpush1.bf16.msra.mxu0 0
      %304 = vmatprep.subr.bf16.mxu0 0
      %305 = vmatpush1.bf16.msra.mxu0 0
      %306 = vmatprep.subr.bf16.mxu0 0
      %307 = vmatpush1.bf16.msra.mxu0 0
      %308 = vmatprep.subr.bf16.mxu0 0
      %309 = vmatpush1.bf16.msra.mxu0 0
      %310 = vmatprep.subr.bf16.mxu0 0
      %311 = vmatpush1.bf16.msra.mxu0 0
      %312 = vmatprep.subr.bf16.mxu0 0
      %313 = vmatpush1.bf16.msra.mxu0 0
      %314 = vmatprep.mubr.bf16.mxu0 0
      %315 = vmatmul.mubr.bf16.gmra.mrb[0].mxu0 %v226
      %v316 = vpop.f32.mrb[0].mxu0
      %v317 = vadd.f32 0.0, %v316
      %v318 = vpop.f32.mrb[0].mxu0
      %v319 = vpop.f32.mrb[0].mxu0
      %v320 = vadd.f32 0.0, %v319
      %v321 = vpop.f32.mrb[0].mxu0
      %322 = vmatprep.mubr.bf16.mxu0 0
      %323 = vmatmul.mubr.bf16.gmra.mrb[0].mxu0 %v227
      %v324 = vpop.f32.mrb[0].mxu0
      %v325 = vadd.f32 0.0, %v324
      %v326 = vpop.f32.mrb[0].mxu0
      %v327 = vpop.f32.mrb[0].mxu0
      %v328 = vadd.f32 0.0, %v327
      %v329 = vpop.f32.mrb[0].mxu0
      %330 = vmatprep.mubr.bf16.mxu0 0
      %331 = vmatmul.mubr.bf16.gmra.mrb[0].mxu0 %v228
      %v332 = vpop.f32.mrb[0].mxu0
      %v333 = vadd.f32 0.0, %v332
      %v334 = vpop.f32.mrb[0].mxu0
      %v335 = vpop.f32.mrb[0].mxu0
      %v336 = vadd.f32 0.0, %v335
      %v337 = vpop.f32.mrb[0].mxu0
      %338 = vmatprep.mubr.bf16.mxu0 0
      %339 = vmatmul.mubr.bf16.gmra.mrb[0].mxu0 %v229
      %v340 = vpop.f32.mrb[0].mxu0
      %v341 = vadd.f32 0.0, %v340
      %v342 = vpop.f32.mrb[0].mxu0
      %v343 = vpop.f32.mrb[0].mxu0
      %v344 = vadd.f32 0.0, %v343
      %v345 = vpop.f32.mrb[0].mxu0
      %346 = vdwg.mxu0
      %v347 = vpack.c.bf16 %v320, %v317
      %v348 = vpack.c.bf16 %v328, %v325
      %v349 = vpack.c.bf16 %v336, %v333
      %v350 = vpack.c.bf16 %v344, %v341
      %v355 = vunpack.c.l.b16 %v347
      %v356 = vunpack.c.h.b16 %v347
      %v357 = vunpack.c.l.b16 %v348
      %v358 = vunpack.c.h.b16 %v348
      %v359 = vunpack.c.l.b16 %v349
      %v360 = vunpack.c.h.b16 %v349
      %v361 = vunpack.c.l.b16 %v350
      %v362 = vunpack.c.h.b16 %v350
      %v363 = vpack.c.b16 %v355, %v355
      %v364 = vpack.c.b16 %v356, %v356
      %v365 = vpack.c.b16 %v357, %v357
      %v366 = vpack.c.b16 %v358, %v358
      %v367 = vpack.c.b16 %v359, %v359
      %v368 = vpack.c.b16 %v360, %v360
      %v369 = vpack.c.b16 %v361, %v361
      %v370 = vpack.c.b16 %v362, %v362
      %379 = vst [vmem:[%s179] sm:$0xf] %v363
      %380 = vst [vmem:[%s179 + $0x4] sm:$0xf] %v364
      %381 = vst [vmem:[%s179 + $0x8] sm:$0xf] %v365
      %382 = vst [vmem:[%s179 + $0xc] sm:$0xf] %v366
      %383 = vst [vmem:[%s179 + $0x10] sm:$0xf] %v367
      %384 = vst [vmem:[%s179 + $0x14] sm:$0xf] %v368
      %385 = vst [vmem:[%s179 + $0x18] sm:$0xf] %v369
      %386 = vst [vmem:[%s179 + $0x1c] sm:$0xf] %v370
      %v387 = vadd.f32 %v317, %v320
      %v388 = vadd.f32 %v387, %v325
      %v389 = vadd.f32 %v388, %v328
      %v390 = vadd.f32 %v389, %v333
      %v391 = vadd.f32 %v390, %v336
      %v392 = vadd.f32 %v391, %v341
      %v393 = vadd.f32 %v392, %v344
      %v394 = vrot.slane %v393, 4
      %v395 = vadd.f32 %v393, %v394
      %v396 = vrot.slane %v395, 2
      %v397 = vadd.f32 %v395, %v396
      %v398 = vrot.slane %v397, 1
      %v399 = vadd.f32 %v397, %v398
      %400 = vst [vmem:[%s184] sm:$0x1] %v399
      %v401 = vmul.f32 %v317, %v317
      %v402 = vmul.f32 %v320, %v320
      %v403 = vmul.f32 %v325, %v325
      %v404 = vmul.f32 %v328, %v328
      %v405 = vmul.f32 %v333, %v333
      %v406 = vmul.f32 %v336, %v336
      %v407 = vmul.f32 %v341, %v341
      %v408 = vmul.f32 %v344, %v344
      %v409 = vadd.f32 %v401, %v402
      %v410 = vadd.f32 %v409, %v403
      %v411 = vadd.f32 %v410, %v404
      %v412 = vadd.f32 %v411, %v405
      %v413 = vadd.f32 %v412, %v406
      %v414 = vadd.f32 %v413, %v407
      %v415 = vadd.f32 %v414, %v408
      %v416 = vrot.slane %v415, 4
      %v417 = vadd.f32 %v415, %v416
      %v418 = vrot.slane %v417, 2
      %v419 = vadd.f32 %v417, %v418
      %v420 = vrot.slane %v419, 1
      %v421 = vadd.f32 %v419, %v420
      %422 = vst [vmem:[%s184 + $0x1] sm:$0x1] %v421
      %423 = vst [vmem:[%s184 + $0x2] sm:$0x3f] 0.0
      %s424 = smul.u32 8, %s15
      %p425 = scmp.lt.s32.totalorder %s424, 15
      %s426 = scalar_select %p425, %s424, 15
      %s427 = smul.addr %s426, 4
      %s428 = scalar_lea.vmem %s2, %s427
      %p429 = scmp.lt.s32.totalorder %s15, 1
      %s430 = scalar_select %p429, %s15, 1
      %s431 = smul.addr %s430, 8
      %s432 = scalar_lea.vmem %s3, %s431
      // Predicated region
      $region29: #{residual_block.4} parent=27 // pred_check
        %p433 = pneg %p80
      $region30: #{residual_block.4} parent=27 // pred_check_branch
        %435 = sbr.rel (%p433) target = $region32
      $region31: #{residual_block.4} parent=27 // pred_region
        %s436 = smul.u32 8, %s15
      $region32: #{residual_block.4} parent=27 // pred_fallthru
        _
      // Predicated region
      $region33: #{residual_block.4} parent=27 // pred_check
        %p437 = pneg %p106
      $region34: #{residual_block.4} parent=27 // pred_check_branch
        %439 = sbr.rel (%p437) target = $region36
      $region35: #{residual_block.4} parent=27 // pred_region
        _
      $region36: #{residual_block.4} parent=27 // pred_fallthru
        _
    $region28: #{residual_block.4} parent=5 // pred_fallthru
      _
    %p440 = scmp.le.s32.totalorder 2, %s10
    // Predicated region
    $region37: #{residual_block.4} parent=5 // pred_check
      %p441 = pneg %p440
    $region38: #{residual_block.4} parent=5 // pred_check_branch
      %443 = sbr.rel (%p441) target = $region40
    $region39: #{residual_block.4} parent=5 // pred_region
      %s444 = ssub.s32 %s10, 2
      // Predicated region
      $region41: #{residual_block.4} parent=39 // pred_check
        %p445 = pneg %p86
      $region42: #{residual_block.4} parent=39 // pred_check_branch
        %447 = sbr.rel (%p445) target = $region44
      $region43: #{residual_block.4} parent=39 // pred_region
        %s448 = smul.u32 8, %s16
        %p449 = scmp.lt.s32.totalorder %s448, 15
        %s450 = scalar_select %p449, %s448, 15
        %s451 = smul.addr %s450, 4
        %s452 = scalar_lea.vmem %s2, %s451
      $region44: #{residual_block.4} parent=39 // pred_fallthru
        _
      // Predicated region
      $region45: #{residual_block.4} parent=39 // pred_check
        %p453 = pneg %p112
      $region46: #{residual_block.4} parent=39 // pred_check_branch
        %455 = sbr.rel (%p453) target = $region48
      $region47: #{residual_block.4} parent=39 // pred_region
        %p456 = scmp.lt.s32.totalorder %s16, 1
        %s457 = scalar_select %p456, %s16, 1
        %s458 = smul.addr %s457, 8
        %s459 = scalar_lea.vmem %s3, %s458
      $region48: #{residual_block.4} parent=39 // pred_fallthru
        _
    $region40: #{residual_block.4} parent=5 // pred_fallthru
      _
  $region6: #{residual_block.4} parent=0 // loop_footer
    %s14 = sadd.s32 1, %s10
  $region7: #{residual_block.4} parent=0 // loop_footer_branch
    %9 = sbr.rel target = $region3
  $region8: #{residual_block.4} parent=0 // loop_exit
    _

// kernel: residual_block.5
$region0: #{residual_block.5}
  #allocation0 [shape = 'u32[]', space=smem, size = 0x4, offset = 0x4, fixed_abs, tag = 'smem constant byte address 0x4 - core index']
  #allocation1 [shape = 'u32[144,128]{1,0:T(1,128)}', space=vmem, size = 0x12000, scoped, tag = 'internal scratch']
  %s0 = inlined_call_operand.vmem [shape: bf16[128,128], index: 0, kind: input, shape index: {}]
  %s1 = inlined_call_operand.vmem [shape: f32[1,128], index: 1, kind: input, shape index: {}]
  %s2 = inlined_call_operand.vmem [shape: f32[1,128], index: 2, kind: input, shape index: {}]
  %s3 = inlined_call_operand.vmem [shape: bf16[128,128], index: 3, kind: output, shape index: {}]
  %s4 = sld [smem:[#allocation0]]
  $region45: #{residual_block.5} parent=0
    _
  %s6 = ssub.s32 1, %s4
  %s7 = scalar_select 0, %s6, %s4
  loop: start=0, step=1, limit=4
  $region2: #{residual_block.5} parent=0 // loop_pre_header
    _
  $region3: #{residual_block.5} parent=0 // loop_header
    %s9 = sphi 0, %s13
    %p10 = scmp.ge.s32.totalorder %s9, 4
    %s19 = sphi 0, %s21
    %s22 = sphi 0, %s19
    %s23 = sphi 0, %s22
    %s39 = sphi 0, %s23
    %s43 = sphi 0, %s43
    %s45 = sphi 0, %s43
    %s46 = sphi 0, %s45
    %s60 = sphi 0, %s46
    %s64 = sphi 0, %s64
    %s66 = sphi 0, %s64
    %s67 = sphi 0, %s66
    %s81 = sphi 0, %s67
    %s87 = sphi 0, %s89
    %s90 = sphi 0, %s87
    %s91 = sphi 0, %s90
    %s107 = sphi 0, %s91
  $region4: #{residual_block.5} parent=0 // loop_header_branch
    %12 = sbr.rel (%p10) target = $region8
  $region5: #{residual_block.5} parent=0 // loop_body
    %s14 = ssub.s32 %s9, 1
    %s15 = ssub.s32 %s9, 2
    %s16 = sadd.s32 %s9, 1
    %s17 = ssub.s32 %s9, %s16
    %p18 = scmp.eq.s32.totalorder %s17, 0
    %s20 = sadd.s32 %s19, 1
    %s21 = scalar_select %p18, %s19, %s20
    %p24 = pneg %p18
    %p25 = scmp.eq.s32.totalorder %s9, 1
    %p26 = por %p24, %p25
    %p27 = scmp.ne.s32.totalorder %s19, %s22
    %p28 = scmp.eq.s32.totalorder %s9, 0
    %p29 = por %p27, %p28
    %p30 = scmp.ne.s32.totalorder %s19, %s22
    %p31 = scmp.eq.s32.totalorder %s14, 1
    %p32 = por %p30, %p31
    %p33 = scmp.ne.s32.totalorder %s22, %s23
    %p34 = scmp.eq.s32.totalorder %s14, 0
    %p35 = por %p33, %p34
    %p36 = scmp.ne.s32.totalorder %s22, %s23
    %p37 = scmp.eq.s32.totalorder %s15, 1
    %p38 = por %p36, %p37
    %p40 = scmp.ne.s32.totalorder %s23, %s39
    %p41 = scmp.eq.s32.totalorder %s15, 0
    %p42 = por %p40, %p41
    %s44 = sadd.s32 %s43, 1
    %p47 = scmp.eq.s32.totalorder %s9, 1
    %p48 = scmp.ne.s32.totalorder %s43, %s45
    %p49 = scmp.eq.s32.totalorder %s9, 0
    %p50 = por %p48, %p49
    %p51 = scmp.ne.s32.totalorder %s43, %s45
    %p52 = scmp.eq.s32.totalorder %s14, 1
    %p53 = por %p51, %p52
    %p54 = scmp.ne.s32.totalorder %s45, %s46
    %p55 = scmp.eq.s32.totalorder %s14, 0
    %p56 = por %p54, %p55
    %p57 = scmp.ne.s32.totalorder %s45, %s46
    %p58 = scmp.eq.s32.totalorder %s15, 1
    %p59 = por %p57, %p58
    %p61 = scmp.ne.s32.totalorder %s46, %s60
    %p62 = scmp.eq.s32.totalorder %s15, 0
    %p63 = por %p61, %p62
    %s65 = sadd.s32 %s64, 1
    %p68 = scmp.eq.s32.totalorder %s9, 1
    %p69 = scmp.ne.s32.totalorder %s64, %s66
    %p70 = scmp.eq.s32.totalorder %s9, 0
    %p71 = por %p69, %p70
    %p72 = scmp.ne.s32.totalorder %s64, %s66
    %p73 = scmp.eq.s32.totalorder %s14, 1
    %p74 = por %p72, %p73
    %p75 = scmp.ne.s32.totalorder %s66, %s67
    %p76 = scmp.eq.s32.totalorder %s14, 0
    %p77 = por %p75, %p76
    %p78 = scmp.ne.s32.totalorder %s66, %s67
    %p79 = scmp.eq.s32.totalorder %s15, 1
    %p80 = por %p78, %p79
    %p82 = scmp.ne.s32.totalorder %s67, %s81
    %p83 = scmp.eq.s32.totalorder %s15, 0
    %p84 = por %p82, %p83
    %s85 = ssub.s32 %s9, %s16
    %p86 = scmp.eq.s32.totalorder %s85, 0
    %s88 = sadd.s32 %s87, 1
    %s89 = scalar_select %p86, %s87, %s88
    %p92 = pneg %p86
    %p93 = scmp.eq.s32.totalorder %s9, 1
    %p94 = por %p92, %p93
    %p95 = scmp.ne.s32.totalorder %s87, %s90
    %p96 = scmp.eq.s32.totalorder %s9, 0
    %p97 = por %p95, %p96
    %p98 = scmp.ne.s32.totalorder %s87, %s90
    %p99 = scmp.eq.s32.totalorder %s14, 1
    %p100 = por %p98, %p99
    %p101 = scmp.ne.s32.totalorder %s90, %s91
    %p102 = scmp.eq.s32.totalorder %s14, 0
    %p103 = por %p101, %p102
    %p104 = scmp.ne.s32.totalorder %s90, %s91
    %p105 = scmp.eq.s32.totalorder %s15, 1
    %p106 = por %p104, %p105
    %p108 = scmp.ne.s32.totalorder %s91, %s107
    %p109 = scmp.eq.s32.totalorder %s15, 0
    %p110 = por %p108, %p109
    %p111 = scmp.le.s32.totalorder 1, %s9
    %p112 = scmp.lt.s32.totalorder %s9, 3
    %p113 = pnand %p111, %p112
    %p114 = pneg %p113
    // Predicated region
    $region9: #{residual_block.5} parent=5 // pred_check
      _
    $region10: #{residual_block.5} parent=5 // pred_check_branch
      %116 = sbr.rel (%p113) target = $region12
    $region11: #{residual_block.5} parent=5 // pred_region
      %s117 = ssub.s32 %s9, 1
      // Predicated region
      $region13: #{residual_block.5} parent=11 // pred_check
        %p118 = pneg %p56
      $region14: #{residual_block.5} parent=11 // pred_check_branch
        %120 = sbr.rel (%p118) target = $region16
      $region15: #{residual_block.5} parent=11 // pred_region
        _
      $region16: #{residual_block.5} parent=11 // pred_fallthru
        _
      // Predicated region
      $region17: #{residual_block.5} parent=11 // pred_check
        %p121 = pneg %p77
      $region18: #{residual_block.5} parent=11 // pred_check_branch
        %123 = sbr.rel (%p121) target = $region20
      $region19: #{residual_block.5} parent=11 // pred_region
        _
      $region20: #{residual_block.5} parent=11 // pred_fallthru
        _
    $region12: #{residual_block.5} parent=5 // pred_fallthru
      _
    %p124 = scmp.lt.s32.totalorder %s9, 2
    // Predicated region
    $region21: #{residual_block.5} parent=5 // pred_check
      %p125 = pneg %p124
    $region22: #{residual_block.5} parent=5 // pred_check_branch
      %127 = sbr.rel (%p125) target = $region24
    $region23: #{residual_block.5} parent=5 // pred_region
      // Predicated region
      $region25: #{residual_block.5} parent=23 // pred_check
        %p128 = pneg %p29
      $region26: #{residual_block.5} parent=23 // pred_check_branch
        %130 = sbr.rel (%p128) target = $region28
      $region27: #{residual_block.5} parent=23 // pred_region
        %s131 = smul.u32 8, %s9
        %p132 = scmp.lt.s32.totalorder %s131, 15
        %s133 = scalar_select %p132, %s131, 15
        %s134 = smul.addr %s133, 4
        %s135 = scalar_lea.vmem %s0, %s134
        %s136 = smul.u32 8, %s9
      $region28: #{residual_block.5} parent=23 // pred_fallthru
        _
    $region24: #{residual_block.5} parent=5 // pred_fallthru
      _
    %p137 = scmp.le.s32.totalorder 1, %s9
    %p138 = scmp.lt.s32.totalorder %s9, 3
    %p139 = pnand %p137, %p138
    %p140 = pneg %p139
    // Predicated region
    $region29: #{residual_block.5} parent=5 // pred_check
      _
    $region30: #{residual_block.5} parent=5 // pred_check_branch
      %142 = sbr.rel (%p139) target = $region32
    $region31: #{residual_block.5} parent=5 // pred_region
      %s143 = ssub.s32 %s9, 1
      %s144 = smul.u32 8, %s14
      %p145 = scmp.lt.s32.totalorder %s144, 15
      %s146 = scalar_select %p145, %s144, 15
      %s147 = smul.addr %s146, 4
      %s148 = scalar_lea.vmem %s0, %s147
      %p149 = pneg %p35
      %p150 = pneg %p32
      %p151 = pneg %p56
      %p152 = pneg %p53
      %p153 = pneg %p77
      %p154 = pneg %p74
      %p155 = pneg %p103
      %p156 = pneg %p100
      %s157 = smul.u32 8, %s14
      %p158 = scmp.lt.s32.totalorder %s157, 15
      %s159 = scalar_select %p158, %s157, 15
      %s160 = smul.addr %s159, 4
      %s161 = scalar_lea.vmem %s3, %s160
      %s162 = smul.u32 8, %s14
      %p163 = scmp.lt.s32.totalorder %s162, 15
      %s164 = scalar_select %p163, %s162, 15
      %s165 = smul.addr %s164, 4
      %s166 = scalar_lea.vmem %s0, %s165
      %s167 = smul.u32 8, %s14
      %s168 = smul.u32 8, %s14
      %p169 = scmp.lt.s32.totalorder %s168, 15
      %s170 = scalar_select %p169, %s168, 15
      %s171 = smul.addr %s170, 4
      %s172 = scalar_lea.vmem %s3, %s171
      %s173 = smul.u32 8, %s14
      %v174 = vld [vmem:[%s166] sm:$0xf]
      %v175 = vld [vmem:[%s166 + $0x4] sm:$0xf]
      %v176 = vld [vmem:[%s166 + $0x8] sm:$0xf]
      %v177 = vld [vmem:[%s166 + $0xc] sm:$0xf]
      %v178 = vld [vmem:[%s166 + $0x10] sm:$0xf]
      %v179 = vld [vmem:[%s166 + $0x14] sm:$0xf]
      %v180 = vld [vmem:[%s166 + $0x18] sm:$0xf]
      %v181 = vld [vmem:[%s166 + $0x1c] sm:$0xf]
      %v182 = vunpack.c.l.bf16 %v174
      %v183 = vunpack.c.l.bf16 %v175
      %v184 = vunpack.c.l.bf16 %v176
      %v185 = vunpack.c.l.bf16 %v177
      %v186 = vunpack.c.l.bf16 %v178
      %v187 = vunpack.c.l.bf16 %v179
      %v188 = vunpack.c.l.bf16 %v180
      %v189 = vunpack.c.l.bf16 %v181
      %v190 = vld [vmem:[%s1] sm:$0x1]
      %v192 = vlaneseq
      %v193 = vshrl.u32 %v192, 7
      %v194 = vsub.s32 0, %v193
      %v195 = vrot.slane %v190, %v194
      %v197 = vmul.f32 %v182, %v195
      %v198 = vmul.f32 %v183, %v195
      %v199 = vmul.f32 %v184, %v195
      %v200 = vmul.f32 %v185, %v195
      %v201 = vmul.f32 %v186, %v195
      %v202 = vmul.f32 %v187, %v195
      %v203 = vmul.f32 %v188, %v195
      %v204 = vmul.f32 %v189, %v195
      %v205 = vld [vmem:[%s2] sm:$0x1]
      %v207 = vlaneseq
      %v208 = vshrl.u32 %v207, 7
      %v209 = vsub.s32 0, %v208
      %v210 = vrot.slane %v205, %v209
      %v212 = vadd.f32 %v197, %v210
      %v213 = vadd.f32 %v198, %v210
      %v214 = vadd.f32 %v199, %v210
      %v215 = vadd.f32 %v200, %v210
      %v216 = vadd.f32 %v201, %v210
      %v217 = vadd.f32 %v202, %v210
      %v218 = vadd.f32 %v203, %v210
      %v219 = vadd.f32 %v204, %v210
      %v220 = vmax.f32 %v212, 0.0
      %v221 = vmax.f32 %v213, 0.0
      %v222 = vmax.f32 %v214, 0.0
      %v223 = vmax.f32 %v215, 0.0
      %v224 = vmax.f32 %v216, 0.0
      %v225 = vmax.f32 %v217, 0.0
      %v226 = vmax.f32 %v218, 0.0
      %v227 = vmax.f32 %v219, 0.0
      %v228 = vpack.c.bf16 %v221, %v220
      %v229 = vpack.c.bf16 %v223, %v222
      %v230 = vpack.c.bf16 %v225, %v224
      %v231 = vpack.c.bf16 %v227, %v226
      %v236 = vunpack.c.l.b16 %v228
      %v237 = vunpack.c.h.b16 %v228
      %v238 = vunpack.c.l.b16 %v229
      %v239 = vunpack.c.h.b16 %v229
      %v240 = vunpack.c.l.b16 %v230
      %v241 = vunpack.c.h.b16 %v230
      %v242 = vunpack.c.l.b16 %v231
      %v243 = vunpack.c.h.b16 %v231
      %v244 = vpack.c.b16 %v236, %v236
      %v245 = vpack.c.b16 %v237, %v237
      %v246 = vpack.c.b16 %v238, %v238
      %v247 = vpack.c.b16 %v239, %v239
      %v248 = vpack.c.b16 %v240, %v240
      %v249 = vpack.c.b16 %v241, %v241
      %v250 = vpack.c.b16 %v242, %v242
      %v251 = vpack.c.b16 %v243, %v243
      %260 = vst [vmem:[%s172] sm:$0xf] %v244
      %261 = vst [vmem:[%s172 + $0x4] sm:$0xf] %v245
      %262 = vst [vmem:[%s172 + $0x8] sm:$0xf] %v246
      %263 = vst [vmem:[%s172 + $0xc] sm:$0xf] %v247
      %264 = vst [vmem:[%s172 + $0x10] sm:$0xf] %v248
      %265 = vst [vmem:[%s172 + $0x14] sm:$0xf] %v249
      %266 = vst [vmem:[%s172 + $0x18] sm:$0xf] %v250
      %267 = vst [vmem:[%s172 + $0x1c] sm:$0xf] %v251
      %s268 = smul.u32 8, %s14
      %p269 = scmp.lt.s32.totalorder %s268, 15
      %s270 = scalar_select %p269, %s268, 15
      %s271 = smul.addr %s270, 4
      %s272 = scalar_lea.vmem %s3, %s271
      // Predicated region
      $region33: #{residual_block.5} parent=31 // pred_check
        %p273 = pneg %p100
      $region34: #{residual_block.5} parent=31 // pred_check_branch
        %275 = sbr.rel (%p273) target = $region36
      $region35: #{residual_block.5} parent=31 // pred_region
        %s276 = smul.u32 8, %s14
      $region36: #{residual_block.5} parent=31 // pred_fallthru
        _
    $region32: #{residual_block.5} parent=5 // pred_fallthru
      _
    %p277 = scmp.le.s32.totalorder 2, %s9
    // Predicated region
    $region37: #{residual_block.5} parent=5 // pred_check
      %p278 = pneg %p277
    $region38: #{residual_block.5} parent=5 // pred_check_branch
      %280 = sbr.rel (%p278) target = $region40
    $region39: #{residual_block.5} parent=5 // pred_region
      %s281 = ssub.s32 %s9, 2
      // Predicated region
      $region41: #{residual_block.5} parent=39 // pred_check
        %p282 = pneg %p106
      $region42: #{residual_block.5} parent=39 // pred_check_branch
        %284 = sbr.rel (%p282) target = $region44
      $region43: #{residual_block.5} parent=39 // pred_region
        %s285 = smul.u32 8, %s15
        %p286 = scmp.lt.s32.totalorder %s285, 15
        %s287 = scalar_select %p286, %s285, 15
        %s288 = smul.addr %s287, 4
        %s289 = scalar_lea.vmem %s3, %s288
      $region44: #{residual_block.5} parent=39 // pred_fallthru
        _
    $region40: #{residual_block.5} parent=5 // pred_fallthru
      _
  $region6: #{residual_block.5} parent=0 // loop_footer
    %s13 = sadd.s32 1, %s9
  $region7: #{residual_block.5} parent=0 // loop_footer_branch
    %8 = sbr.rel target = $region3
  $region8: #{residual_block.5} parent=0 // loop_exit
    _

// kernel: residual_block.6
$region0: #{residual_block.6}
  #allocation0 [shape = 'u32[]', space=smem, size = 0x4, offset = 0x4, fixed_abs, tag = 'smem constant byte address 0x4 - core index']
  #allocation1 [shape = 'u32[144,128]{1,0:T(1,128)}', space=vmem, size = 0x12000, scoped, tag = 'internal scratch']
  %s0 = inlined_call_operand.vmem [shape: f32[2,122,128], index: 0, kind: input, shape index: {}]
  %s1 = inlined_call_operand.vmem [shape: bf16[1152,128], index: 1, kind: input, shape index: {}]
  %s2 = inlined_call_operand.vmem [shape: bf16[2,100,128], index: 2, kind: input, shape index: {}]
  %s3 = inlined_call_operand.vmem [shape: bf16[128,128], index: 3, kind: input, shape index: {}]
  %s4 = inlined_call_operand.vmem [shape: f32[100,1], index: 4, kind: input, shape index: {}]
  %s5 = inlined_call_operand.vmem [shape: bf16[2,100,128], index: 5, kind: output, shape index: {0}]
  %s6 = inlined_call_operand.vmem [shape: f32[16,128], index: 6, kind: output, shape index: {1}]
  %7 = xla_tuple %s5, %s6
  %s8 = sld [smem:[#allocation0]]
  $region61: #{residual_block.6} parent=0
    _
  %s10 = ssub.s32 1, %s8
  %s11 = scalar_select 0, %s10, %s8
  loop: start=0, step=1, limit=4
  $region2: #{residual_block.6} parent=0 // loop_pre_header
    _
  $region3: #{residual_block.6} parent=0 // loop_header
    %s13 = sphi 0, %s17
    %p14 = scmp.ge.s32.totalorder %s13, 4
    %s23 = sphi 0, %s25
    %s26 = sphi 0, %s23
    %s27 = sphi 0, %s26
    %s43 = sphi 0, %s27
    %s47 = sphi 0, %s47
    %s49 = sphi 0, %s47
    %s50 = sphi 0, %s49
    %s64 = sphi 0, %s50
    %s70 = sphi 0, %s72
    %s73 = sphi 0, %s70
    %s74 = sphi 0, %s73
    %s90 = sphi 0, %s74
    %s94 = sphi 0, %s94
    %s96 = sphi 0, %s94
    %s97 = sphi 0, %s96
    %s111 = sphi 0, %s97
    %s115 = sphi 0, %s115
    %s117 = sphi 0, %s115
    %s118 = sphi 0, %s117
    %s132 = sphi 0, %s118
    %s138 = sphi 0, %s140
    %s141 = sphi 0, %s138
    %s142 = sphi 0, %s141
    %s158 = sphi 0, %s142
    %s164 = sphi 0, %s166
    %s167 = sphi 0, %s164
    %s168 = sphi 0, %s167
    %s184 = sphi 0, %s168
  $region4: #{residual_block.6} parent=0 // loop_header_branch
    %16 = sbr.rel (%p14) target = $region8
  $region5: #{residual_block.6} parent=0 // loop_body
    %s18 = ssub.s32 %s13, 1
    %s19 = ssub.s32 %s13, 2
    %s20 = sadd.s32 %s13, 1
    %s21 = ssub.s32 %s13, %s20
    %p22 = scmp.eq.s32.totalorder %s21, 0
    %s24 = sadd.s32 %s23, 1
    %s25 = scalar_select %p22, %s23, %s24
    %p28 = pneg %p22
    %p29 = scmp.eq.s32.totalorder %s13, 1
    %p30 = por %p28, %p29
    %p31 = scmp.ne.s32.totalorder %s23, %s26
    %p32 = scmp.eq.s32.totalorder %s13, 0
    %p33 = por %p31, %p32
    %p34 = scmp.ne.s32.totalorder %s23, %s26
    %p35 = scmp.eq.s32.totalorder %s18, 1
    %p36 = por %p34, %p35
    %p37 = scmp.ne.s32.totalorder %s26, %s27
    %p38 = scmp.eq.s32.totalorder %s18, 0
    %p39 = por %p37, %p38
    %p40 = scmp.ne.s32.totalorder %s26, %s27
    %p41 = scmp.eq.s32.totalorder %s19, 1
    %p42 = por %p40, %p41
    %p44 = scmp.ne.s32.totalorder %s27, %s43
    %p45 = scmp.eq.s32.totalorder %s19, 0
    %p46 = por %p44, %p45
    %s48 = sadd.s32 %s47, 1
    %p51 = scmp.eq.s32.totalorder %s13, 1
    %p52 = scmp.ne.s32.totalorder %s47, %s49
    %p53 = scmp.eq.s32.totalorder %s13, 0
    %p54 = por %p52, %p53
    %p55 = scmp.ne.s32.totalorder %s47, %s49
    %p56 = scmp.eq.s32.totalorder %s18, 1
    %p57 = por %p55, %p56
    %p58 = scmp.ne.s32.totalorder %s49, %s50
    %p59 = scmp.eq.s32.totalorder %s18, 0
    %p60 = por %p58, %p59
    %p61 = scmp.ne.s32.totalorder %s49, %s50
    %p62 = scmp.eq.s32.totalorder %s19, 1
    %p63 = por %p61, %p62
    %p65 = scmp.ne.s32.totalorder %s50, %s64
    %p66 = scmp.eq.s32.totalorder %s19, 0
    %p67 = por %p65, %p66
    %s68 = ssub.s32 %s13, %s20
    %p69 = scmp.eq.s32.totalorder %s68, 0
    %s71 = sadd.s32 %s70, 1
    %s72 = scalar_select %p69, %s70, %s71
    %p75 = pneg %p69
    %p76 = scmp.eq.s32.totalorder %s13, 1
    %p77 = por %p75, %p76
    %p78 = scmp.ne.s32.totalorder %s70, %s73
    %p79 = scmp.eq.s32.totalorder %s13, 0
    %p80 = por %p78, %p79
    %p81 = scmp.ne.s32.totalorder %s70, %s73
    %p82 = scmp.eq.s32.totalorder %s18, 1
    %p83 = por %p81, %p82
    %p84 = scmp.ne.s32.totalorder %s73, %s74
    %p85 = scmp.eq.s32.totalorder %s18, 0
    %p86 = por %p84, %p85
    %p87 = scmp.ne.s32.totalorder %s73, %s74
    %p88 = scmp.eq.s32.totalorder %s19, 1
    %p89 = por %p87, %p88
    %p91 = scmp.ne.s32.totalorder %s74, %s90
    %p92 = scmp.eq.s32.totalorder %s19, 0
    %p93 = por %p91, %p92
    %s95 = sadd.s32 %s94, 1
    %p98 = scmp.eq.s32.totalorder %s13, 1
    %p99 = scmp.ne.s32.totalorder %s94, %s96
    %p100 = scmp.eq.s32.totalorder %s13, 0
    %p101 = por %p99, %p100
    %p102 = scmp.ne.s32.totalorder %s94, %s96
    %p103 = scmp.eq.s32.totalorder %s18, 1
    %p104 = por %p102, %p103
    %p105 = scmp.ne.s32.totalorder %s96, %s97
    %p106 = scmp.eq.s32.totalorder %s18, 0
    %p107 = por %p105, %p106
    %p108 = scmp.ne.s32.totalorder %s96, %s97
    %p109 = scmp.eq.s32.totalorder %s19, 1
    %p110 = por %p108, %p109
    %p112 = scmp.ne.s32.totalorder %s97, %s111
    %p113 = scmp.eq.s32.totalorder %s19, 0
    %p114 = por %p112, %p113
    %s116 = sadd.s32 %s115, 1
    %p119 = scmp.eq.s32.totalorder %s13, 1
    %p120 = scmp.ne.s32.totalorder %s115, %s117
    %p121 = scmp.eq.s32.totalorder %s13, 0
    %p122 = por %p120, %p121
    %p123 = scmp.ne.s32.totalorder %s115, %s117
    %p124 = scmp.eq.s32.totalorder %s18, 1
    %p125 = por %p123, %p124
    %p126 = scmp.ne.s32.totalorder %s117, %s118
    %p127 = scmp.eq.s32.totalorder %s18, 0
    %p128 = por %p126, %p127
    %p129 = scmp.ne.s32.totalorder %s117, %s118
    %p130 = scmp.eq.s32.totalorder %s19, 1
    %p131 = por %p129, %p130
    %p133 = scmp.ne.s32.totalorder %s118, %s132
    %p134 = scmp.eq.s32.totalorder %s19, 0
    %p135 = por %p133, %p134
    %s136 = ssub.s32 %s13, %s20
    %p137 = scmp.eq.s32.totalorder %s136, 0
    %s139 = sadd.s32 %s138, 1
    %s140 = scalar_select %p137, %s138, %s139
    %p143 = pneg %p137
    %p144 = scmp.eq.s32.totalorder %s13, 1
    %p145 = por %p143, %p144
    %p146 = scmp.ne.s32.totalorder %s138, %s141
    %p147 = scmp.eq.s32.totalorder %s13, 0
    %p148 = por %p146, %p147
    %p149 = scmp.ne.s32.totalorder %s138, %s141
    %p150 = scmp.eq.s32.totalorder %s18, 1
    %p151 = por %p149, %p150
    %p152 = scmp.ne.s32.totalorder %s141, %s142
    %p153 = scmp.eq.s32.totalorder %s18, 0
    %p154 = por %p152, %p153
    %p155 = scmp.ne.s32.totalorder %s141, %s142
    %p156 = scmp.eq.s32.totalorder %s19, 1
    %p157 = por %p155, %p156
    %p159 = scmp.ne.s32.totalorder %s142, %s158
    %p160 = scmp.eq.s32.totalorder %s19, 0
    %p161 = por %p159, %p160
    %s162 = ssub.s32 %s13, %s20
    %p163 = scmp.eq.s32.totalorder %s162, 0
    %s165 = sadd.s32 %s164, 1
    %s166 = scalar_select %p163, %s164, %s165
    %p169 = pneg %p163
    %p170 = scmp.eq.s32.totalorder %s13, 1
    %p171 = por %p169, %p170
    %p172 = scmp.ne.s32.totalorder %s164, %s167
    %p173 = scmp.eq.s32.totalorder %s13, 0
    %p174 = por %p172, %p173
    %p175 = scmp.ne.s32.totalorder %s164, %s167
    %p176 = scmp.eq.s32.totalorder %s18, 1
    %p177 = por %p175, %p176
    %p178 = scmp.ne.s32.totalorder %s167, %s168
    %p179 = scmp.eq.s32.totalorder %s18, 0
    %p180 = por %p178, %p179
    %p181 = scmp.ne.s32.totalorder %s167, %s168
    %p182 = scmp.eq.s32.totalorder %s19, 1
    %p183 = por %p181, %p182
    %p185 = scmp.ne.s32.totalorder %s168, %s184
    %p186 = scmp.eq.s32.totalorder %s19, 0
    %p187 = por %p185, %p186
    %p188 = scmp.le.s32.totalorder 1, %s13
    %p189 = scmp.lt.s32.totalorder %s13, 3
    %p190 = pnand %p188, %p189
    %p191 = pneg %p190
    // Predicated region
    $region9: #{residual_block.6} parent=5 // pred_check
      _
    $region10: #{residual_block.6} parent=5 // pred_check_branch
      %193 = sbr.rel (%p190) target = $region12
    $region11: #{residual_block.6} parent=5 // pred_region
      %s194 = ssub.s32 %s13, 1
      // Predicated region
      $region13: #{residual_block.6} parent=11 // pred_check
        %p195 = pneg %p60
      $region14: #{residual_block.6} parent=11 // pred_check_branch
        %197 = sbr.rel (%p195) target = $region16
      $region15: #{residual_block.6} parent=11 // pred_region
        _
      $region16: #{residual_block.6} parent=11 // pred_fallthru
        _
      // Predicated region
      $region17: #{residual_block.6} parent=11 // pred_check
        %p198 = pneg %p107
      $region18: #{residual_block.6} parent=11 // pred_check_branch
        %200 = sbr.rel (%p198) target = $region20
      $region19: #{residual_block.6} parent=11 // pred_region
        _
      $region20: #{residual_block.6} parent=11 // pred_fallthru
        _
      // Predicated region
      $region21: #{residual_block.6} parent=11 // pred_check
        %p201 = pneg %p128
      $region22: #{residual_block.6} parent=11 // pred_check_branch
        %203 = sbr.rel (%p201) target = $region24
      $region23: #{residual_block.6} parent=11 // pred_region
        _
      $region24: #{residual_block.6} parent=11 // pred_fallthru
        _
    $region12: #{residual_block.6} parent=5 // pred_fallthru
      _
    %p204 = scmp.lt.s32.totalorder %s13, 2
    // Predicated region
    $region25: #{residual_block.6} parent=5 // pred_check
      %p205 = pneg %p204
    $region26: #{residual_block.6} parent=5 // pred_check_branch
      %207 = sbr.rel (%p205) target = $region28
    $region27: #{residual_block.6} parent=5 // pred_region
      // Predicated region
      $region29: #{residual_block.6} parent=27 // pred_check
        %p208 = pneg %p33
      $region30: #{residual_block.6} parent=27 // pred_check_branch
        %210 = sbr.rel (%p208) target = $region32
      $region31: #{residual_block.6} parent=27 // pred_region
        %p211 = scmp.lt.s32.totalorder %s13, 1
        %s212 = scalar_select %p211, %s13, 1
        %s213 = smul.addr %s212, 16
        %s214 = smul.addr %s213, 8
        %s215 = scalar_lea.vmem %s0, %s214
      $region32: #{residual_block.6} parent=27 // pred_fallthru
        _
      // Predicated region
      $region33: #{residual_block.6} parent=27 // pred_check
        %p216 = pneg %p80
      $region34: #{residual_block.6} parent=27 // pred_check_branch
        %218 = sbr.rel (%p216) target = $region36
      $region35: #{residual_block.6} parent=27 // pred_region
        %p219 = scmp.lt.s32.totalorder %s13, 1
        %s220 = scalar_select %p219, %s13, 1
        %s221 = smul.addr %s220, 13
        %s222 = smul.addr %s221, 4
        %s223 = scalar_lea.vmem %s2, %s222
      $region36: #{residual_block.6} parent=27 // pred_fallthru
        _
    $region28: #{residual_block.6} parent=5 // pred_fallthru
      _
    %p224 = scmp.le.s32.totalorder 1, %s13
    %p225 = scmp.lt.s32.totalorder %s13, 3
    %p226 = pnand %p224, %p225
    %p227 = pneg %p226
    // Predicated region
    $region37: #{residual_block.6} parent=5 // pred_check
      _
    $region38: #{residual_block.6} parent=5 // pred_check_branch
      %229 = sbr.rel (%p226) target = $region40
    $region39: #{residual_block.6} parent=5 // pred_region
      %s230 = ssub.s32 %s13, 1
      %p231 = scmp.lt.s32.totalorder %s18, 1
      %s232 = scalar_select %p231, %s18, 1
      %s233 = smul.addr %s232, 16
      %s234 = smul.addr %s233, 8
      %s235 = scalar_lea.vmem %s0, %s234
      %p236 = pneg %p39
      %p237 = pneg %p36
      %p238 = pneg %p60
      %p239 = pneg %p57
      %p240 = scmp.lt.s32.totalorder %s18, 1
      %s241 = scalar_select %p240, %s18, 1
      %s242 = smul.addr %s241, 13
      %s243 = smul.addr %s242, 4
      %s244 = scalar_lea.vmem %s2, %s243
      %p245 = pneg %p86
      %p246 = pneg %p83
      %p247 = pneg %p107
      %p248 = pneg %p104
      %p249 = pneg %p128
      %p250 = pneg %p125
      %p251 = pneg %p154
      %p252 = pneg %p151
      %p253 = scmp.lt.s32.totalorder %s18, 1
      %s254 = scalar_select %p253, %s18, 1
      %s255 = smul.addr %s254, 13
      %s256 = smul.addr %s255, 4
      %s257 = scalar_lea.vmem %s5, %s256
      %p258 = pneg %p180
      %p259 = pneg %p177
      %p260 = scmp.lt.s32.totalorder %s18, 1
      %s261 = scalar_select %p260, %s18, 1
      %s262 = smul.addr %s261, 8
      %s263 = scalar_lea.vmem %s6, %s262
      %p264 = scmp.lt.s32.totalorder %s18, 1
      %s265 = scalar_select %p264, %s18, 1
      %s266 = smul.addr %s265, 16
      %s267 = smul.addr %s266, 8
      %s268 = scalar_lea.vmem %s0, %s267
      %p269 = scmp.lt.s32.totalorder %s18, 1
      %s270 = scalar_select %p269, %s18, 1
      %s271 = smul.addr %s270, 13
      %s272 = smul.addr %s271, 4
      %s273 = scalar_lea.vmem %s2, %s272
      %p274 = scmp.lt.s32.totalorder %s18, 1
      %s275 = scalar_select %p274, %s18, 1
      %s276 = smul.addr %s275, 13
      %s277 = smul.addr %s276, 4
      %s278 = scalar_lea.vmem %s5, %s277
      %p279 = scmp.lt.s32.totalorder %s18, 1
      %s280 = scalar_select %p279, %s18, 1
      %s281 = smul.addr %s280, 8
      %s282 = scalar_lea.vmem %s6, %s281
      %v284 = vld [vmem:[%s268] sm:$0xff]
      %v285 = vld [vmem:[%s268 + $0x8] sm:$0xff]
      %v286 = vld [vmem:[%s268 + $0x10] sm:$0xff]
      %v287 = vld [vmem:[%s268 + $0x18] sm:$0xff]
      %v288 = vld [vmem:[%s268 + $0x20] sm:$0xff]
      %v289 = vld [vmem:[%s268 + $0x28] sm:$0xff]
      %v290 = vld [vmem:[%s268 + $0x30] sm:$0xff]
      %v291 = vld [vmem:[%s268 + $0x38] sm:$0xff]
      %v292 = vld [vmem:[%s268 + $0x40] sm:$0xff]
      %v293 = vld [vmem:[%s268 + $0x48] sm:$0xff]
      %v294 = vld [vmem:[%s268 + $0x50] sm:$0xff]
      %v295 = vld [vmem:[%s268 + $0x58] sm:$0xff]
      %v296 = vld [vmem:[%s268 + $0x60] sm:$0xf]
      %v297 = vpack.c.bf16 %v285, %v284
      %v298 = vpack.c.bf16 %v287, %v286
      %v299 = vpack.c.bf16 %v289, %v288
      %v300 = vpack.c.bf16 %v291, %v290
      %v301 = vpack.c.bf16 %v293, %v292
      %v302 = vpack.c.bf16 %v295, %v294
      %v303 = vpack.c.bf16 %v296, %v296
      %v304 = vld [vmem:[%s1] sm:$0xf]
      %v305 = vld [vmem:[%s1 + $0x4] sm:$0xf]
      %v306 = vld [vmem:[%s1 + $0x8] sm:$0xf]
      %v307 = vld [vmem:[%s1 + $0xc] sm:$0xf]
      %v308 = vld [vmem:[%s1 + $0x10] sm:$0xf]
      %v309 = vld [vmem:[%s1 + $0x14] sm:$0xf]
      %v310 = vld [vmem:[%s1 + $0x18] sm:$0xf]
      %v311 = vld [vmem:[%s1 + $0x1c] sm:$0xf]
      %v312 = vld [vmem:[%s1 + $0x20] sm:$0xf]
      %v313 = vld [vmem:[%s1 + $0x24] sm:$0xf]
      %v314 = vld [vmem:[%s1 + $0x28] sm:$0xf]
      %v315 = vld [vmem:[%s1 + $0x2c] sm:$0xf]
      %v316 = vld [vmem:[%s1 + $0x30] sm:$0xf]
      %v317 = vld [vmem:[%s1 + $0x34] sm:$0xf]
      %v318 = vld [vmem:[%s1 + $0x38] sm:$0xf]
      %v319 = vld [vmem:[%s1 + $0x3c] sm:$0xf]
      %v320 = vld [vmem:[%s268 + $0x1] sm:$0xff]
      %v321 = vld [vmem:[%s268 + $0x9] sm:$0xff]
      %v322 = vld [vmem:[%s268 + $0x11] sm:$0xff]
      %v323 = vld [vmem:[%s268 + $0x19] sm:$0xff]
      %v324 = vld [vmem:[%s268 + $0x21] sm:$0xff]
      %v325 = vld [vmem:[%s268 + $0x29] sm:$0xff]
      %v326 = vld [vmem:[%s268 + $0x31] sm:$0xff]
      %v327 = vld [vmem:[%s268 + $0x39] sm:$0xff]
      %v328 = vld [vmem:[%s268 + $0x41] sm:$0xff]
      %v329 = vld [vmem:[%s268 + $0x49] sm:$0xff]
      %v330 = vld [vmem:[%s268 + $0x51] sm:$0xff]
      %v331 = vld [vmem:[%s268 + $0x59] sm:$0xff]
      %v332 = vld [vmem:[%s268 + $0x61] sm:$0xf]
      %v333 = vpack.c.bf16 %v321, %v320
      %v334 = vpack.c.bf16 %v323, %v322
      %v335 = vpack.c.bf16 %v325, %v324
      %v336 = vpack.c.bf16 %v327, %v326
      %v337 = vpack.c.bf16 %v329, %v328
      %v338 = vpack.c.bf16 %v331, %v330
      %v339 = vpack.c.bf16 %v332, %v332
      %v340 = vld [vmem:[%s1 + $0x40] sm:$0xf]
      %v341 = vld [vmem:[%s1 + $0x44] sm:$0xf]
      %v342 = vld [vmem:[%s1 + $0x48] sm:$0xf]
      %v343 = vld [vmem:[%s1 + $0x4c] sm:$0xf]
      %v344 = vld [vmem:[%s1 + $0x50] sm:$0xf]
      %v345 = vld [vmem:[%s1 + $0x54] sm:$0xf]
      %v346 = vld [vmem:[%s1 + $0x58] sm:$0xf]
      %v347 = vld [vmem:[%s1 + $0x5c] sm:$0xf]
      %v348 = vld [vmem:[%s1 + $0x60] sm:$0xf]
      %v349 = vld [vmem:[%s1 + $0x64] sm:$0xf]
      %v350 = vld [vmem:[%s1 + $0x68] sm:$0xf]
      %v351 = vld [vmem:[%s1 + $0x6c] sm:$0xf]
      %v352 = vld [vmem:[%s1 + $0x70] sm:$0xf]
      %v353 = vld [vmem:[%s1 + $0x74] sm:$0xf]
      %v354 = vld [vmem:[%s1 + $0x78] sm:$0xf]
      %v355 = vld [vmem:[%s1 + $0x7c] sm:$0xf]
      %v372 = vunpack.c.l.b16 %v340
      %v373 = vunpack.c.l.b16 %v341
      %v374 = vunpack.c.l.b16 %v342
      %v375 = vunpack.c.l.b16 %v343
      %v376 = vunpack.c.l.b16 %v344
      %v377 = vunpack.c.l.b16 %v345
      %v378 = vunpack.c.l.b16 %v346
      %v379 = vunpack.c.l.b16 %v347
      %v380 = vunpack.c.l.b16 %v348
      %v381 = vunpack.c.l.b16 %v349
      %v382 = vunpack.c.l.b16 %v350
      %v383 = vunpack.c.l.b16 %v351
      %v384 = vunpack.c.l.b16 %v352
      %v385 = vunpack.c.l.b16 %v353
      %v386 = vunpack.c.l.b16 %v354
      %v387 = vunpack.c.l.b16 %v355
      %v388 = vpack.c.b16 %v373, %v372
      %v389 = vpack.c.b16 %v375, %v374
      %v390 = vpack.c.b16 %v377, %v376
      %v391 = vpack.c.b16 %v379, %v378
      %v392 = vpack.c.b16 %v381, %v380
      %v393 = vpack.c.b16 %v383, %v382
      %v394 = vpack.c.b16 %v385, %v384
      %v395 = vpack.c.b16 %v387, %v386
      %404 = vmatprep.subr.bf16.mxu0 0
      %405 = vmatpush1.bf16.msra.mxu0 %v388
      %406 = vmatprep.subr.bf16.mxu0 0
      %407 = vmatpush1.bf16.msra.mxu0 %v389
      %408 = vmatprep.subr.bf16.mxu0 0
      %409 = vmatpush1.bf16.msra.mxu0 %v390
      %410 = vmatprep.subr.bf16.mxu0 0
      %411 = vmatpush1.bf16.msra.mxu0 %v391
      %412 = vmatprep.subr.bf16.mxu0 0
      %413 = vmatpush1.bf16.msra.mxu0 %v392
      %414 = vmatprep.subr.bf16.mxu0 0
      %415 = vmatpush1.bf16.msra.mxu0 %v393
      %416 = vmatprep.subr.bf16.mxu0 0
      %417 = vmatpush1.bf16.msra.mxu0 %v394
      %418 = vmatprep.subr.bf16.mxu0 0
      %419 = vmatpush1.bf16.msra.mxu0 %v395
      %420 = vmatprep.subr.bf16.mxu0 0
      %421 = vmatpush1.bf16.msra.mxu0 0
      %422 = vmatprep.subr.bf16.mxu0 0
      %423 = vmatpush1.bf16.msra.mxu0 0
      %424 = vmatprep.subr.bf16.mxu0 0
      %425 = vmatpush1.bf16.msra.mxu0 0
      %426 = vmatprep.subr.bf16.mxu0 0
      %427 = vmatpush1.bf16.msra.mxu0 0
      %428 = vmatprep.subr.bf16.mxu0 0
      %429 = vmatpush1.bf16.msra.mxu0 0
      %430 = vmatprep.subr.bf16.mxu0 0
      %431 = vmatpush1.bf16.msra.mxu0 0
      %432 = vmatprep.subr.bf16.mxu0 0
      %433 = vmatpush1.bf16.msra.mxu0 0
      %434 = vmatprep.subr.bf16.mxu0 0
      %435 = vmatpush1.bf16.msra.mxu0 0
      %436 = vmatprep.mubr.bf16.mxu0 0
      %437 = vmatmul.mubr.bf16.gmra.mrb[0].mxu0 %v333
      %v438 = vpop.f32.mrb[0].mxu0
      %v439 = vadd.f32 0.0, %v438
      %v440 = vpop.f32.mrb[0].mxu0
      %v441 = vpop.f32.mrb[0].mxu0
      %v442 = vadd.f32 0.0, %v441
      %v443 = vpop.f32.mrb[0].mxu0
      %444 = vmatprep.mubr.bf16.mxu0 0
      %445 = vmatmul.mubr.bf16.gmra.mrb[0].mxu0 %v334
      %v446 = vpop.f32.mrb[0].mxu0
      %v447 = vadd.f32 0.0, %v446
      %v448 = vpop.f32.mrb[0].mxu0
      %v449 = vpop.f32.mrb[0].mxu0
      %v450 = vadd.f32 0.0, %v449
      %v451 = vpop.f32.mrb[0].mxu0
      %452 = vmatprep.mubr.bf16.mxu0 0
      %453 = vmatmul.mubr.bf16.gmra.mrb[0].mxu0 %v335
      %v454 = vpop.f32.mrb[0].mxu0
      %v455 = vadd.f32 0.0, %v454
      %v456 = vpop.f32.mrb[0].mxu0
      %v457 = vpop.f32.mrb[0].mxu0
      %v458 = vadd.f32 0.0, %v457
      %v459 = vpop.f32.mrb[0].mxu0
      %460 = vmatprep.mubr.bf16.mxu0 0
      %461 = vmatmul.mubr.bf16.gmra.mrb[0].mxu0 %v336
      %v462 = vpop.f32.mrb[0].mxu0
      %v463 = vadd.f32 0.0, %v462
      %v464 = vpop.f32.mrb[0].mxu0
      %v465 = vpop.f32.mrb[0].mxu0
      %v466 = vadd.f32 0.0, %v465
      %v467 = vpop.f32.mrb[0].mxu0
      %468 = vmatprep.mubr.bf16.mxu0 0
      %469 = vmatmul.mubr.bf16.gmra.mrb[0].mxu0 %v337
      %v470 = vpop.f32.mrb[0].mxu0
      %v471 = vadd.f32 0.0, %v470
      %v472 = vpop.f32.mrb[0].mxu0
      %v473 = vpop.f32.mrb[0].mxu0
      %v474 = vadd.f32 0.0, %v473
      %v475 = vpop.f32.mrb[0].mxu0
      %476 = vmatprep.mubr.bf16.mxu0 0
      %477 = vmatmul.mubr.bf16.gmra.mrb[0].mxu0 %v338
      %v478 = vpop.f32.mrb[0].mxu0
      %v479 = vadd.f32 0.0, %v478
      %v480 = vpop.f32.mrb[0].mxu0
      %v481 = vpop.f32.mrb[0].mxu0
      %v482 = vadd.f32 0.0, %v481
      %v483 = vpop.f32.mrb[0].mxu0
      %484 = vmatprep.mubr.bf16.mxu0 0
      %485 = vmatmul.mubr.bf16.gmra.mrb[0].mxu0 %v339
      %v486 = vpop.f32.mrb[0].mxu0
      %v487 = vadd.f32 0.0, %v486
      %v488 = vpop.f32.mrb[0].mxu0
      %v489 = vpop.f32.mrb[0].mxu0
      %v490 = vpop.f32.mrb[0].mxu0
      %491 = vdwg.mxu0
      %v508 = vunpack.c.l.b16 %v304
      %v509 = vunpack.c.l.b16 %v305
      %v510 = vunpack.c.l.b16 %v306
      %v511 = vunpack.c.l.b16 %v307
      %v512 = vunpack.c.l.b16 %v308
      %v513 = vunpack.c.l.b16 %v309
      %v514 = vunpack.c.l.b16 %v310
      %v515 = vunpack.c.l.b16 %v311
      %v516 = vunpack.c.l.b16 %v312
      %v517 = vunpack.c.l.b16 %v313
      %v518 = vunpack.c.l.b16 %v314
      %v519 = vunpack.c.l.b16 %v315
      %v520 = vunpack.c.l.b16 %v316
      %v521 = vunpack.c.l.b16 %v317
      %v522 = vunpack.c.l.b16 %v318
      %v523 = vunpack.c.l.b16 %v319
      %v524 = vpack.c.b16 %v509, %v508
      %v525 = vpack.c.b16 %v511, %v510
      %v526 = vpack.c.b16 %v513, %v512
      %v527 = vpack.c.b16 %v515, %v514
      %v528 = vpack.c.b16 %v517, %v516
      %v529 = vpack.c.b16 %v519, %v518
      %v530 = vpack.c.b16 %v521, %v520
      %v531 = vpack.c.b16 %v523, %v522
      %540 = vmatprep.subr.bf16.mxu0 0
      %541 = vmatpush1.bf16.msra.mxu0 %v524
      %542 = vmatprep.subr.bf16.mxu0 0
      %543 = vmatpush1.bf16.msra.mxu0 %v525
      %544 = vmatprep.subr.bf16.mxu0 0
      %545 = vmatpush1.bf16.msra.mxu0 %v526
      %546 = vmatprep.subr.bf16.mxu0 0
      %547 = vmatpush1.bf16.msra.mxu0 %v527
      %548 = vmatprep.subr.bf16.mxu0 0
      %549 = vmatpush1.bf16.msra.mxu0 %v528
      %550 = vmatprep.subr.bf16.mxu0 0
      %551 = vmatpush1.bf16.msra.mxu0 %v529
      %552 = vmatprep.subr.bf16.mxu0 0
      %553 = vmatpush1.bf16.msra.mxu0 %v530
      %554 = vmatprep.subr.bf16.mxu0 0
      %555 = vmatpush1.bf16.msra.mxu0 %v531
      %556 = vmatprep.subr.bf16.mxu0 0
      %557 = vmatpush1.bf16.msra.mxu0 0
      %558 = vmatprep.subr.bf16.mxu0 0
      %559 = vmatpush1.bf16.msra.mxu0 0
      %560 = vmatprep.subr.bf16.mxu0 0
      %561 = vmatpush1.bf16.msra.mxu0 0
      %562 = vmatprep.subr.bf16.mxu0 0
      %563 = vmatpush1.bf16.msra.mxu0 0
      %564 = vmatprep.subr.bf16.mxu0 0
      %565 = vmatpush1.bf16.msra.mxu0 0
      %566 = vmatprep.subr.bf16.mxu0 0
      %567 = vmatpush1.bf16.msra.mxu0 0
      %568 = vmatprep.subr.bf16.mxu0 0
      %569 = vmatpush1.bf16.msra.mxu0 0
      %570 = vmatprep.subr.bf16.mxu0 0
      %571 = vmatpush1.bf16.msra.mxu0 0
      %572 = vmatprep.mubr.bf16.mxu0 0
      %573 = vmatmul.mubr.bf16.gmra.mrb[0].mxu0 %v297
      %v574 = vpop.f32.mrb[0].mxu0
      %v575 = vadd.f32 %v439, %v574
      %v576 = vpop.f32.mrb[0].mxu0
      %v577 = vpop.f32.mrb[0].mxu0
      %v578 = vadd.f32 %v442, %v577
      %v579 = vpop.f32.mrb[0].mxu0
      %580 = vmatprep.mubr.bf16.mxu0 0
      %581 = vmatmul.mubr.bf16.gmra.mrb[0].mxu0 %v298
      %v582 = vpop.f32.mrb[0].mxu0
      %v583 = vadd.f32 %v447, %v582
      %v584 = vpop.f32.mrb[0].mxu0
      %v585 = vpop.f32.mrb[0].mxu0
      %v586 = vadd.f32 %v450, %v585
      %v587 = vpop.f32.mrb[0].mxu0
      %588 = vmatprep.mubr.bf16.mxu0 0
      %589 = vmatmul.mubr.bf16.gmra.mrb[0].mxu0 %v299
      %v590 = vpop.f32.mrb[0].mxu0
      %v591 = vadd.f32 %v455, %v590
      %v592 = vpop.f32.mrb[0].mxu0
      %v593 = vpop.f32.mrb[0].mxu0
      %v594 = vadd.f32 %v458, %v593
      %v595 = vpop.f32.mrb[0].mxu0
      %596 = vmatprep.mubr.bf16.mxu0 0
      %597 = vmatmul.mubr.bf16.gmra.mrb[0].mxu0 %v300
      %v598 = vpop.f32.mrb[0].mxu0
      %v599 = vadd.f32 %v463, %v598
      %v600 = vpop.f32.mrb[0].mxu0
      %v601 = vpop.f32.mrb[0].mxu0
      %v602 = vadd.f32 %v466, %v601
      %v603 = vpop.f32.mrb[0].mxu0
      %604 = vmatprep.mubr.bf16.mxu0 0
      %605 = vmatmul.mubr.bf16.gmra.mrb[0].mxu0 %v301
      %v606 = vpop.f32.mrb[0].mxu0
      %v607 = vadd.f32 %v471, %v606
      %v608 = vpop.f32.mrb[0].mxu0
      %v609 = vpop.f32.mrb[0].mxu0
      %v610 = vadd.f32 %v474, %v609
      %v611 = vpop.f32.mrb[0].mxu0
      %612 = vmatprep.mubr.bf16.mxu0 0
      %613 = vmatmul.mubr.bf16.gmra.mrb[0].mxu0 %v302
      %v614 = vpop.f32.mrb[0].mxu0
      %v615 = vadd.f32 %v479, %v614
      %v616 = vpop.f32.mrb[0].mxu0
      %v617 = vpop.f32.mrb[0].mxu0
      %v618 = vadd.f32 %v482, %v617
      %v619 = vpop.f32.mrb[0].mxu0
      %620 = vmatprep.mubr.bf16.mxu0 0
      %621 = vmatmul.mubr.bf16.gmra.mrb[0].mxu0 %v303
      %v622 = vpop.f32.mrb[0].mxu0
      %v623 = vadd.f32 %v487, %v622
      %v624 = vpop.f32.mrb[0].mxu0
      %v625 = vpop.f32.mrb[0].mxu0
      %v626 = vpop.f32.mrb[0].mxu0
      %627 = vdwg.mxu0
      %v628 = vld [vmem:[%s268 + $0x2] sm:$0xff]
      %v629 = vld [vmem:[%s268 + $0xa] sm:$0xff]
      %v630 = vld [vmem:[%s268 + $0x12] sm:$0xff]
      %v631 = vld [vmem:[%s268 + $0x1a] sm:$0xff]
      %v632 = vld [vmem:[%s268 + $0x22] sm:$0xff]
      %v633 = vld [vmem:[%s268 + $0x2a] sm:$0xff]
      %v634 = vld [vmem:[%s268 + $0x32] sm:$0xff]
      %v635 = vld [vmem:[%s268 + $0x3a] sm:$0xff]
      %v636 = vld [vmem:[%s268 + $0x42] sm:$0xff]
      %v637 = vld [vmem:[%s268 + $0x4a] sm:$0xff]
      %v638 = vld [vmem:[%s268 + $0x52] sm:$0xff]
      %v639 = vld [vmem:[%s268 + $0x5a] sm:$0xff]
      %v640 = vld [vmem:[%s268 + $0x62] sm:$0xf]
      %v641 = vpack.c.bf16 %v629, %v628
      %v642 = vpack.c.bf16 %v631, %v630
      %v643 = vpack.c.bf16 %v633, %v632
      %v644 = vpack.c.bf16 %v635, %v634
      %v645 = vpack.c.bf16 %v637, %v636
      %v646 = vpack.c.bf16 %v639, %v638
      %v647 = vpack.c.bf16 %v640, %v640
      %v648 = vld [vmem:[%s1 + $0x80] sm:$0xf]
      %v649 = vld [vmem:[%s1 + $0x84] sm:$0xf]
      %v650 = vld [vmem:[%s1 + $0x88] sm:$0xf]
      %v651 = vld [vmem:[%s1 + $0x8c] sm:$0xf]
      %v652 = vld [vmem:[%s1 + $0x90] sm:$0xf]
      %v653 = vld [vmem:[%s1 + $0x94] sm:$0xf]
      %v654 = vld [vmem:[%s1 + $0x98] sm:$0xf]
      %v655 = vld [vmem:[%s1 + $0x9c] sm:$0xf]
      %v656 = vld [vmem:[%s1 + $0xa0] sm:$0xf]
      %v657 = vld [vmem:[%s1 + $0xa4] sm:$0xf]
      %v658 = vld [vmem:[%s1 + $0xa8] sm:$0xf]
      %v659 = vld [vmem:[%s1 + $0xac] sm:$0xf]
      %v660 = vld [vmem:[%s1 + $0xb0] sm:$0xf]
      %v661 = vld [vmem:[%s1 + $0xb4] sm:$0xf]
      %v662 = vld [vmem:[%s1 + $0xb8] sm:$0xf]
      %v663 = vld [vmem:[%s1 + $0xbc] sm:$0xf]
      %v680 = vunpack.c.l.b16 %v648
      %v681 = vunpack.c.l.b16 %v649
      %v682 = vunpack.c.l.b16 %v650
      %v683 = vunpack.c.l.b16 %v651
      %v684 = vunpack.c.l.b16 %v652
      %v685 = vunpack.c.l.b16 %v653
      %v686 = vunpack.c.l.b16 %v654
      %v687 = vunpack.c.l.b16 %v655
      %v688 = vunpack.c.l.b16 %v656
      %v689 = vunpack.c.l.b16 %v657
      %v690 = vunpack.c.l.b16 %v658
      %v691 = vunpack.c.l.b16 %v659
      %v692 = vunpack.c.l.b16 %v660
      %v693 = vunpack.c.l.b16 %v661
      %v694 = vunpack.c.l.b16 %v662
      %v695 = vunpack.c.l.b16 %v663
      %v696 = vpack.c.b16 %v681, %v680
      %v697 = vpack.c.b16 %v683, %v682
      %v698 = vpack.c.b16 %v685, %v684
      %v699 = vpack.c.b16 %v687, %v686
      %v700 = vpack.c.b16 %v689, %v688
      %v701 = vpack.c.b16 %v691, %v690
      %v702 = vpack.c.b16 %v693, %v692
      %v703 = vpack.c.b16 %v695, %v694
      %712 = vmatprep.subr.bf16.mxu0 0
      %713 = vmatpush1.bf16.msra.mxu0 %v696
      %714 = vmatprep.subr.bf16.mxu0 0
      %715 = vmatpush1.bf16.msra.mxu0 %v697
      %716 = vmatprep.subr.bf16.mxu0 0
      %717 = vmatpush1.bf16.msra.mxu0 %v698
      %718 = vmatprep.subr.bf16.mxu0 0
      %719 = vmatpush1.bf16.msra.mxu0 %v699
      %720 = vmatprep.subr.bf16.mxu0 0
      %721 = vmatpush1.bf16.msra.mxu0 %v700
      %722 = vmatprep.subr.bf16.mxu0 0
      %723 = vmatpush1.bf16.msra.mxu0 %v701
      %724 = vmatprep.subr.bf16.mxu0 0
      %725 = vmatpush1.bf16.msra.mxu0 %v702
      %726 = vmatprep.subr.bf16.mxu0 0
      %727 = vmatpush1.bf16.msra.mxu0 %v703
      %728 = vmatprep.subr.bf16.mxu0 0
      %729 = vmatpush1.bf16.msra.mxu0 0
      %730 = vmatprep.subr.bf16.mxu0 0
      %731 = vmatpush1.bf16.msra.mxu0 0
      %732 = vmatprep.subr.bf16.mxu0 0
      %733 = vmatpush1.bf16.msra.mxu0 0
      %734 = vmatprep.subr.bf16.mxu0 0
      %735 = vmatpush1.bf16.msra.mxu0 0
      %736 = vmatprep.subr.bf16.mxu0 0
      %737 = vmatpush1.bf16.msra.mxu0 0
      %738 = vmatprep.subr.bf16.mxu0 0
      %739 = vmatpush1.bf16.msra.mxu0 0
      %740 = vmatprep.subr.bf16.mxu0 0
      %741 = vmatpush1.bf16.msra.mxu0 0
      %742 = vmatprep.subr.bf16.mxu0 0
      %743 = vmatpush1.bf16.msra.mxu0 0
      %744 = vmatprep.mubr.bf16.mxu0 0
      %745 = vmatmul.mubr.bf16.gmra.mrb[0].mxu0 %v641
      %v746 = vpop.f32.mrb[0].mxu0
      %v747 = vadd.f32 0.0, %v746
      %v748 = vpop.f32.mrb[0].mxu0
      %v749 = vpop.f32.mrb[0].mxu0
      %v750 = vadd.f32 0.0, %v749
      %v751 = vpop.f32.mrb[0].mxu0
      %752 = vmatprep.mubr.bf16.mxu0 0
      %753 = vmatmul.mubr.bf16.gmra.mrb[0].mxu0 %v642
      %v754 = vpop.f32.mrb[0].mxu0
      %v755 = vadd.f32 0.0, %v754
      %v756 = vpop.f32.mrb[0].mxu0
      %v757 = vpop.f32.mrb[0].mxu0
      %v758 = vadd.f32 0.0, %v757
      %v759 = vpop.f32.mrb[0].mxu0
      %760 = vmatprep.mubr.bf16.mxu0 0
      %761 = vmatmul.mubr.bf16.gmra.mrb[0].mxu0 %v643
      %v762 = vpop.f32.mrb[0].mxu0
      %v763 = vadd.f32 0.0, %v762
      %v764 = vpop.f32.mrb[0].mxu0
      %v765 = vpop.f32.mrb[0].mxu0
      %v766 = vadd.f32 0.0, %v765
      %v767 = vpop.f32.mrb[0].mxu0
      %768 = vmatprep.mubr.bf16.mxu0 0
      %769 = vmatmul.mubr.bf16.gmra.mrb[0].mxu0 %v644
      %v770 = vpop.f32.mrb[0].mxu0
      %v771 = vadd.f32 0.0, %v770
      %v772 = vpop.f32.mrb[0].mxu0
      %v773 = vpop.f32.mrb[0].mxu0
      %v774 = vadd.f32 0.0, %v773
      %v775 = vpop.f32.mrb[0].mxu0
      %776 = vmatprep.mubr.bf16.mxu0 0
      %777 = vmatmul.mubr.bf16.gmra.mrb[0].mxu0 %v645
      %v778 = vpop.f32.mrb[0].mxu0
      %v779 = vadd.f32 0.0, %v778
      %v780 = vpop.f32.mrb[0].mxu0
      %v781 = vpop.f32.mrb[0].mxu0
      %v782 = vadd.f32 0.0, %v781
      %v783 = vpop.f32.mrb[0].mxu0
      %784 = vmatprep.mubr.bf16.mxu0 0
      %785 = vmatmul.mubr.bf16.gmra.mrb[0].mxu0 %v646
      %v786 = vpop.f32.mrb[0].mxu0
      %v787 = vadd.f32 0.0, %v786
      %v788 = vpop.f32.mrb[0].mxu0
      %v789 = vpop.f32.mrb[0].mxu0
      %v790 = vadd.f32 0.0, %v789
      %v791 = vpop.f32.mrb[0].mxu0
      %792 = vmatprep.mubr.bf16.mxu0 0
      %793 = vmatmul.mubr.bf16.gmra.mrb[0].mxu0 %v647
      %v794 = vpop.f32.mrb[0].mxu0
      %v795 = vadd.f32 0.0, %v794
      %v796 = vpop.f32.mrb[0].mxu0
      %v797 = vpop.f32.mrb[0].mxu0
      %v798 = vpop.f32.mrb[0].mxu0
      %799 = vdwg.mxu0
      %v800 = vadd.f32 %v575, %v747
      %v801 = vadd.f32 %v578, %v750
      %v802 = vadd.f32 %v583, %v755
      %v803 = vadd.f32 %v586, %v758
      %v804 = vadd.f32 %v591, %v763
      %v805 = vadd.f32 %v594, %v766
      %v806 = vadd.f32 %v599, %v771
      %v807 = vadd.f32 %v602, %v774
      %v808 = vadd.f32 %v607, %v779
      %v809 = vadd.f32 %v610, %v782
      %v810 = vadd.f32 %v615, %v787
      %v811 = vadd.f32 %v618, %v790
      %v812 = vadd.f32 %v623, %v795
      %v813 = vld [vmem:[%s268 + $0xa] sm:$0xff]
      %v814 = vld [vmem:[%s268 + $0x12] sm:$0xff]
      %v815 = vld [vmem:[%s268 + $0x1a] sm:$0xff]
      %v816 = vld [vmem:[%s268 + $0x22] sm:$0xff]
      %v817 = vld [vmem:[%s268 + $0x2a] sm:$0xff]
      %v818 = vld [vmem:[%s268 + $0x32] sm:$0xff]
      %v819 = vld [vmem:[%s268 + $0x3a] sm:$0xff]
      %v820 = vld [vmem:[%s268 + $0x42] sm:$0xff]
      %v821 = vld [vmem:[%s268 + $0x4a] sm:$0xff]
      %v822 = vld [vmem:[%s268 + $0x52] sm:$0xff]
      %v823 = vld [vmem:[%s268 + $0x5a] sm:$0xff]
      %v824 = vld [vmem:[%s268 + $0x62] sm:$0xff]
      %v825 = vld [vmem:[%s268 + $0x6a] sm:$0xf]
      %v826 = vpack.c.bf16 %v814, %v813
      %v827 = vpack.c.bf16 %v816, %v815
      %v828 = vpack.c.bf16 %v818, %v817
      %v829 = vpack.c.bf16 %v820, %v819
      %v830 = vpack.c.bf16 %v822, %v821
      %v831 = vpack.c.bf16 %v824, %v823
      %v832 = vpack.c.bf16 %v825, %v825
      %v833 = vld [vmem:[%s1 + $0xc0] sm:$0xf]
      %v834 = vld [vmem:[%s1 + $0xc4] sm:$0xf]
      %v835 = vld [vmem:[%s1 + $0xc8] sm:$0xf]
      %v836 = vld [vmem:[%s1 + $0xcc] sm:$0xf]
      %v837 = vld [vmem:[%s1 + $0xd0] sm:$0xf]
      %v838 = vld [vmem:[%s1 + $0xd4] sm:$0xf]
      %v839 = vld [vmem:[%s1 + $0xd8] sm:$0xf]
      %v840 = vld [vmem:[%s1 + $0xdc] sm:$0xf]
      %v841 = vld [vmem:[%s1 + $0xe0] sm:$0xf]
      %v842 = vld [vmem:[%s1 + $0xe4] sm:$0xf]
      %v843 = vld [vmem:[%s1 + $0xe8] sm:$0xf]
      %v844 = vld [vmem:[%s1 + $0xec] sm:$0xf]
      %v845 = vld [vmem:[%s1 + $0xf0] sm:$0xf]
      %v846 = vld [vmem:[%s1 + $0xf4] sm:$0xf]
      %v847 = vld [vmem:[%s1 + $0xf8] sm:$0xf]
      %v848 = vld [vmem:[%s1 + $0xfc] sm:$0xf]
      %v865 = vunpack.c.l.b16 %v833
      %v866 = vunpack.c.l.b16 %v834
      %v867 = vunpack.c.l.b16 %v835
      %v868 = vunpack.c.l.b16 %v836
      %v869 = vunpack.c.l.b16 %v837
      %v870 = vunpack.c.l.b16 %v838
      %v871 = vunpack.c.l.b16 %v839
      %v872 = vunpack.c.l.b16 %v840
      %v873 = vunpack.c.l.b16 %v841
      %v874 = vunpack.c.l.b16 %v842
      %v875 = vunpack.c.l.b16 %v843
      %v876 = vunpack.c.l.b16 %v844
      %v877 = vunpack.c.l.b16 %v845
      %v878 = vunpack.c.l.b16 %v846
      %v879 = vunpack.c.l.b16 %v847
      %v880 = vunpack.c.l.b16 %v848
      %v881 = vpack.c.b16 %v866, %v865
      %v882 = vpack.c.b16 %v868, %v867
      %v883 = vpack.c.b16 %v870, %v869
      %v884 = vpack.c.b16 %v872, %v871
      %v885 = vpack.c.b16 %v874, %v873
      %v886 = vpack.c.b16 %v876, %v875
      %v887 = vpack.c.b16 %v878, %v877
      %v888 = vpack.c.b16 %v880, %v879
      %897 = vmatprep.subr.bf16.mxu0 0
      %898 = vmatpush1.bf16.msra.mxu0 %v881
      %899 = vmatprep.subr.bf16.mxu0 0
      %900 = vmatpush1.bf16.msra.mxu0 %v882
      %901 = vmatprep.subr.bf16.mxu0 0
      %902 = vmatpush1.bf16.msra.mxu0 %v883
      %903 = vmatprep.subr.bf16.mxu0 0
      %904 = vmatpush1.bf16.msra.mxu0 %v884
      %905 = vmatprep.subr.bf16.mxu0 0
      %906 = vmatpush1.bf16.msra.mxu0 %v885
      %907 = vmatprep.subr.bf16.mxu0 0
      %908 = vmatpush1.bf16.msra.mxu0 %v886
      %909 = vmatprep.subr.bf16.mxu0 0
      %910 = vmatpush1.bf16.msra.mxu0 %v887
      %911 = vmatprep.subr.bf16.mxu0 0
      %912 = vmatpush1.bf16.msra.mxu0 %v888
      %913 = vmatprep.subr.bf16.mxu0 0
      %914 = vmatpush1.bf16.msra.mxu0 0
      %915 = vmatprep.subr.bf16.mxu0 0
      %916 = vmatpush1.bf16.msra.mxu0 0
      %917 = vmatprep.subr.bf16.mxu0 0
      %918 = vmatpush1.bf16.msra.mxu0 0
      %919 = vmatprep.subr.bf16.mxu0 0
      %920 = vmatpush1.bf16.msra.mxu0 0
      %921 = vmatprep.subr.bf16.mxu0 0
      %922 = vmatpush1.bf16.msra.mxu0 0
      %923 = vmatprep.subr.bf16.mxu0 0
      %924 = vmatpush1.bf16.msra.mxu0 0
      %925 = vmatprep.subr.bf16.mxu0 0
      %926 = vmatpush1.bf16.msra.mxu0 0
      %927 = vmatprep.subr.bf16.mxu0 0
      %928 = vmatpush1.bf16.msra.mxu0 0
      %929 = vmatprep.mubr.bf16.mxu0 0
      %930 = vmatmul.mubr.bf16.gmra.mrb[0].mxu0 %v826
      %v931 = vpop.f32.mrb[0].mxu0
      %v932 = vadd.f32 0.0, %v931
      %v933 = vpop.f32.mrb[0].mxu0
      %v934 = vpop.f32.mrb[0].mxu0
      %v935 = vadd.f32 0.0, %v934
      %v936 = vpop.f32.mrb[0].mxu0
      %937 = vmatprep.mubr.bf16.mxu0 0
      %938 = vmatmul.mubr.bf16.gmra.mrb[0].mxu0 %v827
      %v939 = vpop.f32.mrb[0].mxu0
      %v940 = vadd.f32 0.0, %v939
      %v941 = vpop.f32.mrb[0].mxu0
      %v942 = vpop.f32.mrb[0].mxu0
      %v943 = vadd.f32 0.0, %v942
      %v944 = vpop.f32.mrb[0].mxu0
      %945 = vmatprep.mubr.bf16.mxu0 0
      %946 = vmatmul.mubr.bf16.gmra.mrb[0].mxu0 %v828
      %v947 = vpop.f32.mrb[0].mxu0
      %v948 = vadd.f32 0.0, %v947
      %v949 = vpop.f32.mrb[0].mxu0
      %v950 = vpop.f32.mrb[0].mxu0
      %v951 = vadd.f32 0.0, %v950
      %v952 = vpop.f32.mrb[0].mxu0
      %953 = vmatprep.mubr.bf16.mxu0 0
      %954 = vmatmul.mubr.bf16.gmra.mrb[0].mxu0 %v829
      %v955 = vpop.f32.mrb[0].mxu0
      %v956 = vadd.f32 0.0, %v955
      %v957 = vpop.f32.mrb[0].mxu0
      %v958 = vpop.f32.mrb[0].mxu0
      %v959 = vadd.f32 0.0, %v958
      %v960 = vpop.f32.mrb[0].mxu0
      %961 = vmatprep.mubr.bf16.mxu0 0
      %962 = vmatmul.mubr.bf16.gmra.mrb[0].mxu0 %v830
      %v963 = vpop.f32.mrb[0].mxu0
      %v964 = vadd.f32 0.0, %v963
      %v965 = vpop.f32.mrb[0].mxu0
      %v966 = vpop.f32.mrb[0].mxu0
      %v967 = vadd.f32 0.0, %v966
      %v968 = vpop.f32.mrb[0].mxu0
      %969 = vmatprep.mubr.bf16.mxu0 0
      %970 = vmatmul.mubr.bf16.gmra.mrb[0].mxu0 %v831
      %v971 = vpop.f32.mrb[0].mxu0
      %v972 = vadd.f32 0.0, %v971
      %v973 = vpop.f32.mrb[0].mxu0
      %v974 = vpop.f32.mrb[0].mxu0
      %v975 = vadd.f32 0.0, %v974
      %v976 = vpop.f32.mrb[0].mxu0
      %977 = vmatprep.mubr.bf16.mxu0 0
      %978 = vmatmul.mubr.bf16.gmra.mrb[0].mxu0 %v832
      %v979 = vpop.f32.mrb[0].mxu0
      %v980 = vadd.f32 0.0, %v979
      %v981 = vpop.f32.mrb[0].mxu0
      %v982 = vpop.f32.mrb[0].mxu0
      %v983 = vpop.f32.mrb[0].mxu0
      %984 = vdwg.mxu0
      %v985 = vadd.f32 %v800, %v932
      %v986 = vadd.f32 %v801, %v935
      %v987 = vadd.f32 %v802, %v940
      %v988 = vadd.f32 %v803, %v943
      %v989 = vadd.f32 %v804, %v948
      %v990 = vadd.f32 %v805, %v951
      %v991 = vadd.f32 %v806, %v956
      %v992 = vadd.f32 %v807, %v959
      %v993 = vadd.f32 %v808, %v964
      %v994 = vadd.f32 %v809, %v967
      %v995 = vadd.f32 %v810, %v972
      %v996 = vadd.f32 %v811, %v975
      %v997 = vadd.f32 %v812, %v980
      %v998 = vld [vmem:[%s268 + $0xb] sm:$0xff]
      %v999 = vld [vmem:[%s268 + $0x13] sm:$0xff]
      %v1000 = vld [vmem:[%s268 + $0x1b] sm:$0xff]
      %v1001 = vld [vmem:[%s268 + $0x23] sm:$0xff]
      %v1002 = vld [vmem:[%s268 + $0x2b] sm:$0xff]
      %v1003 = vld [vmem:[%s268 + $0x33] sm:$0xff]
      %v1004 = vld [vmem:[%s268 + $0x3b] sm:$0xff]
      %v1005 = vld [vmem:[%s268 + $0x43] sm:$0xff]
      %v1006 = vld [vmem:[%s268 + $0x4b] sm:$0xff]
      %v1007 = vld [vmem:[%s268 + $0x53] sm:$0xff]
      %v1008 = vld [vmem:[%s268 + $0x5b] sm:$0xff]
      %v1009 = vld [vmem:[%s268 + $0x63] sm:$0xff]
      %v1010 = vld [vmem:[%s268 + $0x6b] sm:$0xf]
      %v1011 = vpack.c.bf16 %v999, %v998
      %v1012 = vpack.c.bf16 %v1001, %v1000
      %v1013 = vpack.c.bf16 %v1003, %v1002
      %v1014 = vpack.c.bf16 %v1005, %v1004
      %v1015 = vpack.c.bf16 %v1007, %v1006
      %v1016 = vpack.c.bf16 %v1009, %v1008
      %v1017 = vpack.c.bf16 %v1010, %v1010
      %v1018 = vld [vmem:[%s1 + $0x100] sm:$0xf]
      %v1019 = vld [vmem:[%s1 + $0x104] sm:$0xf]
      %v1020 = vld [vmem:[%s1 + $0x108] sm:$0xf]
      %v1021 = vld [vmem:[%s1 + $0x10c] sm:$0xf]
      %v1022 = vld [vmem:[%s1 + $0x110] sm:$0xf]
      %v1023 = vld [vmem:[%s1 + $0x114] sm:$0xf]
      %v1024 = vld [vmem:[%s1 + $0x118] sm:$0xf]
      %v1025 = vld [vmem:[%s1 + $0x11c] sm:$0xf]
      %v1026 = vld [vmem:[%s1 + $0x120] sm:$0xf]
      %v1027 = vld [vmem:[%s1 + $0x124] sm:$0xf]
      %v1028 = vld [vmem:[%s1 + $0x128] sm:$0xf]
      %v1029 = vld [vmem:[%s1 + $0x12c] sm:$0xf]
      %v1030 = vld [vmem:[%s1 + $0x130] sm:$0xf]
      %v1031 = vld [vmem:[%s1 + $0x134] sm:$0xf]
      %v1032 = vld [vmem:[%s1 + $0x138] sm:$0xf]
      %v1033 = vld [vmem:[%s1 + $0x13c] sm:$0xf]
      %v1050 = vunpack.c.l.b16 %v1018
      %v1051 = vunpack.c.l.b16 %v1019
      %v1052 = vunpack.c.l.b16 %v1020
      %v1053 = vunpack.c.l.b16 %v1021
      %v1054 = vunpack.c.l.b16 %v1022
      %v1055 = vunpack.c.l.b16 %v1023
      %v1056 = vunpack.c.l.b16 %v1024
      %v1057 = vunpack.c.l.b16 %v1025
      %v1058 = vunpack.c.l.b16 %v1026
      %v1059 = vunpack.c.l.b16 %v1027
      %v1060 = vunpack.c.l.b16 %v1028
      %v1061 = vunpack.c.l.b16 %v1029
      %v1062 = vunpack.c.l.b16 %v1030
      %v1063 = vunpack.c.l.b16 %v1031
      %v1064 = vunpack.c.l.b16 %v1032
      %v1065 = vunpack.c.l.b16 %v1033
      %v1066 = vpack.c.b16 %v1051, %v1050
      %v1067 = vpack.c.b16 %v1053, %v1052
      %v1068 = vpack.c.b16 %v1055, %v1054
      %v1069 = vpack.c.b16 %v1057, %v1056
      %v1070 = vpack.c.b16 %v1059, %v1058
      %v1071 = vpack.c.b16 %v1061, %v1060
      %v1072 = vpack.c.b16 %v1063, %v1062
      %v1073 = vpack.c.b16 %v1065, %v1064
      %1082 = vmatprep.subr.bf16.mxu0 0
      %1083 = vmatpush1.bf16.msra.mxu0 %v1066
      %1084 = vmatprep.subr.bf16.mxu0 0
      %1085 = vmatpush1.bf16.msra.mxu0 %v1067
      %1086 = vmatprep.subr.bf16.mxu0 0
      %1087 = vmatpush1.bf16.msra.mxu0 %v1068
      %1088 = vmatprep.subr.bf16.mxu0 0
      %1089 = vmatpush1.bf16.msra.mxu0 %v1069
      %1090 = vmatprep.subr.bf16.mxu0 0
      %1091 = vmatpush1.bf16.msra.mxu0 %v1070
      %1092 = vmatprep.subr.bf16.mxu0 0
      %1093 = vmatpush1.bf16.msra.mxu0 %v1071
      %1094 = vmatprep.subr.bf16.mxu0 0
      %1095 = vmatpush1.bf16.msra.mxu0 %v1072
      %1096 = vmatprep.subr.bf16.mxu0 0
      %1097 = vmatpush1.bf16.msra.mxu0 %v1073
      %1098 = vmatprep.subr.bf16.mxu0 0
      %1099 = vmatpush1.bf16.msra.mxu0 0
      %1100 = vmatprep.subr.bf16.mxu0 0
      %1101 = vmatpush1.bf16.msra.mxu0 0
      %1102 = vmatprep.subr.bf16.mxu0 0
      %1103 = vmatpush1.bf16.msra.mxu0 0
      %1104 = vmatprep.subr.bf16.mxu0 0
      %1105 = vmatpush1.bf16.msra.mxu0 0
      %1106 = vmatprep.subr.bf16.mxu0 0
      %1107 = vmatpush1.bf16.msra.mxu0 0
      %1108 = vmatprep.subr.bf16.mxu0 0
      %1109 = vmatpush1.bf16.msra.mxu0 0
      %1110 = vmatprep.subr.bf16.mxu0 0
      %1111 = vmatpush1.bf16.msra.mxu0 0
      %1112 = vmatprep.subr.bf16.mxu0 0
      %1113 = vmatpush1.bf16.msra.mxu0 0
      %1114 = vmatprep.mubr.bf16.mxu0 0
      %1115 = vmatmul.mubr.bf16.gmra.mrb[0].mxu0 %v1011
      %v1116 = vpop.f32.mrb[0].mxu0
      %v1117 = vadd.f32 0.0, %v1116
      %v1118 = vpop.f32.mrb[0].mxu0
      %v1119 = vpop.f32.mrb[0].mxu0
      %v1120 = vadd.f32 0.0, %v1119
      %v1121 = vpop.f32.mrb[0].mxu0
      %1122 = vmatprep.mubr.bf16.mxu0 0
      %1123 = vmatmul.mubr.bf16.gmra.mrb[0].mxu0 %v1012
      %v1124 = vpop.f32.mrb[0].mxu0
      %v1125 = vadd.f32 0.0, %v1124
      %v1126 = vpop.f32.mrb[0].mxu0
      %v1127 = vpop.f32.mrb[0].mxu0
      %v1128 = vadd.f32 0.0, %v1127
      %v1129 = vpop.f32.mrb[0].mxu0
      %1130 = vmatprep.mubr.bf16.mxu0 0
      %1131 = vmatmul.mubr.bf16.gmra.mrb[0].mxu0 %v1013
      %v1132 = vpop.f32.mrb[0].mxu0
      %v1133 = vadd.f32 0.0, %v1132
      %v1134 = vpop.f32.mrb[0].mxu0
      %v1135 = vpop.f32.mrb[0].mxu0
      %v1136 = vadd.f32 0.0, %v1135
      %v1137 = vpop.f32.mrb[0].mxu0
      %1138 = vmatprep.mubr.bf16.mxu0 0
      %1139 = vmatmul.mubr.bf16.gmra.mrb[0].mxu0 %v1014
      %v1140 = vpop.f32.mrb[0].mxu0
      %v1141 = vadd.f32 0.0, %v1140
      %v1142 = vpop.f32.mrb[0].mxu0
      %v1143 = vpop.f32.mrb[0].mxu0
      %v1144 = vadd.f32 0.0, %v1143
      %v1145 = vpop.f32.mrb[0].mxu0
      %1146 = vmatprep.mubr.bf16.mxu0 0
      %1147 = vmatmul.mubr.bf16.gmra.mrb[0].mxu0 %v1015
      %v1148 = vpop.f32.mrb[0].mxu0
      %v1149 = vadd.f32 0.0, %v1148
      %v1150 = vpop.f32.mrb[0].mxu0
      %v1151 = vpop.f32.mrb[0].mxu0
      %v1152 = vadd.f32 0.0, %v1151
      %v1153 = vpop.f32.mrb[0].mxu0
      %1154 = vmatprep.mubr.bf16.mxu0 0
      %1155 = vmatmul.mubr.bf16.gmra.mrb[0].mxu0 %v1016
      %v1156 = vpop.f32.mrb[0].mxu0
      %v1157 = vadd.f32 0.0, %v1156
      %v1158 = vpop.f32.mrb[0].mxu0
      %v1159 = vpop.f32.mrb[0].mxu0
      %v1160 = vadd.f32 0.0, %v1159
      %v1161 = vpop.f32.mrb[0].mxu0
      %1162 = vmatprep.mubr.bf16.mxu0 0
      %1163 = vmatmul.mubr.bf16.gmra.mrb[0].mxu0 %v1017
      %v1164 = vpop.f32.mrb[0].mxu0
      %v1165 = vadd.f32 0.0, %v1164
      %v1166 = vpop.f32.mrb[0].mxu0
      %v1167 = vpop.f32.mrb[0].mxu0
      %v1168 = vpop.f32.mrb[0].mxu0
      %1169 = vdwg.mxu0
      %v1170 = vadd.f32 %v985, %v1117
      %v1171 = vadd.f32 %v986, %v1120
      %v1172 = vadd.f32 %v987, %v1125
      %v1173 = vadd.f32 %v988, %v1128
      %v1174 = vadd.f32 %v989, %v1133
      %v1175 = vadd.f32 %v990, %v1136
      %v1176 = vadd.f32 %v991, %v1141
      %v1177 = vadd.f32 %v992, %v1144
      %v1178 = vadd.f32 %v993, %v1149
      %v1179 = vadd.f32 %v994, %v1152
      %v1180 = vadd.f32 %v995, %v1157
      %v1181 = vadd.f32 %v996, %v1160
      %v1182 = vadd.f32 %v997, %v1165
      %v1183 = vld [vmem:[%s268 + $0xc] sm:$0xff]
      %v1184 = vld [vmem:[%s268 + $0x14] sm:$0xff]
      %v1185 = vld [vmem:[%s268 + $0x1c] sm:$0xff]
      %v1186 = vld [vmem:[%s268 + $0x24] sm:$0xff]
      %v1187 = vld [vmem:[%s268 + $0x2c] sm:$0xff]
      %v1188 = vld [vmem:[%s268 + $0x34] sm:$0xff]
      %v1189 = vld [vmem:[%s268 + $0x3c] sm:$0xff]
      %v1190 = vld [vmem:[%s268 + $0x44] sm:$0xff]
      %v1191 = vld [vmem:[%s268 + $0x4c] sm:$0xff]
      %v1192 = vld [vmem:[%s268 + $0x54] sm:$0xff]
      %v1193 = vld [vmem:[%s268 + $0x5c] sm:$0xff]
      %v1194 = vld [vmem:[%s268 + $0x64] sm:$0xff]
      %v1195 = vld [vmem:[%s268 + $0x6c] sm:$0xf]
      %v1196 = vpack.c.bf16 %v1184, %v1183
      %v1197 = vpack.c.bf16 %v1186, %v1185
      %v1198 = vpack.c.bf16 %v1188, %v1187
      %v1199 = vpack.c.bf16 %v1190, %v1189
      %v1200 = vpack.c.bf16 %v1192, %v1191
      %v1201 = vpack.c.bf16 %v1194, %v1193
      %v1202 = vpack.c.bf16 %v1195, %v1195
      %v1203 = vld [vmem:[%s1 + $0x140] sm:$0xf]
      %v1204 = vld [vmem:[%s1 + $0x144] sm:$0xf]
      %v1205 = vld [vmem:[%s1 + $0x148] sm:$0xf]
      %v1206 = vld [vmem:[%s1 + $0x14c] sm:$0xf]
      %v1207 = vld [vmem:[%s1 + $0x150] sm:$0xf]
      %v1208 = vld [vmem:[%s1 + $0x154] sm:$0xf]
      %v1209 = vld [vmem:[%s1 + $0x158] sm:$0xf]
      %v1210 = vld [vmem:[%s1 + $0x15c] sm:$0xf]
      %v1211 = vld [vmem:[%s1 + $0x160] sm:$0xf]
      %v1212 = vld [vmem:[%s1 + $0x164] sm:$0xf]
      %v1213 = vld [vmem:[%s1 + $0x168] sm:$0xf]
      %v1214 = vld [vmem:[%s1 + $0x16c] sm:$0xf]
      %v1215 = vld [vmem:[%s1 + $0x170] sm:$0xf]
      %v1216 = vld [vmem:[%s1 + $0x174] sm:$0xf]
      %v1217 = vld [vmem:[%s1 + $0x178] sm:$0xf]
      %v1218 = vld [vmem:[%s1 + $0x17c] sm:$0xf]
      %v1235 = vunpack.c.l.b16 %v1203
      %v1236 = vunpack.c.l.b16 %v1204
      %v1237 = vunpack.c.l.b16 %v1205
      %v1238 = vunpack.c.l.b16 %v1206
      %v1239 = vunpack.c.l.b16 %v1207
      %v1240 = vunpack.c.l.b16 %v1208
      %v1241 = vunpack.c.l.b16 %v1209
      %v1242 = vunpack.c.l.b16 %v1210
      %v1243 = vunpack.c.l.b16 %v1211
      %v1244 = vunpack.c.l.b16 %v1212
      %v1245 = vunpack.c.l.b16 %v1213
      %v1246 = vunpack.c.l.b16 %v1214
      %v1247 = vunpack.c.l.b16 %v1215
      %v1248 = vunpack.c.l.b16 %v1216
      %v1249 = vunpack.c.l.b16 %v1217
      %v1250 = vunpack.c.l.b16 %v1218
      %v1251 = vpack.c.b16 %v1236, %v1235
      %v1252 = vpack.c.b16 %v1238, %v1237
      %v1253 = vpack.c.b16 %v1240, %v1239
      %v1254 = vpack.c.b16 %v1242, %v1241
      %v1255 = vpack.c.b16 %v1244, %v1243
      %v1256 = vpack.c.b16 %v1246, %v1245
      %v1257 = vpack.c.b16 %v1248, %v1247
      %v1258 = vpack.c.b16 %v1250, %v1249
      %1267 = vmatprep.subr.bf16.mxu0 0
      %1268 = vmatpush1.bf16.msra.mxu0 %v1251
      %1269 = vmatprep.subr.bf16.mxu0 0
      %1270 = vmatpush1.bf16.msra.mxu0 %v1252
      %1271 = vmatprep.subr.bf16.mxu0 0
      %1272 = vmatpush1.bf16.msra.mxu0 %v1253
      %1273 = vmatprep.subr.bf16.mxu0 0
      %1274 = vmatpush1.bf16.msra.mxu0 %v1254
      %1275 = vmatprep.subr.bf16.mxu0 0
      %1276 = vmatpush1.bf16.msra.mxu0 %v1255
      %1277 = vmatprep.subr.bf16.mxu0 0
      %1278 = vmatpush1.bf16.msra.mxu0 %v1256
      %1279 = vmatprep.subr.bf16.mxu0 0
      %1280 = vmatpush1.bf16.msra.mxu0 %v1257
      %1281 = vmatprep.subr.bf16.mxu0 0
      %1282 = vmatpush1.bf16.msra.mxu0 %v1258
      %1283 = vmatprep.subr.bf16.mxu0 0
      %1284 = vmatpush1.bf16.msra.mxu0 0
      %1285 = vmatprep.subr.bf16.mxu0 0
      %1286 = vmatpush1.bf16.msra.mxu0 0
      %1287 = vmatprep.subr.bf16.mxu0 0
      %1288 = vmatpush1.bf16.msra.mxu0 0
      %1289 = vmatprep.subr.bf16.mxu0 0
      %1290 = vmatpush1.bf16.msra.mxu0 0
      %1291 = vmatprep.subr.bf16.mxu0 0
      %1292 = vmatpush1.bf16.msra.mxu0 0
      %1293 = vmatprep.subr.bf16.mxu0 0
      %1294 = vmatpush1.bf16.msra.mxu0 0
      %1295 = vmatprep.subr.bf16.mxu0 0
      %1296 = vmatpush1.bf16.msra.mxu0 0
      %1297 = vmatprep.subr.bf16.mxu0 0
      %1298 = vmatpush1.bf16.msra.mxu0 0
      %1299 = vmatprep.mubr.bf16.mxu0 0
      %1300 = vmatmul.mubr.bf16.gmra.mrb[0].mxu0 %v1196
      %v1301 = vpop.f32.mrb[0].mxu0
      %v1302 = vadd.f32 0.0, %v1301
      %v1303 = vpop.f32.mrb[0].mxu0
      %v1304 = vpop.f32.mrb[0].mxu0
      %v1305 = vadd.f32 0.0, %v1304
      %v1306 = vpop.f32.mrb[0].mxu0
      %1307 = vmatprep.mubr.bf16.mxu0 0
      %1308 = vmatmul.mubr.bf16.gmra.mrb[0].mxu0 %v1197
      %v1309 = vpop.f32.mrb[0].mxu0
      %v1310 = vadd.f32 0.0, %v1309
      %v1311 = vpop.f32.mrb[0].mxu0
      %v1312 = vpop.f32.mrb[0].mxu0
      %v1313 = vadd.f32 0.0, %v1312
      %v1314 = vpop.f32.mrb[0].mxu0
      %1315 = vmatprep.mubr.bf16.mxu0 0
      %1316 = vmatmul.mubr.bf16.gmra.mrb[0].mxu0 %v1198
      %v1317 = vpop.f32.mrb[0].mxu0
      %v1318 = vadd.f32 0.0, %v1317
      %v1319 = vpop.f32.mrb[0].mxu0
      %v1320 = vpop.f32.mrb[0].mxu0
      %v1321 = vadd.f32 0.0, %v1320
      %v1322 = vpop.f32.mrb[0].mxu0
      %1323 = vmatprep.mubr.bf16.mxu0 0
      %1324 = vmatmul.mubr.bf16.gmra.mrb[0].mxu0 %v1199
      %v1325 = vpop.f32.mrb[0].mxu0
      %v1326 = vadd.f32 0.0, %v1325
      %v1327 = vpop.f32.mrb[0].mxu0
      %v1328 = vpop.f32.mrb[0].mxu0
      %v1329 = vadd.f32 0.0, %v1328
      %v1330 = vpop.f32.mrb[0].mxu0
      %1331 = vmatprep.mubr.bf16.mxu0 0
      %1332 = vmatmul.mubr.bf16.gmra.mrb[0].mxu0 %v1200
      %v1333 = vpop.f32.mrb[0].mxu0
      %v1334 = vadd.f32 0.0, %v1333
      %v1335 = vpop.f32.mrb[0].mxu0
      %v1336 = vpop.f32.mrb[0].mxu0
      %v1337 = vadd.f32 0.0, %v1336
      %v1338 = vpop.f32.mrb[0].mxu0
      %1339 = vmatprep.mubr.bf16.mxu0 0
      %1340 = vmatmul.mubr.bf16.gmra.mrb[0].mxu0 %v1201
      %v1341 = vpop.f32.mrb[0].mxu0
      %v1342 = vadd.f32 0.0, %v1341
      %v1343 = vpop.f32.mrb[0].mxu0
      %v1344 = vpop.f32.mrb[0].mxu0
      %v1345 = vadd.f32 0.0, %v1344
      %v1346 = vpop.f32.mrb[0].mxu0
      %1347 = vmatprep.mubr.bf16.mxu0 0
      %1348 = vmatmul.mubr.bf16.gmra.mrb[0].mxu0 %v1202
      %v1349 = vpop.f32.mrb[0].mxu0
      %v1350 = vadd.f32 0.0, %v1349
      %v1351 = vpop.f32.mrb[0].mxu0
      %v1352 = vpop.f32.mrb[0].mxu0
      %v1353 = vpop.f32.mrb[0].mxu0
      %1354 = vdwg.mxu0
      %v1355 = vadd.f32 %v1170, %v1302
      %v1356 = vadd.f32 %v1171, %v1305
      %v1357 = vadd.f32 %v1172, %v1310
      %v1358 = vadd.f32 %v1173, %v1313
      %v1359 = vadd.f32 %v1174, %v1318
      %v1360 = vadd.f32 %v1175, %v1321
      %v1361 = vadd.f32 %v1176, %v1326
      %v1362 = vadd.f32 %v1177, %v1329
      %v1363 = vadd.f32 %v1178, %v1334
      %v1364 = vadd.f32 %v1179, %v1337
      %v1365 = vadd.f32 %v1180, %v1342
      %v1366 = vadd.f32 %v1181, %v1345
      %v1367 = vadd.f32 %v1182, %v1350
      %v1368 = vld [vmem:[%s268 + $0x14] sm:$0xff]
      %v1369 = vld [vmem:[%s268 + $0x1c] sm:$0xff]
      %v1370 = vld [vmem:[%s268 + $0x24] sm:$0xff]
      %v1371 = vld [vmem:[%s268 + $0x2c] sm:$0xff]
      %v1372 = vld [vmem:[%s268 + $0x34] sm:$0xff]
      %v1373 = vld [vmem:[%s268 + $0x3c] sm:$0xff]
      %v1374 = vld [vmem:[%s268 + $0x44] sm:$0xff]
      %v1375 = vld [vmem:[%s268 + $0x4c] sm:$0xff]
      %v1376 = vld [vmem:[%s268 + $0x54] sm:$0xff]
      %v1377 = vld [vmem:[%s268 + $0x5c] sm:$0xff]
      %v1378 = vld [vmem:[%s268 + $0x64] sm:$0xff]
      %v1379 = vld [vmem:[%s268 + $0x6c] sm:$0xff]
      %v1380 = vld [vmem:[%s268 + $0x74] sm:$0xf]
      %v1381 = vpack.c.bf16 %v1369, %v1368
      %v1382 = vpack.c.bf16 %v1371, %v1370
      %v1383 = vpack.c.bf16 %v1373, %v1372
      %v1384 = vpack.c.bf16 %v1375, %v1374
      %v1385 = vpack.c.bf16 %v1377, %v1376
      %v1386 = vpack.c.bf16 %v1379, %v1378
      %v1387 = vpack.c.bf16 %v1380, %v1380
      %v1388 = vld [vmem:[%s1 + $0x180] sm:$0xf]
      %v1389 = vld [vmem:[%s1 + $0x184] sm:$0xf]
      %v1390 = vld [vmem:[%s1 + $0x188] sm:$0xf]
      %v1391 = vld [vmem:[%s1 + $0x18c] sm:$0xf]
      %v1392 = vld [vmem:[%s1 + $0x190] sm:$0xf]
      %v1393 = vld [vmem:[%s1 + $0x194] sm:$0xf]
      %v1394 = vld [vmem:[%s1 + $0x198] sm:$0xf]
      %v1395 = vld [vmem:[%s1 + $0x19c] sm:$0xf]
      %v1396 = vld [vmem:[%s1 + $0x1a0] sm:$0xf]
      %v1397 = vld [vmem:[%s1 + $0x1a4] sm:$0xf]
      %v1398 = vld [vmem:[%s1 + $0x1a8] sm:$0xf]
      %v1399 = vld [vmem:[%s1 + $0x1ac] sm:$0xf]
      %v1400 = vld [vmem:[%s1 + $0x1b0] sm:$0xf]
      %v1401 = vld [vmem:[%s1 + $0x1b4] sm:$0xf]
      %v1402 = vld [vmem:[%s1 + $0x1b8] sm:$0xf]
      %v1403 = vld [vmem:[%s1 + $0x1bc] sm:$0xf]
      %v1420 = vunpack.c.l.b16 %v1388
      %v1421 = vunpack.c.l.b16 %v1389
      %v1422 = vunpack.c.l.b16 %v1390
      %v1423 = vunpack.c.l.b16 %v1391
      %v1424 = vunpack.c.l.b16 %v1392
      %v1425 = vunpack.c.l.b16 %v1393
      %v1426 = vunpack.c.l.b16 %v1394
      %v1427 = vunpack.c.l.b16 %v1395
      %v1428 = vunpack.c.l.b16 %v1396
      %v1429 = vunpack.c.l.b16 %v1397
      %v1430 = vunpack.c.l.b16 %v1398
      %v1431 = vunpack.c.l.b16 %v1399
      %v1432 = vunpack.c.l.b16 %v1400
      %v1433 = vunpack.c.l.b16 %v1401
      %v1434 = vunpack.c.l.b16 %v1402
      %v1435 = vunpack.c.l.b16 %v1403
      %v1436 = vpack.c.b16 %v1421, %v1420
      %v1437 = vpack.c.b16 %v1423, %v1422
      %v1438 = vpack.c.b16 %v1425, %v1424
      %v1439 = vpack.c.b16 %v1427, %v1426
      %v1440 = vpack.c.b16 %v1429, %v1428
      %v1441 = vpack.c.b16 %v1431, %v1430
      %v1442 = vpack.c.b16 %v1433, %v1432
      %v1443 = vpack.c.b16 %v1435, %v1434
      %1452 = vmatprep.subr.bf16.mxu0 0
      %1453 = vmatpush1.bf16.msra.mxu0 %v1436
      %1454 = vmatprep.subr.bf16.mxu0 0
      %1455 = vmatpush1.bf16.msra.mxu0 %v1437
      %1456 = vmatprep.subr.bf16.mxu0 0
      %1457 = vmatpush1.bf16.msra.mxu0 %v1438
      %1458 = vmatprep.subr.bf16.mxu0 0
      %1459 = vmatpush1.bf16.msra.mxu0 %v1439
      %1460 = vmatprep.subr.bf16.mxu0 0
      %1461 = vmatpush1.bf16.msra.mxu0 %v1440
      %1462 = vmatprep.subr.bf16.mxu0 0
      %1463 = vmatpush1.bf16.msra.mxu0 %v1441
      %1464 = vmatprep.subr.bf16.mxu0 0
      %1465 = vmatpush1.bf16.msra.mxu0 %v1442
      %1466 = vmatprep.subr.bf16.mxu0 0
      %1467 = vmatpush1.bf16.msra.mxu0 %v1443
      %1468 = vmatprep.subr.bf16.mxu0 0
      %1469 = vmatpush1.bf16.msra.mxu0 0
      %1470 = vmatprep.subr.bf16.mxu0 0
      %1471 = vmatpush1.bf16.msra.mxu0 0
      %1472 = vmatprep.subr.bf16.mxu0 0
      %1473 = vmatpush1.bf16.msra.mxu0 0
      %1474 = vmatprep.subr.bf16.mxu0 0
      %1475 = vmatpush1.bf16.msra.mxu0 0
      %1476 = vmatprep.subr.bf16.mxu0 0
      %1477 = vmatpush1.bf16.msra.mxu0 0
      %1478 = vmatprep.subr.bf16.mxu0 0
      %1479 = vmatpush1.bf16.msra.mxu0 0
      %1480 = vmatprep.subr.bf16.mxu0 0
      %1481 = vmatpush1.bf16.msra.mxu0 0
      %1482 = vmatprep.subr.bf16.mxu0 0
      %1483 = vmatpush1.bf16.msra.mxu0 0
      %1484 = vmatprep.mubr.bf16.mxu0 0
      %1485 = vmatmul.mubr.bf16.gmra.mrb[0].mxu0 %v1381
      %v1486 = vpop.f32.mrb[0].mxu0
      %v1487 = vadd.f32 0.0, %v1486
      %v1488 = vpop.f32.mrb[0].mxu0
      %v1489 = vpop.f32.mrb[0].mxu0
      %v1490 = vadd.f32 0.0, %v1489
      %v1491 = vpop.f32.mrb[0].mxu0
      %1492 = vmatprep.mubr.bf16.mxu0 0
      %1493 = vmatmul.mubr.bf16.gmra.mrb[0].mxu0 %v1382
      %v1494 = vpop.f32.mrb[0].mxu0
      %v1495 = vadd.f32 0.0, %v1494
      %v1496 = vpop.f32.mrb[0].mxu0
      %v1497 = vpop.f32.mrb[0].mxu0
      %v1498 = vadd.f32 0.0, %v1497
      %v1499 = vpop.f32.mrb[0].mxu0
      %1500 = vmatprep.mubr.bf16.mxu0 0
      %1501 = vmatmul.mubr.bf16.gmra.mrb[0].mxu0 %v1383
      %v1502 = vpop.f32.mrb[0].mxu0
      %v1503 = vadd.f32 0.0, %v1502
      %v1504 = vpop.f32.mrb[0].mxu0
      %v1505 = vpop.f32.mrb[0].mxu0
      %v1506 = vadd.f32 0.0, %v1505
      %v1507 = vpop.f32.mrb[0].mxu0
      %1508 = vmatprep.mubr.bf16.mxu0 0
      %1509 = vmatmul.mubr.bf16.gmra.mrb[0].mxu0 %v1384
      %v1510 = vpop.f32.mrb[0].mxu0
      %v1511 = vadd.f32 0.0, %v1510
      %v1512 = vpop.f32.mrb[0].mxu0
      %v1513 = vpop.f32.mrb[0].mxu0
      %v1514 = vadd.f32 0.0, %v1513
      %v1515 = vpop.f32.mrb[0].mxu0
      %1516 = vmatprep.mubr.bf16.mxu0 0
      %1517 = vmatmul.mubr.bf16.gmra.mrb[0].mxu0 %v1385
      %v1518 = vpop.f32.mrb[0].mxu0
      %v1519 = vadd.f32 0.0, %v1518
      %v1520 = vpop.f32.mrb[0].mxu0
      %v1521 = vpop.f32.mrb[0].mxu0
      %v1522 = vadd.f32 0.0, %v1521
      %v1523 = vpop.f32.mrb[0].mxu0
      %1524 = vmatprep.mubr.bf16.mxu0 0
      %1525 = vmatmul.mubr.bf16.gmra.mrb[0].mxu0 %v1386
      %v1526 = vpop.f32.mrb[0].mxu0
      %v1527 = vadd.f32 0.0, %v1526
      %v1528 = vpop.f32.mrb[0].mxu0
      %v1529 = vpop.f32.mrb[0].mxu0
      %v1530 = vadd.f32 0.0, %v1529
      %v1531 = vpop.f32.mrb[0].mxu0
      %1532 = vmatprep.mubr.bf16.mxu0 0
      %1533 = vmatmul.mubr.bf16.gmra.mrb[0].mxu0 %v1387
      %v1534 = vpop.f32.mrb[0].mxu0
      %v1535 = vadd.f32 0.0, %v1534
      %v1536 = vpop.f32.mrb[0].mxu0
      %v1537 = vpop.f32.mrb[0].mxu0
      %v1538 = vpop.f32.mrb[0].mxu0
      %1539 = vdwg.mxu0
      %v1540 = vadd.f32 %v1355, %v1487
      %v1541 = vadd.f32 %v1356, %v1490
      %v1542 = vadd.f32 %v1357, %v1495
      %v1543 = vadd.f32 %v1358, %v1498
      %v1544 = vadd.f32 %v1359, %v1503
      %v1545 = vadd.f32 %v1360, %v1506
      %v1546 = vadd.f32 %v1361, %v1511
      %v1547 = vadd.f32 %v1362, %v1514
      %v1548 = vadd.f32 %v1363, %v1519
      %v1549 = vadd.f32 %v1364, %v1522
      %v1550 = vadd.f32 %v1365, %v1527
      %v1551 = vadd.f32 %v1366, %v1530
      %v1552 = vadd.f32 %v1367, %v1535
      %v1553 = vld [vmem:[%s268 + $0x15] sm:$0xff]
      %v1554 = vld [vmem:[%s268 + $0x1d] sm:$0xff]
      %v1555 = vld [vmem:[%s268 + $0x25] sm:$0xff]
      %v1556 = vld [vmem:[%s268 + $0x2d] sm:$0xff]
      %v1557 = vld [vmem:[%s268 + $0x35] sm:$0xff]
      %v1558 = vld [vmem:[%s268 + $0x3d] sm:$0xff]
      %v1559 = vld [vmem:[%s268 + $0x45] sm:$0xff]
      %v1560 = vld [vmem:[%s268 + $0x4d] sm:$0xff]
      %v1561 = vld [vmem:[%s268 + $0x55] sm:$0xff]
      %v1562 = vld [vmem:[%s268 + $0x5d] sm:$0xff]
      %v1563 = vld [vmem:[%s268 + $0x65] sm:$0xff]
      %v1564 = vld [vmem:[%s268 + $0x6d] sm:$0xff]
      %v1565 = vld [vmem:[%s268 + $0x75] sm:$0xf]
      %v1566 = vpack.c.bf16 %v1554, %v1553
      %v1567 = vpack.c.bf16 %v1556, %v1555
      %v1568 = vpack.c.bf16 %v1558, %v1557
      %v1569 = vpack.c.bf16 %v1560, %v1559
      %v1570 = vpack.c.bf16 %v1562, %v1561
      %v1571 = vpack.c.bf16 %v1564, %v1563
      %v1572 = vpack.c.bf16 %v1565, %v1565
      %v1573 = vld [vmem:[%s1 + $0x1c0] sm:$0xf]
      %v1574 = vld [vmem:[%s1 + $0x1c4] sm:$0xf]
      %v1575 = vld [vmem:[%s1 + $0x1c8] sm:$0xf]
      %v1576 = vld [vmem:[%s1 + $0x1cc] sm:$0xf]
      %v1577 = vld [vmem:[%s1 + $0x1d0] sm:$0xf]
      %v1578 = vld [vmem:[%s1 + $0x1d4] sm:$0xf]
      %v1579 = vld [vmem:[%s1 + $0x1d8] sm:$0xf]
      %v1580 = vld [vmem:[%s1 + $0x1dc] sm:$0xf]
      %v1581 = vld [vmem:[%s1 + $0x1e0] sm:$0xf]
      %v1582 = vld [vmem:[%s1 + $0x1e4] sm:$0xf]
      %v1583 = vld [vmem:[%s1 + $0x1e8] sm:$0xf]
      %v1584 = vld [vmem:[%s1 + $0x1ec] sm:$0xf]
      %v1585 = vld [vmem:[%s1 + $0x1f0] sm:$0xf]
      %v1586 = vld [vmem:[%s1 + $0x1f4] sm:$0xf]
      %v1587 = vld [vmem:[%s1 + $0x1f8] sm:$0xf]
      %v1588 = vld [vmem:[%s1 + $0x1fc] sm:$0xf]
      %v1605 = vunpack.c.l.b16 %v1573
      %v1606 = vunpack.c.l.b16 %v1574
      %v1607 = vunpack.c.l.b16 %v1575
      %v1608 = vunpack.c.l.b16 %v1576
      %v1609 = vunpack.c.l.b16 %v1577
      %v1610 = vunpack.c.l.b16 %v1578
      %v1611 = vunpack.c.l.b16 %v1579
      %v1612 = vunpack.c.l.b16 %v1580
      %v1613 = vunpack.c.l.b16 %v1581
      %v1614 = vunpack.c.l.b16 %v1582
      %v1615 = vunpack.c.l.b16 %v1583
      %v1616 = vunpack.c.l.b16 %v1584
      %v1617 = vunpack.c.l.b16 %v1585
      %v1618 = vunpack.c.l.b16 %v1586
      %v1619 = vunpack.c.l.b16 %v1587
      %v1620 = vunpack.c.l.b16 %v1588
      %v1621 = vpack.c.b16 %v1606, %v1605
      %v1622 = vpack.c.b16 %v1608, %v1607
      %v1623 = vpack.c.b16 %v1610, %v1609
      %v1624 = vpack.c.b16 %v1612, %v1611
      %v1625 = vpack.c.b16 %v1614, %v1613
      %v1626 = vpack.c.b16 %v1616, %v1615
      %v1627 = vpack.c.b16 %v1618, %v1617
      %v1628 = vpack.c.b16 %v1620, %v1619
      %1637 = vmatprep.subr.bf16.mxu0 0
      %1638 = vmatpush1.bf16.msra.mxu0 %v1621
      %1639 = vmatprep.subr.bf16.mxu0 0
      %1640 = vmatpush1.bf16.msra.mxu0 %v1622
      %1641 = vmatprep.subr.bf16.mxu0 0
      %1642 = vmatpush1.bf16.msra.mxu0 %v1623
      %1643 = vmatprep.subr.bf16.mxu0 0
      %1644 = vmatpush1.bf16.msra.mxu0 %v1624
      %1645 = vmatprep.subr.bf16.mxu0 0
      %1646 = vmatpush1.bf16.msra.mxu0 %v1625
      %1647 = vmatprep.subr.bf16.mxu0 0
      %1648 = vmatpush1.bf16.msra.mxu0 %v1626
      %1649 = vmatprep.subr.bf16.mxu0 0
      %1650 = vmatpush1.bf16.msra.mxu0 %v1627
      %1651 = vmatprep.subr.bf16.mxu0 0
      %1652 = vmatpush1.bf16.msra.mxu0 %v1628
      %1653 = vmatprep.subr.bf16.mxu0 0
      %1654 = vmatpush1.bf16.msra.mxu0 0
      %1655 = vmatprep.subr.bf16.mxu0 0
      %1656 = vmatpush1.bf16.msra.mxu0 0
      %1657 = vmatprep.subr.bf16.mxu0 0
      %1658 = vmatpush1.bf16.msra.mxu0 0
      %1659 = vmatprep.subr.bf16.mxu0 0
      %1660 = vmatpush1.bf16.msra.mxu0 0
      %1661 = vmatprep.subr.bf16.mxu0 0
      %1662 = vmatpush1.bf16.msra.mxu0 0
      %1663 = vmatprep.subr.bf16.mxu0 0
      %1664 = vmatpush1.bf16.msra.mxu0 0
      %1665 = vmatprep.subr.bf16.mxu0 0
      %1666 = vmatpush1.bf16.msra.mxu0 0
      %1667 = vmatprep.subr.bf16.mxu0 0
      %1668 = vmatpush1.bf16.msra.mxu0 0
      %1669 = vmatprep.mubr.bf16.mxu0 0
      %1670 = vmatmul.mubr.bf16.gmra.mrb[0].mxu0 %v1566
      %v1671 = vpop.f32.mrb[0].mxu0
      %v1672 = vadd.f32 0.0, %v1671
      %v1673 = vpop.f32.mrb[0].mxu0
      %v1674 = vpop.f32.mrb[0].mxu0
      %v1675 = vadd.f32 0.0, %v1674
      %v1676 = vpop.f32.mrb[0].mxu0
      %1677 = vmatprep.mubr.bf16.mxu0 0
      %1678 = vmatmul.mubr.bf16.gmra.mrb[0].mxu0 %v1567
      %v1679 = vpop.f32.mrb[0].mxu0
      %v1680 = vadd.f32 0.0, %v1679
      %v1681 = vpop.f32.mrb[0].mxu0
      %v1682 = vpop.f32.mrb[0].mxu0
      %v1683 = vadd.f32 0.0, %v1682
      %v1684 = vpop.f32.mrb[0].mxu0
      %1685 = vmatprep.mubr.bf16.mxu0 0
      %1686 = vmatmul.mubr.bf16.gmra.mrb[0].mxu0 %v1568
      %v1687 = vpop.f32.mrb[0].mxu0
      %v1688 = vadd.f32 0.0, %v1687
      %v1689 = vpop.f32.mrb[0].mxu0
      %v1690 = vpop.f32.mrb[0].mxu0
      %v1691 = vadd.f32 0.0, %v1690
      %v1692 = vpop.f32.mrb[0].mxu0
      %1693 = vmatprep.mubr.bf16.mxu0 0
      %1694 = vmatmul.mubr.bf16.gmra.mrb[0].mxu0 %v1569
      %v1695 = vpop.f32.mrb[0].mxu0
      %v1696 = vadd.f32 0.0, %v1695
      %v1697 = vpop.f32.mrb[0].mxu0
      %v1698 = vpop.f32.mrb[0].mxu0
      %v1699 = vadd.f32 0.0, %v1698
      %v1700 = vpop.f32.mrb[0].mxu0
      %1701 = vmatprep.mubr.bf16.mxu0 0
      %1702 = vmatmul.mubr.bf16.gmra.mrb[0].mxu0 %v1570
      %v1703 = vpop.f32.mrb[0].mxu0
      %v1704 = vadd.f32 0.0, %v1703
      %v1705 = vpop.f32.mrb[0].mxu0
      %v1706 = vpop.f32.mrb[0].mxu0
      %v1707 = vadd.f32 0.0, %v1706
      %v1708 = vpop.f32.mrb[0].mxu0
      %1709 = vmatprep.mubr.bf16.mxu0 0
      %1710 = vmatmul.mubr.bf16.gmra.mrb[0].mxu0 %v1571
      %v1711 = vpop.f32.mrb[0].mxu0
      %v1712 = vadd.f32 0.0, %v1711
      %v1713 = vpop.f32.mrb[0].mxu0
      %v1714 = vpop.f32.mrb[0].mxu0
      %v1715 = vadd.f32 0.0, %v1714
      %v1716 = vpop.f32.mrb[0].mxu0
      %1717 = vmatprep.mubr.bf16.mxu0 0
      %1718 = vmatmul.mubr.bf16.gmra.mrb[0].mxu0 %v1572
      %v1719 = vpop.f32.mrb[0].mxu0
      %v1720 = vadd.f32 0.0, %v1719
      %v1721 = vpop.f32.mrb[0].mxu0
      %v1722 = vpop.f32.mrb[0].mxu0
      %v1723 = vpop.f32.mrb[0].mxu0
      %1724 = vdwg.mxu0
      %v1725 = vadd.f32 %v1540, %v1672
      %v1726 = vadd.f32 %v1541, %v1675
      %v1727 = vadd.f32 %v1542, %v1680
      %v1728 = vadd.f32 %v1543, %v1683
      %v1729 = vadd.f32 %v1544, %v1688
      %v1730 = vadd.f32 %v1545, %v1691
      %v1731 = vadd.f32 %v1546, %v1696
      %v1732 = vadd.f32 %v1547, %v1699
      %v1733 = vadd.f32 %v1548, %v1704
      %v1734 = vadd.f32 %v1549, %v1707
      %v1735 = vadd.f32 %v1550, %v1712
      %v1736 = vadd.f32 %v1551, %v1715
      %v1737 = vadd.f32 %v1552, %v1720
      %v1738 = vld [vmem:[%s268 + $0x16] sm:$0xff]
      %v1739 = vld [vmem:[%s268 + $0x1e] sm:$0xff]
      %v1740 = vld [vmem:[%s268 + $0x26] sm:$0xff]
      %v1741 = vld [vmem:[%s268 + $0x2e] sm:$0xff]
      %v1742 = vld [vmem:[%s268 + $0x36] sm:$0xff]
      %v1743 = vld [vmem:[%s268 + $0x3e] sm:$0xff]
      %v1744 = vld [vmem:[%s268 + $0x46] sm:$0xff]
      %v1745 = vld [vmem:[%s268 + $0x4e] sm:$0xff]
      %v1746 = vld [vmem:[%s268 + $0x56] sm:$0xff]
      %v1747 = vld [vmem:[%s268 + $0x5e] sm:$0xff]
      %v1748 = vld [vmem:[%s268 + $0x66] sm:$0xff]
      %v1749 = vld [vmem:[%s268 + $0x6e] sm:$0xff]
      %v1750 = vld [vmem:[%s268 + $0x76] sm:$0xf]
      %v1751 = vpack.c.bf16 %v1739, %v1738
      %v1752 = vpack.c.bf16 %v1741, %v1740
      %v1753 = vpack.c.bf16 %v1743, %v1742
      %v1754 = vpack.c.bf16 %v1745, %v1744
      %v1755 = vpack.c.bf16 %v1747, %v1746
      %v1756 = vpack.c.bf16 %v1749, %v1748
      %v1757 = vpack.c.bf16 %v1750, %v1750
      %v1758 = vld [vmem:[%s1 + $0x200] sm:$0xf]
      %v1759 = vld [vmem:[%s1 + $0x204] sm:$0xf]
      %v1760 = vld [vmem:[%s1 + $0x208] sm:$0xf]
      %v1761 = vld [vmem:[%s1 + $0x20c] sm:$0xf]
      %v1762 = vld [vmem:[%s1 + $0x210] sm:$0xf]
      %v1763 = vld [vmem:[%s1 + $0x214] sm:$0xf]
      %v1764 = vld [vmem:[%s1 + $0x218] sm:$0xf]
      %v1765 = vld [vmem:[%s1 + $0x21c] sm:$0xf]
      %v1766 = vld [vmem:[%s1 + $0x220] sm:$0xf]
      %v1767 = vld [vmem:[%s1 + $0x224] sm:$0xf]
      %v1768 = vld [vmem:[%s1 + $0x228] sm:$0xf]
      %v1769 = vld [vmem:[%s1 + $0x22c] sm:$0xf]
      %v1770 = vld [vmem:[%s1 + $0x230] sm:$0xf]
      %v1771 = vld [vmem:[%s1 + $0x234] sm:$0xf]
      %v1772 = vld [vmem:[%s1 + $0x238] sm:$0xf]
      %v1773 = vld [vmem:[%s1 + $0x23c] sm:$0xf]
      %v1790 = vunpack.c.l.b16 %v1758
      %v1791 = vunpack.c.l.b16 %v1759
      %v1792 = vunpack.c.l.b16 %v1760
      %v1793 = vunpack.c.l.b16 %v1761
      %v1794 = vunpack.c.l.b16 %v1762
      %v1795 = vunpack.c.l.b16 %v1763
      %v1796 = vunpack.c.l.b16 %v1764
      %v1797 = vunpack.c.l.b16 %v1765
      %v1798 = vunpack.c.l.b16 %v1766
      %v1799 = vunpack.c.l.b16 %v1767
      %v1800 = vunpack.c.l.b16 %v1768
      %v1801 = vunpack.c.l.b16 %v1769
      %v1802 = vunpack.c.l.b16 %v1770
      %v1803 = vunpack.c.l.b16 %v1771
      %v1804 = vunpack.c.l.b16 %v1772
      %v1805 = vunpack.c.l.b16 %v1773
      %v1806 = vpack.c.b16 %v1791, %v1790
      %v1807 = vpack.c.b16 %v1793, %v1792
      %v1808 = vpack.c.b16 %v1795, %v1794
      %v1809 = vpack.c.b16 %v1797, %v1796
      %v1810 = vpack.c.b16 %v1799, %v1798
      %v1811 = vpack.c.b16 %v1801, %v1800
      %v1812 = vpack.c.b16 %v1803, %v1802
      %v1813 = vpack.c.b16 %v1805, %v1804
      %1822 = vmatprep.subr.bf16.mxu0 0
      %1823 = vmatpush1.bf16.msra.mxu0 %v1806
      %1824 = vmatprep.subr.bf16.mxu0 0
      %1825 = vmatpush1.bf16.msra.mxu0 %v1807
      %1826 = vmatprep.subr.bf16.mxu0 0
      %1827 = vmatpush1.bf16.msra.mxu0 %v1808
      %1828 = vmatprep.subr.bf16.mxu0 0
      %1829 = vmatpush1.bf16.msra.mxu0 %v1809
      %1830 = vmatprep.subr.bf16.mxu0 0
      %1831 = vmatpush1.bf16.msra.mxu0 %v1810
      %1832 = vmatprep.subr.bf16.mxu0 0
      %1833 = vmatpush1.bf16.msra.mxu0 %v1811
      %1834 = vmatprep.subr.bf16.mxu0 0
      %1835 = vmatpush1.bf16.msra.mxu0 %v1812
      %1836 = vmatprep.subr.bf16.mxu0 0
      %1837 = vmatpush1.bf16.msra.mxu0 %v1813
      %1838 = vmatprep.subr.bf16.mxu0 0
      %1839 = vmatpush1.bf16.msra.mxu0 0
      %1840 = vmatprep.subr.bf16.mxu0 0
      %1841 = vmatpush1.bf16.msra.mxu0 0
      %1842 = vmatprep.subr.bf16.mxu0 0
      %1843 = vmatpush1.bf16.msra.mxu0 0
      %1844 = vmatprep.subr.bf16.mxu0 0
      %1845 = vmatpush1.bf16.msra.mxu0 0
      %1846 = vmatprep.subr.bf16.mxu0 0
      %1847 = vmatpush1.bf16.msra.mxu0 0
      %1848 = vmatprep.subr.bf16.mxu0 0
      %1849 = vmatpush1.bf16.msra.mxu0 0
      %1850 = vmatprep.subr.bf16.mxu0 0
      %1851 = vmatpush1.bf16.msra.mxu0 0
      %1852 = vmatprep.subr.bf16.mxu0 0
      %1853 = vmatpush1.bf16.msra.mxu0 0
      %1854 = vmatprep.mubr.bf16.mxu0 0
      %1855 = vmatmul.mubr.bf16.gmra.mrb[0].mxu0 %v1751
      %v1856 = vpop.f32.mrb[0].mxu0
      %v1857 = vadd.f32 0.0, %v1856
      %v1858 = vpop.f32.mrb[0].mxu0
      %v1859 = vpop.f32.mrb[0].mxu0
      %v1860 = vadd.f32 0.0, %v1859
      %v1861 = vpop.f32.mrb[0].mxu0
      %1862 = vmatprep.mubr.bf16.mxu0 0
      %1863 = vmatmul.mubr.bf16.gmra.mrb[0].mxu0 %v1752
      %v1864 = vpop.f32.mrb[0].mxu0
      %v1865 = vadd.f32 0.0, %v1864
      %v1866 = vpop.f32.mrb[0].mxu0
      %v1867 = vpop.f32.mrb[0].mxu0
      %v1868 = vadd.f32 0.0, %v1867
      %v1869 = vpop.f32.mrb[0].mxu0
      %1870 = vmatprep.mubr.bf16.mxu0 0
      %1871 = vmatmul.mubr.bf16.gmra.mrb[0].mxu0 %v1753
      %v1872 = vpop.f32.mrb[0].mxu0
      %v1873 = vadd.f32 0.0, %v1872
      %v1874 = vpop.f32.mrb[0].mxu0
      %v1875 = vpop.f32.mrb[0].mxu0
      %v1876 = vadd.f32 0.0, %v1875
      %v1877 = vpop.f32.mrb[0].mxu0
      %1878 = vmatprep.mubr.bf16.mxu0 0
      %1879 = vmatmul.mubr.bf16.gmra.mrb[0].mxu0 %v1754
      %v1880 = vpop.f32.mrb[0].mxu0
      %v1881 = vadd.f32 0.0, %v1880
      %v1882 = vpop.f32.mrb[0].mxu0
      %v1883 = vpop.f32.mrb[0].mxu0
      %v1884 = vadd.f32 0.0, %v1883
      %v1885 = vpop.f32.mrb[0].mxu0
      %1886 = vmatprep.mubr.bf16.mxu0 0
      %1887 = vmatmul.mubr.bf16.gmra.mrb[0].mxu0 %v1755
      %v1888 = vpop.f32.mrb[0].mxu0
      %v1889 = vadd.f32 0.0, %v1888
      %v1890 = vpop.f32.mrb[0].mxu0
      %v1891 = vpop.f32.mrb[0].mxu0
      %v1892 = vadd.f32 0.0, %v1891
      %v1893 = vpop.f32.mrb[0].mxu0
      %1894 = vmatprep.mubr.bf16.mxu0 0
      %1895 = vmatmul.mubr.bf16.gmra.mrb[0].mxu0 %v1756
      %v1896 = vpop.f32.mrb[0].mxu0
      %v1897 = vadd.f32 0.0, %v1896
      %v1898 = vpop.f32.mrb[0].mxu0
      %v1899 = vpop.f32.mrb[0].mxu0
      %v1900 = vadd.f32 0.0, %v1899
      %v1901 = vpop.f32.mrb[0].mxu0
      %1902 = vmatprep.mubr.bf16.mxu0 0
      %1903 = vmatmul.mubr.bf16.gmra.mrb[0].mxu0 %v1757
      %v1904 = vpop.f32.mrb[0].mxu0
      %v1905 = vadd.f32 0.0, %v1904
      %v1906 = vpop.f32.mrb[0].mxu0
      %v1907 = vpop.f32.mrb[0].mxu0
      %v1908 = vpop.f32.mrb[0].mxu0
      %1909 = vdwg.mxu0
      %v1910 = vadd.f32 %v1725, %v1857
      %v1911 = vadd.f32 %v1726, %v1860
      %v1912 = vadd.f32 %v1727, %v1865
      %v1913 = vadd.f32 %v1728, %v1868
      %v1914 = vadd.f32 %v1729, %v1873
      %v1915 = vadd.f32 %v1730, %v1876
      %v1916 = vadd.f32 %v1731, %v1881
      %v1917 = vadd.f32 %v1732, %v1884
      %v1918 = vadd.f32 %v1733, %v1889
      %v1919 = vadd.f32 %v1734, %v1892
      %v1920 = vadd.f32 %v1735, %v1897
      %v1921 = vadd.f32 %v1736, %v1900
      %v1922 = vadd.f32 %v1737, %v1905
      %v1923 = vld [vmem:[%s273] sm:$0xf]
      %v1924 = vld [vmem:[%s273 + $0x4] sm:$0xf]
      %v1925 = vld [vmem:[%s273 + $0x8] sm:$0xf]
      %v1926 = vld [vmem:[%s273 + $0xc] sm:$0xf]
      %v1927 = vld [vmem:[%s273 + $0x10] sm:$0xf]
      %v1928 = vld [vmem:[%s273 + $0x14] sm:$0xf]
      %v1929 = vld [vmem:[%s273 + $0x18] sm:$0xf]
      %v1930 = vld [vmem:[%s273 + $0x1c] sm:$0xf]
      %v1931 = vld [vmem:[%s273 + $0x20] sm:$0xf]
      %v1932 = vld [vmem:[%s273 + $0x24] sm:$0xf]
      %v1933 = vld [vmem:[%s273 + $0x28] sm:$0xf]
      %v1934 = vld [vmem:[%s273 + $0x2c] sm:$0xf]
      %v1935 = vld [vmem:[%s273 + $0x30] sm:$0x3]
      %v1936 = vld [vmem:[%s3] sm:$0xf]
      %v1937 = vld [vmem:[%s3 + $0x4] sm:$0xf]
      %v1938 = vld [vmem:[%s3 + $0x8] sm:$0xf]
      %v1939 = vld [vmem:[%s3 + $0xc] sm:$0xf]
      %v1940 = vld [vmem:[%s3 + $0x10] sm:$0xf]
      %v1941 = vld [vmem:[%s3 + $0x14] sm:$0xf]
      %v1942 = vld [vmem:[%s3 + $0x18] sm:$0xf]
      %v1943 = vld [vmem:[%s3 + $0x1c] sm:$0xf]
      %v1944 = vld [vmem:[%s3 + $0x20] sm:$0xf]
      %v1945 = vld [vmem:[%s3 + $0x24] sm:$0xf]
      %v1946 = vld [vmem:[%s3 + $0x28] sm:$0xf]
      %v1947 = vld [vmem:[%s3 + $0x2c] sm:$0xf]
      %v1948 = vld [vmem:[%s3 + $0x30] sm:$0xf]
      %v1949 = vld [vmem:[%s3 + $0x34] sm:$0xf]
      %v1950 = vld [vmem:[%s3 + $0x38] sm:$0xf]
      %v1951 = vld [vmem:[%s3 + $0x3c] sm:$0xf]
      %v1965 = vunpack.c.l.b16 %v1923
      %v1966 = vunpack.c.l.b16 %v1924
      %v1967 = vunpack.c.l.b16 %v1925
      %v1968 = vunpack.c.l.b16 %v1926
      %v1969 = vunpack.c.l.b16 %v1927
      %v1970 = vunpack.c.l.b16 %v1928
      %v1971 = vunpack.c.l.b16 %v1929
      %v1972 = vunpack.c.l.b16 %v1930
      %v1973 = vunpack.c.l.b16 %v1931
      %v1974 = vunpack.c.l.b16 %v1932
      %v1975 = vunpack.c.l.b16 %v1933
      %v1976 = vunpack.c.l.b16 %v1934
      %v1977 = vunpack.c.l.b16 %v1935
      %v1978 = vpack.c.b16 %v1966, %v1965
      %v1979 = vpack.c.b16 %v1968, %v1967
      %v1980 = vpack.c.b16 %v1970, %v1969
      %v1981 = vpack.c.b16 %v1972, %v1971
      %v1982 = vpack.c.b16 %v1974, %v1973
      %v1983 = vpack.c.b16 %v1976, %v1975
      %v1984 = vpack.c.b16 %v1977, %v1977
      %v2008 = vunpack.c.l.b16 %v1936
      %v2009 = vunpack.c.l.b16 %v1937
      %v2010 = vunpack.c.l.b16 %v1938
      %v2011 = vunpack.c.l.b16 %v1939
      %v2012 = vunpack.c.l.b16 %v1940
      %v2013 = vunpack.c.l.b16 %v1941
      %v2014 = vunpack.c.l.b16 %v1942
      %v2015 = vunpack.c.l.b16 %v1943
      %v2016 = vunpack.c.l.b16 %v1944
      %v2017 = vunpack.c.l.b16 %v1945
      %v2018 = vunpack.c.l.b16 %v1946
      %v2019 = vunpack.c.l.b16 %v1947
      %v2020 = vunpack.c.l.b16 %v1948
      %v2021 = vunpack.c.l.b16 %v1949
      %v2022 = vunpack.c.l.b16 %v1950
      %v2023 = vunpack.c.l.b16 %v1951
      %v2024 = vpack.c.b16 %v2009, %v2008
      %v2025 = vpack.c.b16 %v2011, %v2010
      %v2026 = vpack.c.b16 %v2013, %v2012
      %v2027 = vpack.c.b16 %v2015, %v2014
      %v2028 = vpack.c.b16 %v2017, %v2016
      %v2029 = vpack.c.b16 %v2019, %v2018
      %v2030 = vpack.c.b16 %v2021, %v2020
      %v2031 = vpack.c.b16 %v2023, %v2022
      %2040 = vmatprep.subr.bf16.mxu0 0
      %2041 = vmatpush1.bf16.msra.mxu0 %v2024
      %2042 = vmatprep.subr.bf16.mxu0 0
      %2043 = vmatpush1.bf16.msra.mxu0 %v2025
      %2044 = vmatprep.subr.bf16.mxu0 0
      %2045 = vmatpush1.bf16.msra.mxu0 %v2026
      %2046 = vmatprep.subr.bf16.mxu0 0
      %2047 = vmatpush1.bf16.msra.mxu0 %v2027
      %2048 = vmatprep.subr.bf16.mxu0 0
      %2049 = vmatpush1.bf16.msra.mxu0 %v2028
      %2050 = vmatprep.subr.bf16.mxu0 0
      %2051 = vmatpush1.bf16.msra.mxu0 %v2029
      %2052 = vmatprep.subr.bf16.mxu0 0
      %2053 = vmatpush1.bf16.msra.mxu0 %v2030
      %2054 = vmatprep.subr.bf16.mxu0 0
      %2055 = vmatpush1.bf16.msra.mxu0 %v2031
      %2056 = vmatprep.subr.bf16.mxu0 0
      %2057 = vmatpush1.bf16.msra.mxu0 0
      %2058 = vmatprep.subr.bf16.mxu0 0
      %2059 = vmatpush1.bf16.msra.mxu0 0
      %2060 = vmatprep.subr.bf16.mxu0 0
      %2061 = vmatpush1.bf16.msra.mxu0 0
      %2062 = vmatprep.subr.bf16.mxu0 0
      %2063 = vmatpush1.bf16.msra.mxu0 0
      %2064 = vmatprep.subr.bf16.mxu0 0
      %2065 = vmatpush1.bf16.msra.mxu0 0
      %2066 = vmatprep.subr.bf16.mxu0 0
      %2067 = vmatpush1.bf16.msra.mxu0 0
      %2068 = vmatprep.subr.bf16.mxu0 0
      %2069 = vmatpush1.bf16.msra.mxu0 0
      %2070 = vmatprep.subr.bf16.mxu0 0
      %2071 = vmatpush1.bf16.msra.mxu0 0
      %2072 = vmatprep.mubr.bf16.mxu0 0
      %2073 = vmatmul.mubr.bf16.gmra.mrb[0].mxu0 %v1978
      %v2074 = vpop.f32.mrb[0].mxu0
      %v2075 = vadd.f32 0.0, %v2074
      %v2076 = vpop.f32.mrb[0].mxu0
      %v2077 = vpop.f32.mrb[0].mxu0
      %v2078 = vadd.f32 0.0, %v2077
      %v2079 = vpop.f32.mrb[0].mxu0
      %2080 = vmatprep.mubr.bf16.mxu0 0
      %2081 = vmatmul.mubr.bf16.gmra.mrb[0].mxu0 %v1979
      %v2082 = vpop.f32.mrb[0].mxu0
      %v2083 = vadd.f32 0.0, %v2082
      %v2084 = vpop.f32.mrb[0].mxu0
      %v2085 = vpop.f32.mrb[0].mxu0
      %v2086 = vadd.f32 0.0, %v2085
      %v2087 = vpop.f32.mrb[0].mxu0
      %2088 = vmatprep.mubr.bf16.mxu0 0
      %2089 = vmatmul.mubr.bf16.gmra.mrb[0].mxu0 %v1980
      %v2090 = vpop.f32.mrb[0].mxu0
      %v2091 = vadd.f32 0.0, %v2090
      %v2092 = vpop.f32.mrb[0].mxu0
      %v2093 = vpop.f32.mrb[0].mxu0
      %v2094 = vadd.f32 0.0, %v2093
      %v2095 = vpop.f32.mrb[0].mxu0
      %2096 = vmatprep.mubr.bf16.mxu0 0
      %2097 = vmatmul.mubr.bf16.gmra.mrb[0].mxu0 %v1981
      %v2098 = vpop.f32.mrb[0].mxu0
      %v2099 = vadd.f32 0.0, %v2098
      %v2100 = vpop.f32.mrb[0].mxu0
      %v2101 = vpop.f32.mrb[0].mxu0
      %v2102 = vadd.f32 0.0, %v2101
      %v2103 = vpop.f32.mrb[0].mxu0
      %2104 = vmatprep.mubr.bf16.mxu0 0
      %2105 = vmatmul.mubr.bf16.gmra.mrb[0].mxu0 %v1982
      %v2106 = vpop.f32.mrb[0].mxu0
      %v2107 = vadd.f32 0.0, %v2106
      %v2108 = vpop.f32.mrb[0].mxu0
      %v2109 = vpop.f32.mrb[0].mxu0
      %v2110 = vadd.f32 0.0, %v2109
      %v2111 = vpop.f32.mrb[0].mxu0
      %2112 = vmatprep.mubr.bf16.mxu0 0
      %2113 = vmatmul.mubr.bf16.gmra.mrb[0].mxu0 %v1983
      %v2114 = vpop.f32.mrb[0].mxu0
      %v2115 = vadd.f32 0.0, %v2114
      %v2116 = vpop.f32.mrb[0].mxu0
      %v2117 = vpop.f32.mrb[0].mxu0
      %v2118 = vadd.f32 0.0, %v2117
      %v2119 = vpop.f32.mrb[0].mxu0
      %2120 = vmatprep.mubr.bf16.mxu0 0
      %2121 = vmatmul.mubr.bf16.gmra.mrb[0].mxu0 %v1984
      %v2122 = vpop.f32.mrb[0].mxu0
      %v2123 = vadd.f32 0.0, %v2122
      %v2124 = vpop.f32.mrb[0].mxu0
      %v2125 = vpop.f32.mrb[0].mxu0
      %v2126 = vpop.f32.mrb[0].mxu0
      %2127 = vdwg.mxu0
      %v2128 = vld [vmem:[%s4] sm:$0xff]
      %v2129 = vld [vmem:[%s4 + $0x8] sm:$0xff]
      %v2130 = vld [vmem:[%s4 + $0x10] sm:$0xff]
      %v2131 = vld [vmem:[%s4 + $0x18] sm:$0xff]
      %v2132 = vld [vmem:[%s4 + $0x20] sm:$0xff]
      %v2133 = vld [vmem:[%s4 + $0x28] sm:$0xff]
      %v2134 = vld [vmem:[%s4 + $0x30] sm:$0xff]
      %v2135 = vld [vmem:[%s4 + $0x38] sm:$0xff]
      %v2136 = vld [vmem:[%s4 + $0x40] sm:$0xff]
      %v2137 = vld [vmem:[%s4 + $0x48] sm:$0xff]
      %v2138 = vld [vmem:[%s4 + $0x50] sm:$0xff]
      %v2139 = vld [vmem:[%s4 + $0x58] sm:$0xff]
      %v2140 = vld [vmem:[%s4 + $0x60] sm:$0xf]
      %v2141 = vpack.c.bf16 %v1911, %v1910
      %v2142 = vpack.c.bf16 %v1913, %v1912
      %v2143 = vpack.c.bf16 %v1915, %v1914
      %v2144 = vpack.c.bf16 %v1917, %v1916
      %v2145 = vpack.c.bf16 %v1919, %v1918
      %v2146 = vpack.c.bf16 %v1921, %v1920
      %v2147 = vpack.c.bf16 %v1922, %v1922
      %v2155 = vunpack.c.l.b16 %v2141
      %v2156 = vunpack.c.h.b16 %v2141
      %v2157 = vunpack.c.l.b16 %v2142
      %v2158 = vunpack.c.h.b16 %v2142
      %v2159 = vunpack.c.l.b16 %v2143
      %v2160 = vunpack.c.h.b16 %v2143
      %v2161 = vunpack.c.l.b16 %v2144
      %v2162 = vunpack.c.h.b16 %v2144
      %v2163 = vunpack.c.l.b16 %v2145
      %v2164 = vunpack.c.h.b16 %v2145
      %v2165 = vunpack.c.l.b16 %v2146
      %v2166 = vunpack.c.h.b16 %v2146
      %v2167 = vunpack.c.l.b16 %v2147
      %v2168 = vpack.c.b16 %v2155, %v2155
      %v2169 = vpack.c.b16 %v2156, %v2156
      %v2170 = vpack.c.b16 %v2157, %v2157
      %v2171 = vpack.c.b16 %v2158, %v2158
      %v2172 = vpack.c.b16 %v2159, %v2159
      %v2173 = vpack.c.b16 %v2160, %v2160
      %v2174 = vpack.c.b16 %v2161, %v2161
      %v2175 = vpack.c.b16 %v2162, %v2162
      %v2176 = vpack.c.b16 %v2163, %v2163
      %v2177 = vpack.c.b16 %v2164, %v2164
      %v2178 = vpack.c.b16 %v2165, %v2165
      %v2179 = vpack.c.b16 %v2166, %v2166
      %v2180 = vpack.c.b16 %v2167, %v2167
      %2194 = vst [vmem:[%s278] sm:$0xf] %v2168
      %2195 = vst [vmem:[%s278 + $0x4] sm:$0xf] %v2169
      %2196 = vst [vmem:[%s278 + $0x8] sm:$0xf] %v2170
      %2197 = vst [vmem:[%s278 + $0xc] sm:$0xf] %v2171
      %2198 = vst [vmem:[%s278 + $0x10] sm:$0xf] %v2172
      %2199 = vst [vmem:[%s278 + $0x14] sm:$0xf] %v2173
      %2200 = vst [vmem:[%s278 + $0x18] sm:$0xf] %v2174
      %2201 = vst [vmem:[%s278 + $0x1c] sm:$0xf] %v2175
      %2202 = vst [vmem:[%s278 + $0x20] sm:$0xf] %v2176
      %2203 = vst [vmem:[%s278 + $0x24] sm:$0xf] %v2177
      %2204 = vst [vmem:[%s278 + $0x28] sm:$0xf] %v2178
      %2205 = vst [vmem:[%s278 + $0x2c] sm:$0xf] %v2179
      %2206 = vst [vmem:[%s278 + $0x30] sm:$0x3] %v2180
      %2208 = vset.pattern.permute.xlu0 0
      %2209 = vperm.xlu0 %2208, %v2128
      %v2210 = vpop.permute.xlu0 %2209
      %2213 = vset.pattern.permute.xlu0 0
      %2214 = vperm.xlu0 %2213, %v2129
      %v2215 = vpop.permute.xlu0 %2214
      %2218 = vset.pattern.permute.xlu0 0
      %2219 = vperm.xlu0 %2218, %v2130
      %v2220 = vpop.permute.xlu0 %2219
      %2223 = vset.pattern.permute.xlu0 0
      %2224 = vperm.xlu0 %2223, %v2131
      %v2225 = vpop.permute.xlu0 %2224
      %2228 = vset.pattern.permute.xlu0 0
      %2229 = vperm.xlu0 %2228, %v2132
      %v2230 = vpop.permute.xlu0 %2229
      %2233 = vset.pattern.permute.xlu0 0
      %2234 = vperm.xlu0 %2233, %v2133
      %v2235 = vpop.permute.xlu0 %2234
      %2238 = vset.pattern.permute.xlu0 0
      %2239 = vperm.xlu0 %2238, %v2134
      %v2240 = vpop.permute.xlu0 %2239
      %2243 = vset.pattern.permute.xlu0 0
      %2244 = vperm.xlu0 %2243, %v2135
      %v2245 = vpop.permute.xlu0 %2244
      %2248 = vset.pattern.permute.xlu0 0
      %2249 = vperm.xlu0 %2248, %v2136
      %v2250 = vpop.permute.xlu0 %2249
      %2253 = vset.pattern.permute.xlu0 0
      %2254 = vperm.xlu0 %2253, %v2137
      %v2255 = vpop.permute.xlu0 %2254
      %2258 = vset.pattern.permute.xlu0 0
      %2259 = vperm.xlu0 %2258, %v2138
      %v2260 = vpop.permute.xlu0 %2259
      %2263 = vset.pattern.permute.xlu0 0
      %2264 = vperm.xlu0 %2263, %v2139
      %v2265 = vpop.permute.xlu0 %2264
      %2268 = vset.pattern.permute.xlu0 0
      %2269 = vperm.xlu0 %2268, %v2140
      %v2270 = vpop.permute.xlu0 %2269
      %v2272 = vmul.f32 %v1910, %v2210
      %v2273 = vmul.f32 %v1911, %v2215
      %v2274 = vmul.f32 %v1912, %v2220
      %v2275 = vmul.f32 %v1913, %v2225
      %v2276 = vmul.f32 %v1914, %v2230
      %v2277 = vmul.f32 %v1915, %v2235
      %v2278 = vmul.f32 %v1916, %v2240
      %v2279 = vmul.f32 %v1917, %v2245
      %v2280 = vmul.f32 %v1918, %v2250
      %v2281 = vmul.f32 %v1919, %v2255
      %v2282 = vmul.f32 %v1920, %v2260
      %v2283 = vmul.f32 %v1921, %v2265
      %v2284 = vmul.f32 %v1922, %v2270
      %v2285 = vadd.f32 %v2272, %v2273
      %v2286 = vadd.f32 %v2285, %v2274
      %v2287 = vadd.f32 %v2286, %v2275
      %v2288 = vadd.f32 %v2287, %v2276
      %v2289 = vadd.f32 %v2288, %v2277
      %v2290 = vadd.f32 %v2289, %v2278
      %v2291 = vadd.f32 %v2290, %v2279
      %v2292 = vadd.f32 %v2291, %v2280
      %v2293 = vadd.f32 %v2292, %v2281
      %v2294 = vadd.f32 %v2293, %v2282
      %v2295 = vadd.f32 %v2294, %v2283
      %vm2296 = vcmask 1043456
      %v2297 = vsel %vm2296, %v2284, 0.0
      %v2298 = vadd.f32 %v2295, %v2297
      %v2299 = vrot.slane %v2298, 4
      %v2300 = vadd.f32 %v2298, %v2299
      %v2301 = vrot.slane %v2300, 2
      %v2302 = vadd.f32 %v2300, %v2301
      %v2303 = vrot.slane %v2302, 1
      %v2304 = vadd.f32 %v2302, %v2303
      %2305 = vst [vmem:[%s282] sm:$0x1] %v2304
      %v2306 = vmul.f32 %v1910, %v1910
      %v2307 = vmul.f32 %v1911, %v1911
      %v2308 = vmul.f32 %v1912, %v1912
      %v2309 = vmul.f32 %v1913, %v1913
      %v2310 = vmul.f32 %v1914, %v1914
      %v2311 = vmul.f32 %v1915, %v1915
      %v2312 = vmul.f32 %v1916, %v1916
      %v2313 = vmul.f32 %v1917, %v1917
      %v2314 = vmul.f32 %v1918, %v1918
      %v2315 = vmul.f32 %v1919, %v1919
      %v2316 = vmul.f32 %v1920, %v1920
      %v2317 = vmul.f32 %v1921, %v1921
      %v2318 = vmul.f32 %v1922, %v1922
      %v2319 = vmul.f32 %v2306, %v2210
      %v2320 = vmul.f32 %v2307, %v2215
      %v2321 = vmul.f32 %v2308, %v2220
      %v2322 = vmul.f32 %v2309, %v2225
      %v2323 = vmul.f32 %v2310, %v2230
      %v2324 = vmul.f32 %v2311, %v2235
      %v2325 = vmul.f32 %v2312, %v2240
      %v2326 = vmul.f32 %v2313, %v2245
      %v2327 = vmul.f32 %v2314, %v2250
      %v2328 = vmul.f32 %v2315, %v2255
      %v2329 = vmul.f32 %v2316, %v2260
      %v2330 = vmul.f32 %v2317, %v2265
      %v2331 = vmul.f32 %v2318, %v2270
      %v2332 = vadd.f32 %v2319, %v2320
      %v2333 = vadd.f32 %v2332, %v2321
      %v2334 = vadd.f32 %v2333, %v2322
      %v2335 = vadd.f32 %v2334, %v2323
      %v2336 = vadd.f32 %v2335, %v2324
      %v2337 = vadd.f32 %v2336, %v2325
      %v2338 = vadd.f32 %v2337, %v2326
      %v2339 = vadd.f32 %v2338, %v2327
      %v2340 = vadd.f32 %v2339, %v2328
      %v2341 = vadd.f32 %v2340, %v2329
      %v2342 = vadd.f32 %v2341, %v2330
      %v2343 = vsel %vm2296, %v2331, 0.0
      %v2344 = vadd.f32 %v2342, %v2343
      %v2345 = vrot.slane %v2344, 4
      %v2346 = vadd.f32 %v2344, %v2345
      %v2347 = vrot.slane %v2346, 2
      %v2348 = vadd.f32 %v2346, %v2347
      %v2349 = vrot.slane %v2348, 1
      %v2350 = vadd.f32 %v2348, %v2349
      %2351 = vst [vmem:[%s282 + $0x1] sm:$0x1] %v2350
      %v2352 = vmul.f32 %v2075, %v2210
      %v2353 = vmul.f32 %v2078, %v2215
      %v2354 = vmul.f32 %v2083, %v2220
      %v2355 = vmul.f32 %v2086, %v2225
      %v2356 = vmul.f32 %v2091, %v2230
      %v2357 = vmul.f32 %v2094, %v2235
      %v2358 = vmul.f32 %v2099, %v2240
      %v2359 = vmul.f32 %v2102, %v2245
      %v2360 = vmul.f32 %v2107, %v2250
      %v2361 = vmul.f32 %v2110, %v2255
      %v2362 = vmul.f32 %v2115, %v2260
      %v2363 = vmul.f32 %v2118, %v2265
      %v2364 = vmul.f32 %v2123, %v2270
      %v2365 = vadd.f32 %v2352, %v2353
      %v2366 = vadd.f32 %v2365, %v2354
      %v2367 = vadd.f32 %v2366, %v2355
      %v2368 = vadd.f32 %v2367, %v2356
      %v2369 = vadd.f32 %v2368, %v2357
      %v2370 = vadd.f32 %v2369, %v2358
      %v2371 = vadd.f32 %v2370, %v2359
      %v2372 = vadd.f32 %v2371, %v2360
      %v2373 = vadd.f32 %v2372, %v2361
      %v2374 = vadd.f32 %v2373, %v2362
      %v2375 = vadd.f32 %v2374, %v2363
      %v2376 = vsel %vm2296, %v2364, 0.0
      %v2377 = vadd.f32 %v2375, %v2376
      %v2378 = vrot.slane %v2377, 4
      %v2379 = vadd.f32 %v2377, %v2378
      %v2380 = vrot.slane %v2379, 2
      %v2381 = vadd.f32 %v2379, %v2380
      %v2382 = vrot.slane %v2381, 1
      %v2383 = vadd.f32 %v2381, %v2382
      %2384 = vst [vmem:[%s282 + $0x2] sm:$0x1] %v2383
      %v2385 = vmul.f32 %v2075, %v2075
      %v2386 = vmul.f32 %v2078, %v2078
      %v2387 = vmul.f32 %v2083, %v2083
      %v2388 = vmul.f32 %v2086, %v2086
      %v2389 = vmul.f32 %v2091, %v2091
      %v2390 = vmul.f32 %v2094, %v2094
      %v2391 = vmul.f32 %v2099, %v2099
      %v2392 = vmul.f32 %v2102, %v2102
      %v2393 = vmul.f32 %v2107, %v2107
      %v2394 = vmul.f32 %v2110, %v2110
      %v2395 = vmul.f32 %v2115, %v2115
      %v2396 = vmul.f32 %v2118, %v2118
      %v2397 = vmul.f32 %v2123, %v2123
      %v2398 = vmul.f32 %v2385, %v2210
      %v2399 = vmul.f32 %v2386, %v2215
      %v2400 = vmul.f32 %v2387, %v2220
      %v2401 = vmul.f32 %v2388, %v2225
      %v2402 = vmul.f32 %v2389, %v2230
      %v2403 = vmul.f32 %v2390, %v2235
      %v2404 = vmul.f32 %v2391, %v2240
      %v2405 = vmul.f32 %v2392, %v2245
      %v2406 = vmul.f32 %v2393, %v2250
      %v2407 = vmul.f32 %v2394, %v2255
      %v2408 = vmul.f32 %v2395, %v2260
      %v2409 = vmul.f32 %v2396, %v2265
      %v2410 = vmul.f32 %v2397, %v2270
      %v2411 = vadd.f32 %v2398, %v2399
      %v2412 = vadd.f32 %v2411, %v2400
      %v2413 = vadd.f32 %v2412, %v2401
      %v2414 = vadd.f32 %v2413, %v2402
      %v2415 = vadd.f32 %v2414, %v2403
      %v2416 = vadd.f32 %v2415, %v2404
      %v2417 = vadd.f32 %v2416, %v2405
      %v2418 = vadd.f32 %v2417, %v2406
      %v2419 = vadd.f32 %v2418, %v2407
      %v2420 = vadd.f32 %v2419, %v2408
      %v2421 = vadd.f32 %v2420, %v2409
      %v2422 = vsel %vm2296, %v2410, 0.0
      %v2423 = vadd.f32 %v2421, %v2422
      %v2424 = vrot.slane %v2423, 4
      %v2425 = vadd.f32 %v2423, %v2424
      %v2426 = vrot.slane %v2425, 2
      %v2427 = vadd.f32 %v2425, %v2426
      %v2428 = vrot.slane %v2427, 1
      %v2429 = vadd.f32 %v2427, %v2428
      %2430 = vst [vmem:[%s282 + $0x3] sm:$0x1] %v2429
      %2431 = vst [vmem:[%s282 + $0x4] sm:$0xf] 0.0
      %p2432 = scmp.lt.s32.totalorder %s18, 1
      %s2433 = scalar_select %p2432, %s18, 1
      %s2434 = smul.addr %s2433, 13
      %s2435 = smul.addr %s2434, 4
      %s2436 = scalar_lea.vmem %s5, %s2435
      %p2437 = scmp.lt.s32.totalorder %s18, 1
      %s2438 = scalar_select %p2437, %s18, 1
      %s2439 = smul.addr %s2438, 8
      %s2440 = scalar_lea.vmem %s6, %s2439
      // Predicated region
      $region41: #{residual_block.6} parent=39 // pred_check
        %p2441 = pneg %p151
      $region42: #{residual_block.6} parent=39 // pred_check_branch
        %2443 = sbr.rel (%p2441) target = $region44
      $region43: #{residual_block.6} parent=39 // pred_region
        _
      $region44: #{residual_block.6} parent=39 // pred_fallthru
        _
      // Predicated region
      $region45: #{residual_block.6} parent=39 // pred_check
        %p2444 = pneg %p177
      $region46: #{residual_block.6} parent=39 // pred_check_branch
        %2446 = sbr.rel (%p2444) target = $region48
      $region47: #{residual_block.6} parent=39 // pred_region
        _
      $region48: #{residual_block.6} parent=39 // pred_fallthru
        _
    $region40: #{residual_block.6} parent=5 // pred_fallthru
      _
    %p2447 = scmp.le.s32.totalorder 2, %s13
    // Predicated region
    $region49: #{residual_block.6} parent=5 // pred_check
      %p2448 = pneg %p2447
    $region50: #{residual_block.6} parent=5 // pred_check_branch
      %2450 = sbr.rel (%p2448) target = $region52
    $region51: #{residual_block.6} parent=5 // pred_region
      %s2451 = ssub.s32 %s13, 2
      // Predicated region
      $region53: #{residual_block.6} parent=51 // pred_check
        %p2452 = pneg %p157
      $region54: #{residual_block.6} parent=51 // pred_check_branch
        %2454 = sbr.rel (%p2452) target = $region56
      $region55: #{residual_block.6} parent=51 // pred_region
        %p2455 = scmp.lt.s32.totalorder %s19, 1
        %s2456 = scalar_select %p2455, %s19, 1
        %s2457 = smul.addr %s2456, 13
        %s2458 = smul.addr %s2457, 4
        %s2459 = scalar_lea.vmem %s5, %s2458
      $region56: #{residual_block.6} parent=51 // pred_fallthru
        _
      // Predicated region
      $region57: #{residual_block.6} parent=51 // pred_check
        %p2460 = pneg %p183
      $region58: #{residual_block.6} parent=51 // pred_check_branch
        %2462 = sbr.rel (%p2460) target = $region60
      $region59: #{residual_block.6} parent=51 // pred_region
        %p2463 = scmp.lt.s32.totalorder %s19, 1
        %s2464 = scalar_select %p2463, %s19, 1
        %s2465 = smul.addr %s2464, 8
        %s2466 = scalar_lea.vmem %s6, %s2465
      $region60: #{residual_block.6} parent=51 // pred_fallthru
        _
    $region52: #{residual_block.6} parent=5 // pred_fallthru
      _
  $region6: #{residual_block.6} parent=0 // loop_footer
    %s17 = sadd.s32 1, %s13
  $region7: #{residual_block.6} parent=0 // loop_footer_branch
    %12 = sbr.rel target = $region3
  $region8: #{residual_block.6} parent=0 // loop_exit
    _

// kernel: residual_block.7
$region0: #{residual_block.7}
  #allocation0 [shape = 'u32[]', space=smem, size = 0x4, offset = 0x4, fixed_abs, tag = 'smem constant byte address 0x4 - core index']
  #allocation1 [shape = 'u32[144,128]{1,0:T(1,128)}', space=vmem, size = 0x12000, scoped, tag = 'internal scratch']
  %s0 = inlined_call_operand.vmem [shape: bf16[2,100,128], index: 0, kind: input, shape index: {}]
  %s1 = inlined_call_operand.vmem [shape: bf16[2,100,128], index: 1, kind: input, shape index: {}]
  %s2 = inlined_call_operand.vmem [shape: bf16[128,128], index: 2, kind: input, shape index: {}]
  %s3 = inlined_call_operand.vmem [shape: f32[1,128], index: 3, kind: input, shape index: {}]
  %s4 = inlined_call_operand.vmem [shape: f32[1,128], index: 4, kind: input, shape index: {}]
  %s5 = inlined_call_operand.vmem [shape: f32[1,128], index: 5, kind: input, shape index: {}]
  %s6 = inlined_call_operand.vmem [shape: f32[2,100,128], index: 6, kind: output, shape index: {}]
  %s7 = sld [smem:[#allocation0]]
  $region57: #{residual_block.7} parent=0
    _
  %s9 = ssub.s32 1, %s7
  %s10 = scalar_select 0, %s9, %s7
  loop: start=0, step=1, limit=4
  $region2: #{residual_block.7} parent=0 // loop_pre_header
    _
  $region3: #{residual_block.7} parent=0 // loop_header
    %s12 = sphi 0, %s16
    %p13 = scmp.ge.s32.totalorder %s12, 4
    %s22 = sphi 0, %s24
    %s25 = sphi 0, %s22
    %s26 = sphi 0, %s25
    %s42 = sphi 0, %s26
    %s48 = sphi 0, %s50
    %s51 = sphi 0, %s48
    %s52 = sphi 0, %s51
    %s68 = sphi 0, %s52
    %s72 = sphi 0, %s72
    %s74 = sphi 0, %s72
    %s75 = sphi 0, %s74
    %s89 = sphi 0, %s75
    %s93 = sphi 0, %s93
    %s95 = sphi 0, %s93
    %s96 = sphi 0, %s95
    %s110 = sphi 0, %s96
    %s114 = sphi 0, %s114
    %s116 = sphi 0, %s114
    %s117 = sphi 0, %s116
    %s131 = sphi 0, %s117
    %s135 = sphi 0, %s135
    %s137 = sphi 0, %s135
    %s138 = sphi 0, %s137
    %s152 = sphi 0, %s138
    %s158 = sphi 0, %s160
    %s161 = sphi 0, %s158
    %s162 = sphi 0, %s161
    %s178 = sphi 0, %s162
  $region4: #{residual_block.7} parent=0 // loop_header_branch
    %15 = sbr.rel (%p13) target = $region8
  $region5: #{residual_block.7} parent=0 // loop_body
    %s17 = ssub.s32 %s12, 1
    %s18 = ssub.s32 %s12, 2
    %s19 = sadd.s32 %s12, 1
    %s20 = ssub.s32 %s12, %s19
    %p21 = scmp.eq.s32.totalorder %s20, 0
    %s23 = sadd.s32 %s22, 1
    %s24 = scalar_select %p21, %s22, %s23
    %p27 = pneg %p21
    %p28 = scmp.eq.s32.totalorder %s12, 1
    %p29 = por %p27, %p28
    %p30 = scmp.ne.s32.totalorder %s22, %s25
    %p31 = scmp.eq.s32.totalorder %s12, 0
    %p32 = por %p30, %p31
    %p33 = scmp.ne.s32.totalorder %s22, %s25
    %p34 = scmp.eq.s32.totalorder %s17, 1
    %p35 = por %p33, %p34
    %p36 = scmp.ne.s32.totalorder %s25, %s26
    %p37 = scmp.eq.s32.totalorder %s17, 0
    %p38 = por %p36, %p37
    %p39 = scmp.ne.s32.totalorder %s25, %s26
    %p40 = scmp.eq.s32.totalorder %s18, 1
    %p41 = por %p39, %p40
    %p43 = scmp.ne.s32.totalorder %s26, %s42
    %p44 = scmp.eq.s32.totalorder %s18, 0
    %p45 = por %p43, %p44
    %s46 = ssub.s32 %s12, %s19
    %p47 = scmp.eq.s32.totalorder %s46, 0
    %s49 = sadd.s32 %s48, 1
    %s50 = scalar_select %p47, %s48, %s49
    %p53 = pneg %p47
    %p54 = scmp.eq.s32.totalorder %s12, 1
    %p55 = por %p53, %p54
    %p56 = scmp.ne.s32.totalorder %s48, %s51
    %p57 = scmp.eq.s32.totalorder %s12, 0
    %p58 = por %p56, %p57
    %p59 = scmp.ne.s32.totalorder %s48, %s51
    %p60 = scmp.eq.s32.totalorder %s17, 1
    %p61 = por %p59, %p60
    %p62 = scmp.ne.s32.totalorder %s51, %s52
    %p63 = scmp.eq.s32.totalorder %s17, 0
    %p64 = por %p62, %p63
    %p65 = scmp.ne.s32.totalorder %s51, %s52
    %p66 = scmp.eq.s32.totalorder %s18, 1
    %p67 = por %p65, %p66
    %p69 = scmp.ne.s32.totalorder %s52, %s68
    %p70 = scmp.eq.s32.totalorder %s18, 0
    %p71 = por %p69, %p70
    %s73 = sadd.s32 %s72, 1
    %p76 = scmp.eq.s32.totalorder %s12, 1
    %p77 = scmp.ne.s32.totalorder %s72, %s74
    %p78 = scmp.eq.s32.totalorder %s12, 0
    %p79 = por %p77, %p78
    %p80 = scmp.ne.s32.totalorder %s72, %s74
    %p81 = scmp.eq.s32.totalorder %s17, 1
    %p82 = por %p80, %p81
    %p83 = scmp.ne.s32.totalorder %s74, %s75
    %p84 = scmp.eq.s32.totalorder %s17, 0
    %p85 = por %p83, %p84
    %p86 = scmp.ne.s32.totalorder %s74, %s75
    %p87 = scmp.eq.s32.totalorder %s18, 1
    %p88 = por %p86, %p87
    %p90 = scmp.ne.s32.totalorder %s75, %s89
    %p91 = scmp.eq.s32.totalorder %s18, 0
    %p92 = por %p90, %p91
    %s94 = sadd.s32 %s93, 1
    %p97 = scmp.eq.s32.totalorder %s12, 1
    %p98 = scmp.ne.s32.totalorder %s93, %s95
    %p99 = scmp.eq.s32.totalorder %s12, 0
    %p100 = por %p98, %p99
    %p101 = scmp.ne.s32.totalorder %s93, %s95
    %p102 = scmp.eq.s32.totalorder %s17, 1
    %p103 = por %p101, %p102
    %p104 = scmp.ne.s32.totalorder %s95, %s96
    %p105 = scmp.eq.s32.totalorder %s17, 0
    %p106 = por %p104, %p105
    %p107 = scmp.ne.s32.totalorder %s95, %s96
    %p108 = scmp.eq.s32.totalorder %s18, 1
    %p109 = por %p107, %p108
    %p111 = scmp.ne.s32.totalorder %s96, %s110
    %p112 = scmp.eq.s32.totalorder %s18, 0
    %p113 = por %p111, %p112
    %s115 = sadd.s32 %s114, 1
    %p118 = scmp.eq.s32.totalorder %s12, 1
    %p119 = scmp.ne.s32.totalorder %s114, %s116
    %p120 = scmp.eq.s32.totalorder %s12, 0
    %p121 = por %p119, %p120
    %p122 = scmp.ne.s32.totalorder %s114, %s116
    %p123 = scmp.eq.s32.totalorder %s17, 1
    %p124 = por %p122, %p123
    %p125 = scmp.ne.s32.totalorder %s116, %s117
    %p126 = scmp.eq.s32.totalorder %s17, 0
    %p127 = por %p125, %p126
    %p128 = scmp.ne.s32.totalorder %s116, %s117
    %p129 = scmp.eq.s32.totalorder %s18, 1
    %p130 = por %p128, %p129
    %p132 = scmp.ne.s32.totalorder %s117, %s131
    %p133 = scmp.eq.s32.totalorder %s18, 0
    %p134 = por %p132, %p133
    %s136 = sadd.s32 %s135, 1
    %p139 = scmp.eq.s32.totalorder %s12, 1
    %p140 = scmp.ne.s32.totalorder %s135, %s137
    %p141 = scmp.eq.s32.totalorder %s12, 0
    %p142 = por %p140, %p141
    %p143 = scmp.ne.s32.totalorder %s135, %s137
    %p144 = scmp.eq.s32.totalorder %s17, 1
    %p145 = por %p143, %p144
    %p146 = scmp.ne.s32.totalorder %s137, %s138
    %p147 = scmp.eq.s32.totalorder %s17, 0
    %p148 = por %p146, %p147
    %p149 = scmp.ne.s32.totalorder %s137, %s138
    %p150 = scmp.eq.s32.totalorder %s18, 1
    %p151 = por %p149, %p150
    %p153 = scmp.ne.s32.totalorder %s138, %s152
    %p154 = scmp.eq.s32.totalorder %s18, 0
    %p155 = por %p153, %p154
    %s156 = ssub.s32 %s12, %s19
    %p157 = scmp.eq.s32.totalorder %s156, 0
    %s159 = sadd.s32 %s158, 1
    %s160 = scalar_select %p157, %s158, %s159
    %p163 = pneg %p157
    %p164 = scmp.eq.s32.totalorder %s12, 1
    %p165 = por %p163, %p164
    %p166 = scmp.ne.s32.totalorder %s158, %s161
    %p167 = scmp.eq.s32.totalorder %s12, 0
    %p168 = por %p166, %p167
    %p169 = scmp.ne.s32.totalorder %s158, %s161
    %p170 = scmp.eq.s32.totalorder %s17, 1
    %p171 = por %p169, %p170
    %p172 = scmp.ne.s32.totalorder %s161, %s162
    %p173 = scmp.eq.s32.totalorder %s17, 0
    %p174 = por %p172, %p173
    %p175 = scmp.ne.s32.totalorder %s161, %s162
    %p176 = scmp.eq.s32.totalorder %s18, 1
    %p177 = por %p175, %p176
    %p179 = scmp.ne.s32.totalorder %s162, %s178
    %p180 = scmp.eq.s32.totalorder %s18, 0
    %p181 = por %p179, %p180
    %p182 = scmp.le.s32.totalorder 1, %s12
    %p183 = scmp.lt.s32.totalorder %s12, 3
    %p184 = pnand %p182, %p183
    %p185 = pneg %p184
    // Predicated region
    $region9: #{residual_block.7} parent=5 // pred_check
      _
    $region10: #{residual_block.7} parent=5 // pred_check_branch
      %187 = sbr.rel (%p184) target = $region12
    $region11: #{residual_block.7} parent=5 // pred_region
      %s188 = ssub.s32 %s12, 1
      // Predicated region
      $region13: #{residual_block.7} parent=11 // pred_check
        %p189 = pneg %p85
      $region14: #{residual_block.7} parent=11 // pred_check_branch
        %191 = sbr.rel (%p189) target = $region16
      $region15: #{residual_block.7} parent=11 // pred_region
        _
      $region16: #{residual_block.7} parent=11 // pred_fallthru
        _
      // Predicated region
      $region17: #{residual_block.7} parent=11 // pred_check
        %p192 = pneg %p106
      $region18: #{residual_block.7} parent=11 // pred_check_branch
        %194 = sbr.rel (%p192) target = $region20
      $region19: #{residual_block.7} parent=11 // pred_region
        _
      $region20: #{residual_block.7} parent=11 // pred_fallthru
        _
      // Predicated region
      $region21: #{residual_block.7} parent=11 // pred_check
        %p195 = pneg %p127
      $region22: #{residual_block.7} parent=11 // pred_check_branch
        %197 = sbr.rel (%p195) target = $region24
      $region23: #{residual_block.7} parent=11 // pred_region
        _
      $region24: #{residual_block.7} parent=11 // pred_fallthru
        _
      // Predicated region
      $region25: #{residual_block.7} parent=11 // pred_check
        %p198 = pneg %p148
      $region26: #{residual_block.7} parent=11 // pred_check_branch
        %200 = sbr.rel (%p198) target = $region28
      $region27: #{residual_block.7} parent=11 // pred_region
        _
      $region28: #{residual_block.7} parent=11 // pred_fallthru
        _
    $region12: #{residual_block.7} parent=5 // pred_fallthru
      _
    %p201 = scmp.lt.s32.totalorder %s12, 2
    // Predicated region
    $region29: #{residual_block.7} parent=5 // pred_check
      %p202 = pneg %p201
    $region30: #{residual_block.7} parent=5 // pred_check_branch
      %204 = sbr.rel (%p202) target = $region32
    $region31: #{residual_block.7} parent=5 // pred_region
      // Predicated region
      $region33: #{residual_block.7} parent=31 // pred_check
        %p205 = pneg %p32
      $region34: #{residual_block.7} parent=31 // pred_check_branch
        %207 = sbr.rel (%p205) target = $region36
      $region35: #{residual_block.7} parent=31 // pred_region
        %p208 = scmp.lt.s32.totalorder %s12, 1
        %s209 = scalar_select %p208, %s12, 1
        %s210 = smul.addr %s209, 13
        %s211 = smul.addr %s210, 4
        %s212 = scalar_lea.vmem %s0, %s211
      $region36: #{residual_block.7} parent=31 // pred_fallthru
        _
      // Predicated region
      $region37: #{residual_block.7} parent=31 // pred_check
        %p213 = pneg %p58
      $region38: #{residual_block.7} parent=31 // pred_check_branch
        %215 = sbr.rel (%p213) target = $region40
      $region39: #{residual_block.7} parent=31 // pred_region
        %p216 = scmp.lt.s32.totalorder %s12, 1
        %s217 = scalar_select %p216, %s12, 1
        %s218 = smul.addr %s217, 13
        %s219 = smul.addr %s218, 4
        %s220 = scalar_lea.vmem %s1, %s219
      $region40: #{residual_block.7} parent=31 // pred_fallthru
        _
    $region32: #{residual_block.7} parent=5 // pred_fallthru
      _
    %p221 = scmp.le.s32.totalorder 1, %s12
    %p222 = scmp.lt.s32.totalorder %s12, 3
    %p223 = pnand %p221, %p222
    %p224 = pneg %p223
    // Predicated region
    $region41: #{residual_block.7} parent=5 // pred_check
      _
    $region42: #{residual_block.7} parent=5 // pred_check_branch
      %226 = sbr.rel (%p223) target = $region44
    $region43: #{residual_block.7} parent=5 // pred_region
      %s227 = ssub.s32 %s12, 1
      %p228 = scmp.lt.s32.totalorder %s17, 1
      %s229 = scalar_select %p228, %s17, 1
      %s230 = smul.addr %s229, 13
      %s231 = smul.addr %s230, 4
      %s232 = scalar_lea.vmem %s0, %s231
      %p233 = pneg %p38
      %p234 = pneg %p35
      %p235 = scmp.lt.s32.totalorder %s17, 1
      %s236 = scalar_select %p235, %s17, 1
      %s237 = smul.addr %s236, 13
      %s238 = smul.addr %s237, 4
      %s239 = scalar_lea.vmem %s1, %s238
      %p240 = pneg %p64
      %p241 = pneg %p61
      %p242 = pneg %p85
      %p243 = pneg %p82
      %p244 = pneg %p106
      %p245 = pneg %p103
      %p246 = pneg %p127
      %p247 = pneg %p124
      %p248 = pneg %p148
      %p249 = pneg %p145
      %p250 = pneg %p174
      %p251 = pneg %p171
      %p252 = scmp.lt.s32.totalorder %s17, 1
      %s253 = scalar_select %p252, %s17, 1
      %s254 = smul.addr %s253, 13
      %s255 = smul.addr %s254, 8
      %s256 = scalar_lea.vmem %s6, %s255
      %p257 = scmp.lt.s32.totalorder %s17, 1
      %s258 = scalar_select %p257, %s17, 1
      %s259 = smul.addr %s258, 13
      %s260 = smul.addr %s259, 4
      %s261 = scalar_lea.vmem %s0, %s260
      %p262 = scmp.lt.s32.totalorder %s17, 1
      %s263 = scalar_select %p262, %s17, 1
      %s264 = smul.addr %s263, 13
      %s265 = smul.addr %s264, 4
      %s266 = scalar_lea.vmem %s1, %s265
      %p267 = scmp.lt.s32.totalorder %s17, 1
      %s268 = scalar_select %p267, %s17, 1
      %s269 = smul.addr %s268, 13
      %s270 = smul.addr %s269, 8
      %s271 = scalar_lea.vmem %s6, %s270
      %v273 = vld [vmem:[%s266] sm:$0xf]
      %v274 = vld [vmem:[%s266 + $0x4] sm:$0xf]
      %v275 = vld [vmem:[%s266 + $0x8] sm:$0xf]
      %v276 = vld [vmem:[%s266 + $0xc] sm:$0xf]
      %v277 = vld [vmem:[%s266 + $0x10] sm:$0xf]
      %v278 = vld [vmem:[%s266 + $0x14] sm:$0xf]
      %v279 = vld [vmem:[%s266 + $0x18] sm:$0xf]
      %v280 = vld [vmem:[%s266 + $0x1c] sm:$0xf]
      %v281 = vld [vmem:[%s266 + $0x20] sm:$0xf]
      %v282 = vld [vmem:[%s266 + $0x24] sm:$0xf]
      %v283 = vld [vmem:[%s266 + $0x28] sm:$0xf]
      %v284 = vld [vmem:[%s266 + $0x2c] sm:$0xf]
      %v285 = vld [vmem:[%s266 + $0x30] sm:$0x3]
      %v286 = vld [vmem:[%s2] sm:$0xf]
      %v287 = vld [vmem:[%s2 + $0x4] sm:$0xf]
      %v288 = vld [vmem:[%s2 + $0x8] sm:$0xf]
      %v289 = vld [vmem:[%s2 + $0xc] sm:$0xf]
      %v290 = vld [vmem:[%s2 + $0x10] sm:$0xf]
      %v291 = vld [vmem:[%s2 + $0x14] sm:$0xf]
      %v292 = vld [vmem:[%s2 + $0x18] sm:$0xf]
      %v293 = vld [vmem:[%s2 + $0x1c] sm:$0xf]
      %v294 = vld [vmem:[%s2 + $0x20] sm:$0xf]
      %v295 = vld [vmem:[%s2 + $0x24] sm:$0xf]
      %v296 = vld [vmem:[%s2 + $0x28] sm:$0xf]
      %v297 = vld [vmem:[%s2 + $0x2c] sm:$0xf]
      %v298 = vld [vmem:[%s2 + $0x30] sm:$0xf]
      %v299 = vld [vmem:[%s2 + $0x34] sm:$0xf]
      %v300 = vld [vmem:[%s2 + $0x38] sm:$0xf]
      %v301 = vld [vmem:[%s2 + $0x3c] sm:$0xf]
      %v315 = vunpack.c.l.b16 %v273
      %v316 = vunpack.c.l.b16 %v274
      %v317 = vunpack.c.l.b16 %v275
      %v318 = vunpack.c.l.b16 %v276
      %v319 = vunpack.c.l.b16 %v277
      %v320 = vunpack.c.l.b16 %v278
      %v321 = vunpack.c.l.b16 %v279
      %v322 = vunpack.c.l.b16 %v280
      %v323 = vunpack.c.l.b16 %v281
      %v324 = vunpack.c.l.b16 %v282
      %v325 = vunpack.c.l.b16 %v283
      %v326 = vunpack.c.l.b16 %v284
      %v327 = vunpack.c.l.b16 %v285
      %v328 = vpack.c.b16 %v316, %v315
      %v329 = vpack.c.b16 %v318, %v317
      %v330 = vpack.c.b16 %v320, %v319
      %v331 = vpack.c.b16 %v322, %v321
      %v332 = vpack.c.b16 %v324, %v323
      %v333 = vpack.c.b16 %v326, %v325
      %v334 = vpack.c.b16 %v327, %v327
      %v358 = vunpack.c.l.b16 %v286
      %v359 = vunpack.c.l.b16 %v287
      %v360 = vunpack.c.l.b16 %v288
      %v361 = vunpack.c.l.b16 %v289
      %v362 = vunpack.c.l.b16 %v290
      %v363 = vunpack.c.l.b16 %v291
      %v364 = vunpack.c.l.b16 %v292
      %v365 = vunpack.c.l.b16 %v293
      %v366 = vunpack.c.l.b16 %v294
      %v367 = vunpack.c.l.b16 %v295
      %v368 = vunpack.c.l.b16 %v296
      %v369 = vunpack.c.l.b16 %v297
      %v370 = vunpack.c.l.b16 %v298
      %v371 = vunpack.c.l.b16 %v299
      %v372 = vunpack.c.l.b16 %v300
      %v373 = vunpack.c.l.b16 %v301
      %v374 = vpack.c.b16 %v359, %v358
      %v375 = vpack.c.b16 %v361, %v360
      %v376 = vpack.c.b16 %v363, %v362
      %v377 = vpack.c.b16 %v365, %v364
      %v378 = vpack.c.b16 %v367, %v366
      %v379 = vpack.c.b16 %v369, %v368
      %v380 = vpack.c.b16 %v371, %v370
      %v381 = vpack.c.b16 %v373, %v372
      %390 = vmatprep.subr.bf16.mxu0 0
      %391 = vmatpush1.bf16.msra.mxu0 %v374
      %392 = vmatprep.subr.bf16.mxu0 0
      %393 = vmatpush1.bf16.msra.mxu0 %v375
      %394 = vmatprep.subr.bf16.mxu0 0
      %395 = vmatpush1.bf16.msra.mxu0 %v376
      %396 = vmatprep.subr.bf16.mxu0 0
      %397 = vmatpush1.bf16.msra.mxu0 %v377
      %398 = vmatprep.subr.bf16.mxu0 0
      %399 = vmatpush1.bf16.msra.mxu0 %v378
      %400 = vmatprep.subr.bf16.mxu0 0
      %401 = vmatpush1.bf16.msra.mxu0 %v379
      %402 = vmatprep.subr.bf16.mxu0 0
      %403 = vmatpush1.bf16.msra.mxu0 %v380
      %404 = vmatprep.subr.bf16.mxu0 0
      %405 = vmatpush1.bf16.msra.mxu0 %v381
      %406 = vmatprep.subr.bf16.mxu0 0
      %407 = vmatpush1.bf16.msra.mxu0 0
      %408 = vmatprep.subr.bf16.mxu0 0
      %409 = vmatpush1.bf16.msra.mxu0 0
      %410 = vmatprep.subr.bf16.mxu0 0
      %411 = vmatpush1.bf16.msra.mxu0 0
      %412 = vmatprep.subr.bf16.mxu0 0
      %413 = vmatpush1.bf16.msra.mxu0 0
      %414 = vmatprep.subr.bf16.mxu0 0
      %415 = vmatpush1.bf16.msra.mxu0 0
      %416 = vmatprep.subr.bf16.mxu0 0
      %417 = vmatpush1.bf16.msra.mxu0 0
      %418 = vmatprep.subr.bf16.mxu0 0
      %419 = vmatpush1.bf16.msra.mxu0 0
      %420 = vmatprep.subr.bf16.mxu0 0
      %421 = vmatpush1.bf16.msra.mxu0 0
      %422 = vmatprep.mubr.bf16.mxu0 0
      %423 = vmatmul.mubr.bf16.gmra.mrb[0].mxu0 %v328
      %v424 = vpop.f32.mrb[0].mxu0
      %v425 = vadd.f32 0.0, %v424
      %v426 = vpop.f32.mrb[0].mxu0
      %v427 = vpop.f32.mrb[0].mxu0
      %v428 = vadd.f32 0.0, %v427
      %v429 = vpop.f32.mrb[0].mxu0
      %430 = vmatprep.mubr.bf16.mxu0 0
      %431 = vmatmul.mubr.bf16.gmra.mrb[0].mxu0 %v329
      %v432 = vpop.f32.mrb[0].mxu0
      %v433 = vadd.f32 0.0, %v432
      %v434 = vpop.f32.mrb[0].mxu0
      %v435 = vpop.f32.mrb[0].mxu0
      %v436 = vadd.f32 0.0, %v435
      %v437 = vpop.f32.mrb[0].mxu0
      %438 = vmatprep.mubr.bf16.mxu0 0
      %439 = vmatmul.mubr.bf16.gmra.mrb[0].mxu0 %v330
      %v440 = vpop.f32.mrb[0].mxu0
      %v441 = vadd.f32 0.0, %v440
      %v442 = vpop.f32.mrb[0].mxu0
      %v443 = vpop.f32.mrb[0].mxu0
      %v444 = vadd.f32 0.0, %v443
      %v445 = vpop.f32.mrb[0].mxu0
      %446 = vmatprep.mubr.bf16.mxu0 0
      %447 = vmatmul.mubr.bf16.gmra.mrb[0].mxu0 %v331
      %v448 = vpop.f32.mrb[0].mxu0
      %v449 = vadd.f32 0.0, %v448
      %v450 = vpop.f32.mrb[0].mxu0
      %v451 = vpop.f32.mrb[0].mxu0
      %v452 = vadd.f32 0.0, %v451
      %v453 = vpop.f32.mrb[0].mxu0
      %454 = vmatprep.mubr.bf16.mxu0 0
      %455 = vmatmul.mubr.bf16.gmra.mrb[0].mxu0 %v332
      %v456 = vpop.f32.mrb[0].mxu0
      %v457 = vadd.f32 0.0, %v456
      %v458 = vpop.f32.mrb[0].mxu0
      %v459 = vpop.f32.mrb[0].mxu0
      %v460 = vadd.f32 0.0, %v459
      %v461 = vpop.f32.mrb[0].mxu0
      %462 = vmatprep.mubr.bf16.mxu0 0
      %463 = vmatmul.mubr.bf16.gmra.mrb[0].mxu0 %v333
      %v464 = vpop.f32.mrb[0].mxu0
      %v465 = vadd.f32 0.0, %v464
      %v466 = vpop.f32.mrb[0].mxu0
      %v467 = vpop.f32.mrb[0].mxu0
      %v468 = vadd.f32 0.0, %v467
      %v469 = vpop.f32.mrb[0].mxu0
      %470 = vmatprep.mubr.bf16.mxu0 0
      %471 = vmatmul.mubr.bf16.gmra.mrb[0].mxu0 %v334
      %v472 = vpop.f32.mrb[0].mxu0
      %v473 = vadd.f32 0.0, %v472
      %v474 = vpop.f32.mrb[0].mxu0
      %v475 = vpop.f32.mrb[0].mxu0
      %v476 = vpop.f32.mrb[0].mxu0
      %477 = vdwg.mxu0
      %v478 = vld [vmem:[%s261] sm:$0xf]
      %v479 = vld [vmem:[%s261 + $0x4] sm:$0xf]
      %v480 = vld [vmem:[%s261 + $0x8] sm:$0xf]
      %v481 = vld [vmem:[%s261 + $0xc] sm:$0xf]
      %v482 = vld [vmem:[%s261 + $0x10] sm:$0xf]
      %v483 = vld [vmem:[%s261 + $0x14] sm:$0xf]
      %v484 = vld [vmem:[%s261 + $0x18] sm:$0xf]
      %v485 = vld [vmem:[%s261 + $0x1c] sm:$0xf]
      %v486 = vld [vmem:[%s261 + $0x20] sm:$0xf]
      %v487 = vld [vmem:[%s261 + $0x24] sm:$0xf]
      %v488 = vld [vmem:[%s261 + $0x28] sm:$0xf]
      %v489 = vld [vmem:[%s261 + $0x2c] sm:$0xf]
      %v490 = vld [vmem:[%s261 + $0x30] sm:$0x3]
      %v491 = vunpack.c.l.bf16 %v478
      %v492 = vunpack.c.l.bf16 %v479
      %v493 = vunpack.c.l.bf16 %v480
      %v494 = vunpack.c.l.bf16 %v481
      %v495 = vunpack.c.l.bf16 %v482
      %v496 = vunpack.c.l.bf16 %v483
      %v497 = vunpack.c.l.bf16 %v484
      %v498 = vunpack.c.l.bf16 %v485
      %v499 = vunpack.c.l.bf16 %v486
      %v500 = vunpack.c.l.bf16 %v487
      %v501 = vunpack.c.l.bf16 %v488
      %v502 = vunpack.c.l.bf16 %v489
      %v503 = vunpack.c.l.bf16 %v490
      %v504 = vld [vmem:[%s3] sm:$0x1]
      %v506 = vlaneseq
      %v507 = vshrl.u32 %v506, 7
      %v508 = vsub.s32 0, %v507
      %v509 = vrot.slane %v504, %v508
      %v511 = vmul.f32 %v491, %v509
      %v512 = vmul.f32 %v492, %v509
      %v513 = vmul.f32 %v493, %v509
      %v514 = vmul.f32 %v494, %v509
      %v515 = vmul.f32 %v495, %v509
      %v516 = vmul.f32 %v496, %v509
      %v517 = vmul.f32 %v497, %v509
      %v518 = vmul.f32 %v498, %v509
      %v519 = vmul.f32 %v499, %v509
      %v520 = vmul.f32 %v500, %v509
      %v521 = vmul.f32 %v501, %v509
      %v522 = vmul.f32 %v502, %v509
      %v523 = vmul.f32 %v503, %v509
      %v524 = vld [vmem:[%s4] sm:$0x1]
      %v526 = vlaneseq
      %v527 = vshrl.u32 %v526, 7
      %v528 = vsub.s32 0, %v527
      %v529 = vrot.slane %v524, %v528
      %v531 = vmul.f32 %v425, %v529
      %v532 = vmul.f32 %v428, %v529
      %v533 = vmul.f32 %v433, %v529
      %v534 = vmul.f32 %v436, %v529
      %v535 = vmul.f32 %v441, %v529
      %v536 = vmul.f32 %v444, %v529
      %v537 = vmul.f32 %v449, %v529
      %v538 = vmul.f32 %v452, %v529
      %v539 = vmul.f32 %v457, %v529
      %v540 = vmul.f32 %v460, %v529
      %v541 = vmul.f32 %v465, %v529
      %v542 = vmul.f32 %v468, %v529
      %v543 = vmul.f32 %v473, %v529
      %v544 = vadd.f32 %v511, %v531
      %v545 = vadd.f32 %v512, %v532
      %v546 = vadd.f32 %v513, %v533
      %v547 = vadd.f32 %v514, %v534
      %v548 = vadd.f32 %v515, %v535
      %v549 = vadd.f32 %v516, %v536
      %v550 = vadd.f32 %v517, %v537
      %v551 = vadd.f32 %v518, %v538
      %v552 = vadd.f32 %v519, %v539
      %v553 = vadd.f32 %v520, %v540
      %v554 = vadd.f32 %v521, %v541
      %v555 = vadd.f32 %v522, %v542
      %v556 = vadd.f32 %v523, %v543
      %v557 = vld [vmem:[%s5] sm:$0x1]
      %v559 = vlaneseq
      %v560 = vshrl.u32 %v559, 7
      %v561 = vsub.s32 0, %v560
      %v562 = vrot.slane %v557, %v561
      %v564 = vadd.f32 %v544, %v562
      %v565 = vadd.f32 %v545, %v562
      %v566 = vadd.f32 %v546, %v562
      %v567 = vadd.f32 %v547, %v562
      %v568 = vadd.f32 %v548, %v562
      %v569 = vadd.f32 %v549, %v562
      %v570 = vadd.f32 %v550, %v562
      %v571 = vadd.f32 %v551, %v562
      %v572 = vadd.f32 %v552, %v562
      %v573 = vadd.f32 %v553, %v562
      %v574 = vadd.f32 %v554, %v562
      %v575 = vadd.f32 %v555, %v562
      %v576 = vadd.f32 %v556, %v562
      %v577 = vmax.f32 %v564, 0.0
      %v578 = vmax.f32 %v565, 0.0
      %v579 = vmax.f32 %v566, 0.0
      %v580 = vmax.f32 %v567, 0.0
      %v581 = vmax.f32 %v568, 0.0
      %v582 = vmax.f32 %v569, 0.0
      %v583 = vmax.f32 %v570, 0.0
      %v584 = vmax.f32 %v571, 0.0
      %v585 = vmax.f32 %v572, 0.0
      %v586 = vmax.f32 %v573, 0.0
      %v587 = vmax.f32 %v574, 0.0
      %v588 = vmax.f32 %v575, 0.0
      %v589 = vmax.f32 %v576, 0.0
      %590 = vst [vmem:[%s271] sm:$0xff] %v577
      %591 = vst [vmem:[%s271 + $0x8] sm:$0xff] %v578
      %592 = vst [vmem:[%s271 + $0x10] sm:$0xff] %v579
      %593 = vst [vmem:[%s271 + $0x18] sm:$0xff] %v580
      %594 = vst [vmem:[%s271 + $0x20] sm:$0xff] %v581
      %595 = vst [vmem:[%s271 + $0x28] sm:$0xff] %v582
      %596 = vst [vmem:[%s271 + $0x30] sm:$0xff] %v583
      %597 = vst [vmem:[%s271 + $0x38] sm:$0xff] %v584
      %598 = vst [vmem:[%s271 + $0x40] sm:$0xff] %v585
      %599 = vst [vmem:[%s271 + $0x48] sm:$0xff] %v586
      %600 = vst [vmem:[%s271 + $0x50] sm:$0xff] %v587
      %601 = vst [vmem:[%s271 + $0x58] sm:$0xff] %v588
      %602 = vst [vmem:[%s271 + $0x60] sm:$0xf] %v589
      %p603 = scmp.lt.s32.totalorder %s17, 1
      %s604 = scalar_select %p603, %s17, 1
      %s605 = smul.addr %s604, 13
      %s606 = smul.addr %s605, 8
      %s607 = scalar_lea.vmem %s6, %s606
      // Predicated region
      $region45: #{residual_block.7} parent=43 // pred_check
        %p608 = pneg %p171
      $region46: #{residual_block.7} parent=43 // pred_check_branch
        %610 = sbr.rel (%p608) target = $region48
      $region47: #{residual_block.7} parent=43 // pred_region
        _
      $region48: #{residual_block.7} parent=43 // pred_fallthru
        _
    $region44: #{residual_block.7} parent=5 // pred_fallthru
      _
    %p611 = scmp.le.s32.totalorder 2, %s12
    // Predicated region
    $region49: #{residual_block.7} parent=5 // pred_check
      %p612 = pneg %p611
    $region50: #{residual_block.7} parent=5 // pred_check_branch
      %614 = sbr.rel (%p612) target = $region52
    $region51: #{residual_block.7} parent=5 // pred_region
      %s615 = ssub.s32 %s12, 2
      // Predicated region
      $region53: #{residual_block.7} parent=51 // pred_check
        %p616 = pneg %p177
      $region54: #{residual_block.7} parent=51 // pred_check_branch
        %618 = sbr.rel (%p616) target = $region56
      $region55: #{residual_block.7} parent=51 // pred_region
        %p619 = scmp.lt.s32.totalorder %s18, 1
        %s620 = scalar_select %p619, %s18, 1
        %s621 = smul.addr %s620, 13
        %s622 = smul.addr %s621, 8
        %s623 = scalar_lea.vmem %s6, %s622
      $region56: #{residual_block.7} parent=51 // pred_fallthru
        _
    $region52: #{residual_block.7} parent=5 // pred_fallthru
      _
  $region6: #{residual_block.7} parent=0 // loop_footer
    %s16 = sadd.s32 1, %s12
  $region7: #{residual_block.7} parent=0 // loop_footer_branch
    %11 = sbr.rel target = $region3
  $region8: #{residual_block.7} parent=0 // loop_exit
    _

</llo_original>
